<compile_context>
chip_gen: v5e
topology: v5e:2x2
jax: 0.10.0
libtpu: 0.0.40
codegen_flags: <defaults>
</compile_context>

<pallas_src>
import functools

import jax
import jax.numpy as jnp
from jax.experimental import pallas as pl
from jax.experimental.pallas import tpu as pltpu


NEG_SLOPE = 0.1                     # LeakyReLU negative_slope of the reference
BN_EPS = 1e-5                       # nn.BatchNorm2d default eps
COMPUTE_DTYPE = jnp.bfloat16        # activation / weight storage dtype

# (Cin, Cout, use_bn, act) for the 10 ConvNormAct layers of FlowNet.
LAYERS = [
    (6, 64, False, 'lrelu'),       # conv[0]
    (64, 128, True, 'lrelu'),      # conv[1]
    (128, 256, True, 'lrelu'),     # conv[2]
    (256, 512, True, 'lrelu'),     # conv[3]
    (512, 1024, True, 'lrelu'),    # conv[4]
    (1024, 512, True, 'relu'),     # transconv[0]
    (512, 256, True, 'relu'),      # transconv[1]
    (256, 128, True, 'relu'),      # transconv[2]
    (128, 64, True, 'relu'),       # transconv[3]
    (64, 2, False, 'tanh'),        # out
]


def _act_f32(x, act):
    """Activation in f32 (VPU/EUP), identical to the PyTorch module."""
    if act == 'lrelu':
        return jnp.where(x >= 0, x, NEG_SLOPE * x)
    if act == 'relu':
        return jnp.maximum(x, 0.0)
    if act == 'tanh':
        return jnp.tanh(x)
    return x


@functools.lru_cache(maxsize=1)
def _vmem_limit_bytes():
    """Per-generation scoped VMEM limit: ~3/4 of physical VMEM, capped."""
    cap = 64 * 1024 * 1024
    try:
        cap = int(pltpu.get_tpu_info().vmem_capacity_bytes)
    except Exception:
        pass                                   # fall back to v7x-safe default
    return max(32 * 1024 * 1024, min(cap * 3 // 4, 112 * 1024 * 1024))


def _pick_row_tile(Ho, Wo, cin_p, cout_p, n_taps, m_tile_cap=None):
    """Largest divisor-of-Ho row tile whose VMEM footprint fits the budget."""
    budget = _vmem_limit_bytes() - 8 * 1024 * 1024          # headroom
    w_bytes = 2 * n_taps * cin_p * cout_p * 2               # dbl-buffered bf16 W
    per_row = (2 * n_taps * cin_p * 2                       # dbl-buffered taps
               + 2 * cout_p * 2                             # dbl-buffered y
               + 2 * cout_p * 4)                            # f32 acc + dot temp
    avail = max(budget - w_bytes, 2 * 1024 * 1024)
    m_cap = max(Wo, min(4096, avail // per_row))
    if m_tile_cap is not None:
        m_cap = max(Wo, min(m_cap, m_tile_cap))
    th_cap = max(1, min(Ho, m_cap // Wo))
    th = 1
    for d in range(1, th_cap + 1):
        if Ho % d == 0:
            th = d
    return th


# ---------------------------------------------------------------------------
# Conv kernel: 3x3/stride-2 conv as n_taps accumulated MXU matmuls over
# sublane-aligned tap planes.  grid = (cout_tiles, row_tiles), both parallel.
# The weight block index is constant along the row-tile axis -> fetched once.
# BN layers emit per-tile (sum, centered sum-of-squares) partials in f32.
# ---------------------------------------------------------------------------
def _conv_kernel(x_ref, w_ref, *rest, n_taps, use_bn, act, inv_rows):
    # x_ref: (n_taps, 1, MO, Cin_p) bf16;  w_ref: (n_taps, Cin_p, ct) bf16.
    acc = jnp.dot(x_ref[0, 0], w_ref[0], preferred_element_type=jnp.float32)
    for t in range(1, n_taps):
        acc = acc + jnp.dot(x_ref[t, 0], w_ref[t],
                            preferred_element_type=jnp.float32)
    if use_bn:
        # Raw conv output (no bias: train-mode BN cancels it exactly) plus
        # per-tile partial statistics, centered by the tile mean so the
        # Welford-style combine outside avoids E[x^2]-E[x]^2 cancellation.
        y_ref, sum_ref, ssq_ref = rest
        y_ref[0] = acc.astype(y_ref.dtype)
        s = jnp.sum(acc, axis=0, keepdims=True)
        sum_ref[0] = s
        cen = acc - s * inv_rows
        ssq_ref[0] = jnp.sum(cen * cen, axis=0, keepdims=True)
    else:
        b_ref, y_ref = rest
        y_ref[0] = _act_f32(acc + b_ref[...], act).astype(y_ref.dtype)


# ---------------------------------------------------------------------------
# One ConvNormAct layer (general spatial case).
# ---------------------------------------------------------------------------
def conv_layer(x, w, b, gamma, beta, *, use_bn, act, m_tile_cap=None):
    """x: (N,H,W,Cin) NHWC; w: (3,3,Cin,Cout) HWIO -> (N,Ho,Wo,Cout)."""
    N, H, W, Cin = x.shape
    Cout = w.shape[-1]
    Ho = (H - 1) // 2 + 1
    Wo = (W - 1) // 2 + 1

    x = x.astype(COMPUTE_DTYPE)

    # --- JAX layout plumbing: pad + 9 stride-2 tap planes, one per (kh,kw).
    #     plane[kh*3+kw][n, r, ow, c] = xpad[n, 2r+kh, 2ow+kw, c].
    xp = jnp.pad(x, ((0, 0), (1, 1), (1, 1), (0, 0)))
    planes = [xp[:, kh:kh + 2 * Ho - 1:2, kw:kw + 2 * Wo - 1:2, :]
              for kh in range(3) for kw in range(3)]

    # --- Weights: (3,3,Cin,Cout) -> (9,Cin,Cout_p); pad tiny Cout (final 2)
    #     to a lane-dense 128 in the kernel, slice outside.
    cout_p = Cout if Cout >= 32 else 128
    w9 = w.reshape(9, Cin, Cout)
    if cout_p != Cout:
        w9 = jnp.pad(w9, ((0, 0), (0, 0), (0, cout_p - Cout)))

    if Cin < 32:
        # Layer 0 (Cin=6): fold all 9 taps into ONE lane-aligned contraction
        # (K = 9*Cin = 54 padded to 64) instead of nine masked K=6 matmuls.
        cin_p = ((9 * Cin + 63) // 64) * 64
        xcat = jnp.concatenate(planes, axis=-1)               # (N,Ho,Wo,9*Cin)
        xcat = jnp.pad(xcat, ((0, 0), (0, 0), (0, 0), (0, cin_p - 9 * Cin)))
        x_taps = xcat[None]                                   # (1,N,Ho,Wo,cin_p)
        wk = jnp.pad(w9.reshape(9 * Cin, cout_p),
                     ((0, cin_p - 9 * Cin), (0, 0)))[None]    # (1,cin_p,cout_p)
        n_taps = 1
    else:
        cin_p = Cin
        x_taps = jnp.stack(planes, axis=0)                    # (9,N,Ho,Wo,Cin)
        wk = w9
        n_taps = 9
    wk = wk.astype(COMPUTE_DTYPE)

    # --- Row tiling: plain reshape (tap planes already carry the +1 row
    #     shift, so no halos / gathers are needed).
    th = _pick_row_tile(Ho, Wo, cin_p, cout_p, n_taps, m_tile_cap)
    n_t = Ho // th
    T = N * n_t
    MO = th * Wo
    x_taps = x_taps.reshape(n_taps, T, MO, cin_p)

    # --- Megacore Cout split for deep layers with too few row tiles (v7x).
    jc = 2 if (cout_p >= 512 and cout_p % 256 == 0 and T < 4) else 1
    ct = cout_p // jc

    x_spec = pl.BlockSpec((n_taps, 1, MO, cin_p), lambda j, t: (0, t, 0, 0))
    w_spec = pl.BlockSpec((n_taps, cin_p, ct), lambda j, t: (0, 0, j))
    y_spec = pl.BlockSpec((1, MO, ct), lambda j, t: (t, 0, j))
    s_spec = pl.BlockSpec((1, 1, ct), lambda j, t: (t, 0, j))

    in_specs = [x_spec, w_spec]
    inputs = [x_taps, wk]
    if use_bn:
        out_shape = (jax.ShapeDtypeStruct((T, MO, cout_p), COMPUTE_DTYPE),
                     jax.ShapeDtypeStruct((T, 1, cout_p), jnp.float32),
                     jax.ShapeDtypeStruct((T, 1, cout_p), jnp.float32))
        out_specs = (y_spec, s_spec, s_spec)
    else:
        bp = b if cout_p == Cout else jnp.pad(b, (0, cout_p - Cout))
        in_specs.append(pl.BlockSpec((1, ct), lambda j, t: (0, j)))
        inputs.append(bp.reshape(1, cout_p).astype(jnp.float32))
        out_shape = jax.ShapeDtypeStruct((T, MO, cout_p), COMPUTE_DTYPE)
        out_specs = y_spec

    kernel = functools.partial(_conv_kernel, n_taps=n_taps, use_bn=use_bn,
                               act=act, inv_rows=1.0 / MO)
    res = pl.pallas_call(
        kernel,
        grid=(jc, T),
        in_specs=in_specs,
        out_specs=out_specs,
        out_shape=out_shape,
        compiler_params=pltpu.CompilerParams(
            dimension_semantics=("parallel", "parallel"),
            vmem_limit_bytes=_vmem_limit_bytes()),
    )(*inputs)

    if use_bn:
        y, psum, pssq = res
        rows = float(MO)
        total = float(T * MO)                   # = N * Ho * Wo
        tile_sum = psum[:, 0, :]                # (T, cout_p) f32
        tile_ssq = pssq[:, 0, :]
        mean = jnp.sum(tile_sum, axis=0) / total
        tile_mean = tile_sum / rows
        var = (jnp.sum(tile_ssq, axis=0)
               + rows * jnp.sum(jnp.square(tile_mean - mean), axis=0)) / total
        var = jnp.maximum(var, 0.0)             # biased variance (train mode)
        scale = gamma.astype(jnp.float32) / jnp.sqrt(var + BN_EPS)
        shift = beta.astype(jnp.float32) - mean * scale
        # Normalize + activate in plain jnp (f32): XLA fuses this elementwise
        # work with the next layer's pad / tap de-interleave, so it does not
        # cost an extra pallas_call HBM round trip of the activation.
        y = _act_f32(y.astype(jnp.float32) * scale + shift, act)
    else:
        y = res

    y = y.reshape(N, n_t, th, Wo, cout_p).reshape(N, Ho, Wo, cout_p)
    if cout_p != Cout:
        y = y[..., :Cout]
    return y


# ---------------------------------------------------------------------------
# Fused tail: once the map is 1x1, a 3x3/stride-2/pad-1 conv only sees its
# centre tap, so every remaining layer is a 1x1 conv + BN(over N) + act.  All
# remaining layers run in ONE pallas_call (removes per-layer dispatch and
# tiny-activation HBM round trips).
# ---------------------------------------------------------------------------
def _fused_tail_kernel(*args, cfgs, n_rows):
    x_ref = args[0]
    out_ref = args[-1]
    pr = args[1:-1]
    h = x_ref[...].astype(jnp.float32)
    j = 0
    for (use_bn, act) in cfgs:
        w_ref, b_ref, g_ref, be_ref = pr[j:j + 4]
        j += 4
        h = jnp.dot(h.astype(w_ref.dtype), w_ref[...],
                    preferred_element_type=jnp.float32)
        if use_bn:
            mean = jnp.sum(h, axis=0, keepdims=True) * (1.0 / n_rows)
            cent = h - mean
            var = jnp.sum(cent * cent, axis=0, keepdims=True) * (1.0 / n_rows)
            h = cent * jax.lax.rsqrt(var + BN_EPS)
            h = h * g_ref[...] + be_ref[...]
        else:
            h = h + b_ref[...]
        h = _act_f32(h, act)
    out_ref[...] = h.astype(out_ref.dtype)


def fused_tail_1x1(x, params, cfgs_full):
    """x: (N,1,1,C0); params/cfgs_full: remaining layers."""
    N = x.shape[0]
    c0 = x.shape[-1]
    xin = x.reshape(N, c0).astype(COMPUTE_DTYPE)
    inputs = [xin]
    cfgs = []
    n_layers = len(cfgs_full)
    final_cout = cfgs_full[-1][1]
    out_cp = final_cout
    for li, ((w, b, gamma, beta), (_cin, cout, use_bn, act)) in enumerate(
            zip(params, cfgs_full)):
        # lane-dense padding only for a tiny-Cout *final* layer (64 -> 2).
        cout_p = cout if (cout >= 32 or li < n_layers - 1) else 128
        wc = w[1, 1]                                   # centre tap (Cin, Cout)
        if cout_p != cout:
            wc = jnp.pad(wc, ((0, 0), (0, cout_p - cout)))
            b = jnp.pad(b, (0, cout_p - cout))
            gamma = jnp.pad(gamma, (0, cout_p - cout))
            beta = jnp.pad(beta, (0, cout_p - cout))
        inputs += [wc.astype(COMPUTE_DTYPE),
                   b.reshape(1, cout_p).astype(jnp.float32),
                   gamma.reshape(1, cout_p).astype(jnp.float32),
                   beta.reshape(1, cout_p).astype(jnp.float32)]
        cfgs.append((use_bn, act))
        out_cp = cout_p

    vmem = pl.BlockSpec(memory_space=pltpu.MemorySpace.VMEM)
    out = pl.pallas_call(
        functools.partial(_fused_tail_kernel, cfgs=tuple(cfgs), n_rows=N),
        out_shape=jax.ShapeDtypeStruct((N, out_cp), jnp.float32),
        in_specs=[vmem] * len(inputs),
        out_specs=vmem,
        compiler_params=pltpu.CompilerParams(
            vmem_limit_bytes=_vmem_limit_bytes()),
    )(*inputs)
    return out[:, :final_cout].reshape(N, 1, 1, final_cout)


# ---------------------------------------------------------------------------
# Model
# ---------------------------------------------------------------------------
def init_params(key):
    params = []
    for (cin, cout, _use_bn, _act) in LAYERS:
        key, kw, kb, kg, kbe = jax.random.split(key, 5)
        w = jax.random.normal(kw, (3, 3, cin, cout), jnp.float32) / (3.0 * cin ** 0.5)
        b = 0.01 * jax.random.normal(kb, (cout,), jnp.float32)
        gamma = 1.0 + 0.1 * jax.random.normal(kg, (cout,), jnp.float32)
        beta = 0.1 * jax.random.normal(kbe, (cout,), jnp.float32)
        params.append((w, b, gamma, beta))
    return params


def flownet_forward(params, x1, x2):
    x = jnp.concatenate([x1, x2], axis=1)          # (N, 6, H, W)
    x = jnp.transpose(x, (0, 2, 3, 1))             # -> NHWC
    i = 0
    while i < len(LAYERS):
        _n, H, W, _c = x.shape
        if H == 1 and W == 1:
            x = fused_tail_1x1(x, params[i:], LAYERS[i:])
            i = len(LAYERS)
        else:
            _cin, _cout, use_bn, act = LAYERS[i]
            w, b, gamma, beta = params[i]
            x = conv_layer(x, w, b, gamma, beta, use_bn=use_bn, act=act)
            i += 1
    return jnp.transpose(x, (0, 3, 1, 2)).astype(jnp.float32)   # -> NCHW


# ---------------------------------------------------------------------------
# Pure-JAX references (for in-script correctness validation)
# ---------------------------------------------------------------------------
def _layer_reference(x, w, b, gamma, beta, use_bn, act):
    """One layer, f32 compute with the same bf16 quantization points."""
    xq = x.astype(jnp.bfloat16).astype(jnp.float32)
    wq = w.astype(jnp.bfloat16).astype(jnp.float32)
    y = jax.lax.conv_general_dilated(
        xq, wq, (2, 2), ((1, 1), (1, 1)),
        dimension_numbers=('NHWC', 'HWIO', 'NHWC'))
    if use_bn:
        mean = jnp.mean(y, axis=(0, 1, 2))
        var = jnp.mean(jnp.square(y - mean), axis=(0, 1, 2))
        yq = y.astype(jnp.bfloat16).astype(jnp.float32)
        y = (yq - mean) * (gamma / jnp.sqrt(var + BN_EPS)) + beta
    else:
        y = y + b
    return _act_f32(y, act)


def _tail_reference(x, tail_params, tail_layers):
    n = x.shape[0]
    h = x.reshape(n, x.shape[-1]).astype(jnp.bfloat16).astype(jnp.float32)
    for (w, b, g, be), (_cin, _cout, use_bn, act) in zip(tail_params, tail_layers):
        wq = w[1, 1].astype(jnp.bfloat16).astype(jnp.float32)
        hq = h.astype(jnp.bfloat16).astype(jnp.float32)
        y = hq @ wq
        if use_bn:
            mean = jnp.mean(y, axis=0)
            var = jnp.mean(jnp.square(y - mean), axis=0)
            y = (y - mean) * (g / jnp.sqrt(var + BN_EPS)) + be
        else:
            y = y + b
        h = _act_f32(y, act)
    return h.reshape(n, 1, 1, -1)


if __name__ == "__main__":
    key = jax.random.PRNGKey(0)
    k1, k2, kp, kx, kf, kj, k0 = jax.random.split(key, 7)
    params = init_params(kp)

    # ---- check 1: BN conv layer with multiple row tiles (Welford combine) --
    kxa, kxw, kxb, kxg, kxe = jax.random.split(kx, 5)
    cin_t, cout_t = 512, 256
    xs = jax.random.normal(kxa, (2, 16, 16, cin_t), jnp.float32)
    ws = jax.random.normal(kxw, (3, 3, cin_t, cout_t), jnp.float32) / (3.0 * cin_t ** 0.5)
    bs = 0.01 * jax.random.normal(kxb, (cout_t,), jnp.float32)
    gs = 1.0 + 0.1 * jax.random.normal(kxg, (cout_t,), jnp.float32)
    es = 0.1 * jax.random.normal(kxe, (cout_t,), jnp.float32)
    layer_fn = jax.jit(functools.partial(conv_layer, use_bn=True, act='relu',
                                         m_tile_cap=32))
    got1 = layer_fn(xs, ws, bs, gs, es)
    want1 = _layer_reference(xs, ws, bs, gs, es, True, 'relu')
    err1 = float(jnp.max(jnp.abs(got1.astype(jnp.float32) - want1)))
    assert err1 < 4e-2, f"conv+BN layer mismatch: max|err| = {err1}"

    # ---- check 2: Cout-split (megacore) path, cout_p=512 with T<4 ----------
    kja, kjw, kjb, kjg, kje = jax.random.split(kj, 5)
    xs2 = jax.random.normal(kja, (2, 4, 4, 256), jnp.float32)
    ws2 = jax.random.normal(kjw, (3, 3, 256, 512), jnp.float32) / (3.0 * 256 ** 0.5)
    bs2 = 0.01 * jax.random.normal(kjb, (512,), jnp.float32)
    gs2 = 1.0 + 0.1 * jax.random.normal(kjg, (512,), jnp.float32)
    es2 = 0.1 * jax.random.normal(kje, (512,), jnp.float32)
    jc_fn = jax.jit(functools.partial(conv_layer, use_bn=True, act='relu'))
    got2 = jc_fn(xs2, ws2, bs2, gs2, es2)
    want2 = _layer_reference(xs2, ws2, bs2, gs2, es2, True, 'relu')
    err2 = float(jnp.max(jnp.abs(got2.astype(jnp.float32) - want2)))
    assert err2 < 5e-2, f"cout-split conv+BN mismatch: max|err| = {err2}"

    # ---- check 3: layer-0 im2col path (Cin=6, single K=64 contraction) -----
    k0a, k0w, k0b = jax.random.split(k0, 3)
    xs0 = jax.random.normal(k0a, (2, 16, 16, 6), jnp.float32)
    ws0 = jax.random.normal(k0w, (3, 3, 6, 64), jnp.float32) / (3.0 * 6 ** 0.5)
    bs0 = 0.01 * jax.random.normal(k0b, (64,), jnp.float32)
    z64 = jnp.zeros((64,), jnp.float32)
    l0_fn = jax.jit(functools.partial(conv_layer, use_bn=False, act='lrelu'))
    got3 = l0_fn(xs0, ws0, bs0, z64, z64)
    want3 = _layer_reference(xs0, ws0, bs0, z64, z64, False, 'lrelu')
    err3 = float(jnp.max(jnp.abs(got3.astype(jnp.float32) - want3)))
    assert err3 < 2e-2, f"layer-0 im2col conv mismatch: max|err| = {err3}"

    # ---- check 4: fused 1x1 tail (layers 4..9) vs reference ----------------
    xt = jax.random.normal(kf, (16, 1, 1, 512), jnp.float32)
    tail_fn = jax.jit(lambda x, p: fused_tail_1x1(x, p, LAYERS[4:]))
    got4 = tail_fn(xt, params[4:])
    want4 = _tail_reference(xt, params[4:], LAYERS[4:])
    err4 = float(jnp.max(jnp.abs(got4 - want4)))
    assert err4 < 2.5e-2, f"fused tail mismatch: max|err| = {err4}"

    # ---- full forward (same shapes as the PyTorch module's toy usage) ------
    x1 = jax.random.normal(k1, (2, 3, 16, 16), jnp.float32)
    x2 = jax.random.normal(k2, (2, 3, 16, 16), jnp.float32)
    out = jax.jit(flownet_forward)(params, x1, x2)
    jax.block_until_ready(out)

    # 10 stride-2 convs on 16x16: 16->8->4->2->1->1->1->1->1->1->1
    assert out.shape == (2, 2, 1, 1), out.shape
    assert bool(jnp.all(jnp.isfinite(out)))
    assert float(jnp.max(jnp.abs(out))) <= 1.0 + 1e-6    # final act is tanh
    print("KERNEL_OK")
</pallas_src>

<mosaic_0001>
module attributes {stable_mosaic.version = 11 : i64} {
  func.func @_conv_kernel(%arg0: i32, %arg1: i32, %arg2: memref<9x1x32x512xbf16, #tpu.memory_space<vmem>>, %arg3: memref<9x512x256xbf16, #tpu.memory_space<vmem>>, %arg4: memref<1x32x256xbf16, #tpu.memory_space<vmem>>, %arg5: memref<1x1x256xf32, #tpu.memory_space<vmem>>, %arg6: memref<1x1x256xf32, #tpu.memory_space<vmem>>) attributes {dimension_semantics = [#tpu.dimension_semantics<parallel>, #tpu.dimension_semantics<parallel>], iteration_bounds = array<i64: 1, 4>, scalar_prefetch = 0 : i64, scratch_operands = 0 : i64, tpu.core_type = #tpu.core_type<tc>, window_params = [{transform_indices = @transform_0, window_bounds = array<i64: 9, 1, 32, 512>}, {transform_indices = @transform_1, window_bounds = array<i64: 9, 512, 256>}, {transform_indices = @transform_2, window_bounds = array<i64: 1, 32, 256>}, {transform_indices = @transform_3, window_bounds = array<i64: 1, 1, 256>}, {transform_indices = @transform_4, window_bounds = array<i64: 1, 1, 256>}]} {
    %c0 = arith.constant 0 : index
    %c0_0 = arith.constant 0 : index
    %c0_1 = arith.constant 0 : index
    %c0_2 = arith.constant 0 : index
    %0 = vector.load %arg2[%c0, %c0_0, %c0_1, %c0_2] : memref<9x1x32x512xbf16, #tpu.memory_space<vmem>>, vector<1x1x32x512xbf16>
    %1 = vector.shape_cast %0 : vector<1x1x32x512xbf16> to vector<32x512xbf16>
    %c0_3 = arith.constant 0 : index
    %c0_4 = arith.constant 0 : index
    %c0_5 = arith.constant 0 : index
    %2 = vector.load %arg3[%c0_3, %c0_4, %c0_5] : memref<9x512x256xbf16, #tpu.memory_space<vmem>>, vector<1x512x256xbf16>
    %3 = vector.shape_cast %2 : vector<1x512x256xbf16> to vector<512x256xbf16>
    %cst = arith.constant dense<0.000000e+00> : vector<32x256xf32>
    %4 = tpu.matmul %1, %3, %cst {dimension_numbers = #tpu.dot_dimension_numbers<[1], [0], [0], [1], [0, 0, 1, 1], [], []>} : vector<32x512xbf16>, vector<512x256xbf16>, vector<32x256xf32> -> vector<32x256xf32>
    %c1 = arith.constant 1 : index
    %c0_6 = arith.constant 0 : index
    %c0_7 = arith.constant 0 : index
    %c0_8 = arith.constant 0 : index
    %5 = vector.load %arg2[%c1, %c0_6, %c0_7, %c0_8] : memref<9x1x32x512xbf16, #tpu.memory_space<vmem>>, vector<1x1x32x512xbf16>
    %6 = vector.shape_cast %5 : vector<1x1x32x512xbf16> to vector<32x512xbf16>
    %c1_9 = arith.constant 1 : index
    %c0_10 = arith.constant 0 : index
    %c0_11 = arith.constant 0 : index
    %7 = vector.load %arg3[%c1_9, %c0_10, %c0_11] : memref<9x512x256xbf16, #tpu.memory_space<vmem>>, vector<1x512x256xbf16>
    %8 = vector.shape_cast %7 : vector<1x512x256xbf16> to vector<512x256xbf16>
    %cst_12 = arith.constant dense<0.000000e+00> : vector<32x256xf32>
    %9 = tpu.matmul %6, %8, %cst_12 {dimension_numbers = #tpu.dot_dimension_numbers<[1], [0], [0], [1], [0, 0, 1, 1], [], []>} : vector<32x512xbf16>, vector<512x256xbf16>, vector<32x256xf32> -> vector<32x256xf32>
    %10 = arith.addf %4, %9 : vector<32x256xf32>
    %c2 = arith.constant 2 : index
    %c0_13 = arith.constant 0 : index
    %c0_14 = arith.constant 0 : index
    %c0_15 = arith.constant 0 : index
    %11 = vector.load %arg2[%c2, %c0_13, %c0_14, %c0_15] : memref<9x1x32x512xbf16, #tpu.memory_space<vmem>>, vector<1x1x32x512xbf16>
    %12 = vector.shape_cast %11 : vector<1x1x32x512xbf16> to vector<32x512xbf16>
    %c2_16 = arith.constant 2 : index
    %c0_17 = arith.constant 0 : index
    %c0_18 = arith.constant 0 : index
    %13 = vector.load %arg3[%c2_16, %c0_17, %c0_18] : memref<9x512x256xbf16, #tpu.memory_space<vmem>>, vector<1x512x256xbf16>
    %14 = vector.shape_cast %13 : vector<1x512x256xbf16> to vector<512x256xbf16>
    %cst_19 = arith.constant dense<0.000000e+00> : vector<32x256xf32>
    %15 = tpu.matmul %12, %14, %cst_19 {dimension_numbers = #tpu.dot_dimension_numbers<[1], [0], [0], [1], [0, 0, 1, 1], [], []>} : vector<32x512xbf16>, vector<512x256xbf16>, vector<32x256xf32> -> vector<32x256xf32>
    %16 = arith.addf %10, %15 : vector<32x256xf32>
    %c3 = arith.constant 3 : index
    %c0_20 = arith.constant 0 : index
    %c0_21 = arith.constant 0 : index
    %c0_22 = arith.constant 0 : index
    %17 = vector.load %arg2[%c3, %c0_20, %c0_21, %c0_22] : memref<9x1x32x512xbf16, #tpu.memory_space<vmem>>, vector<1x1x32x512xbf16>
    %18 = vector.shape_cast %17 : vector<1x1x32x512xbf16> to vector<32x512xbf16>
    %c3_23 = arith.constant 3 : index
    %c0_24 = arith.constant 0 : index
    %c0_25 = arith.constant 0 : index
    %19 = vector.load %arg3[%c3_23, %c0_24, %c0_25] : memref<9x512x256xbf16, #tpu.memory_space<vmem>>, vector<1x512x256xbf16>
    %20 = vector.shape_cast %19 : vector<1x512x256xbf16> to vector<512x256xbf16>
    %cst_26 = arith.constant dense<0.000000e+00> : vector<32x256xf32>
    %21 = tpu.matmul %18, %20, %cst_26 {dimension_numbers = #tpu.dot_dimension_numbers<[1], [0], [0], [1], [0, 0, 1, 1], [], []>} : vector<32x512xbf16>, vector<512x256xbf16>, vector<32x256xf32> -> vector<32x256xf32>
    %22 = arith.addf %16, %21 : vector<32x256xf32>
    %c4 = arith.constant 4 : index
    %c0_27 = arith.constant 0 : index
    %c0_28 = arith.constant 0 : index
    %c0_29 = arith.constant 0 : index
    %23 = vector.load %arg2[%c4, %c0_27, %c0_28, %c0_29] : memref<9x1x32x512xbf16, #tpu.memory_space<vmem>>, vector<1x1x32x512xbf16>
    %24 = vector.shape_cast %23 : vector<1x1x32x512xbf16> to vector<32x512xbf16>
    %c4_30 = arith.constant 4 : index
    %c0_31 = arith.constant 0 : index
    %c0_32 = arith.constant 0 : index
    %25 = vector.load %arg3[%c4_30, %c0_31, %c0_32] : memref<9x512x256xbf16, #tpu.memory_space<vmem>>, vector<1x512x256xbf16>
    %26 = vector.shape_cast %25 : vector<1x512x256xbf16> to vector<512x256xbf16>
    %cst_33 = arith.constant dense<0.000000e+00> : vector<32x256xf32>
    %27 = tpu.matmul %24, %26, %cst_33 {dimension_numbers = #tpu.dot_dimension_numbers<[1], [0], [0], [1], [0, 0, 1, 1], [], []>} : vector<32x512xbf16>, vector<512x256xbf16>, vector<32x256xf32> -> vector<32x256xf32>
    %28 = arith.addf %22, %27 : vector<32x256xf32>
    %c5 = arith.constant 5 : index
    %c0_34 = arith.constant 0 : index
    %c0_35 = arith.constant 0 : index
    %c0_36 = arith.constant 0 : index
    %29 = vector.load %arg2[%c5, %c0_34, %c0_35, %c0_36] : memref<9x1x32x512xbf16, #tpu.memory_space<vmem>>, vector<1x1x32x512xbf16>
    %30 = vector.shape_cast %29 : vector<1x1x32x512xbf16> to vector<32x512xbf16>
    %c5_37 = arith.constant 5 : index
    %c0_38 = arith.constant 0 : index
    %c0_39 = arith.constant 0 : index
    %31 = vector.load %arg3[%c5_37, %c0_38, %c0_39] : memref<9x512x256xbf16, #tpu.memory_space<vmem>>, vector<1x512x256xbf16>
    %32 = vector.shape_cast %31 : vector<1x512x256xbf16> to vector<512x256xbf16>
    %cst_40 = arith.constant dense<0.000000e+00> : vector<32x256xf32>
    %33 = tpu.matmul %30, %32, %cst_40 {dimension_numbers = #tpu.dot_dimension_numbers<[1], [0], [0], [1], [0, 0, 1, 1], [], []>} : vector<32x512xbf16>, vector<512x256xbf16>, vector<32x256xf32> -> vector<32x256xf32>
    %34 = arith.addf %28, %33 : vector<32x256xf32>
    %c6 = arith.constant 6 : index
    %c0_41 = arith.constant 0 : index
    %c0_42 = arith.constant 0 : index
    %c0_43 = arith.constant 0 : index
    %35 = vector.load %arg2[%c6, %c0_41, %c0_42, %c0_43] : memref<9x1x32x512xbf16, #tpu.memory_space<vmem>>, vector<1x1x32x512xbf16>
    %36 = vector.shape_cast %35 : vector<1x1x32x512xbf16> to vector<32x512xbf16>
    %c6_44 = arith.constant 6 : index
    %c0_45 = arith.constant 0 : index
    %c0_46 = arith.constant 0 : index
    %37 = vector.load %arg3[%c6_44, %c0_45, %c0_46] : memref<9x512x256xbf16, #tpu.memory_space<vmem>>, vector<1x512x256xbf16>
    %38 = vector.shape_cast %37 : vector<1x512x256xbf16> to vector<512x256xbf16>
    %cst_47 = arith.constant dense<0.000000e+00> : vector<32x256xf32>
    %39 = tpu.matmul %36, %38, %cst_47 {dimension_numbers = #tpu.dot_dimension_numbers<[1], [0], [0], [1], [0, 0, 1, 1], [], []>} : vector<32x512xbf16>, vector<512x256xbf16>, vector<32x256xf32> -> vector<32x256xf32>
    %40 = arith.addf %34, %39 : vector<32x256xf32>
    %c7 = arith.constant 7 : index
    %c0_48 = arith.constant 0 : index
    %c0_49 = arith.constant 0 : index
    %c0_50 = arith.constant 0 : index
    %41 = vector.load %arg2[%c7, %c0_48, %c0_49, %c0_50] : memref<9x1x32x512xbf16, #tpu.memory_space<vmem>>, vector<1x1x32x512xbf16>
    %42 = vector.shape_cast %41 : vector<1x1x32x512xbf16> to vector<32x512xbf16>
    %c7_51 = arith.constant 7 : index
    %c0_52 = arith.constant 0 : index
    %c0_53 = arith.constant 0 : index
    %43 = vector.load %arg3[%c7_51, %c0_52, %c0_53] : memref<9x512x256xbf16, #tpu.memory_space<vmem>>, vector<1x512x256xbf16>
    %44 = vector.shape_cast %43 : vector<1x512x256xbf16> to vector<512x256xbf16>
    %cst_54 = arith.constant dense<0.000000e+00> : vector<32x256xf32>
    %45 = tpu.matmul %42, %44, %cst_54 {dimension_numbers = #tpu.dot_dimension_numbers<[1], [0], [0], [1], [0, 0, 1, 1], [], []>} : vector<32x512xbf16>, vector<512x256xbf16>, vector<32x256xf32> -> vector<32x256xf32>
    %46 = arith.addf %40, %45 : vector<32x256xf32>
    %c8 = arith.constant 8 : index
    %c0_55 = arith.constant 0 : index
    %c0_56 = arith.constant 0 : index
    %c0_57 = arith.constant 0 : index
    %47 = vector.load %arg2[%c8, %c0_55, %c0_56, %c0_57] : memref<9x1x32x512xbf16, #tpu.memory_space<vmem>>, vector<1x1x32x512xbf16>
    %48 = vector.shape_cast %47 : vector<1x1x32x512xbf16> to vector<32x512xbf16>
    %c8_58 = arith.constant 8 : index
    %c0_59 = arith.constant 0 : index
    %c0_60 = arith.constant 0 : index
    %49 = vector.load %arg3[%c8_58, %c0_59, %c0_60] : memref<9x512x256xbf16, #tpu.memory_space<vmem>>, vector<1x512x256xbf16>
    %50 = vector.shape_cast %49 : vector<1x512x256xbf16> to vector<512x256xbf16>
    %cst_61 = arith.constant dense<0.000000e+00> : vector<32x256xf32>
    %51 = tpu.matmul %48, %50, %cst_61 {dimension_numbers = #tpu.dot_dimension_numbers<[1], [0], [0], [1], [0, 0, 1, 1], [], []>} : vector<32x512xbf16>, vector<512x256xbf16>, vector<32x256xf32> -> vector<32x256xf32>
    %52 = arith.addf %46, %51 : vector<32x256xf32>
    %53 = arith.truncf %52 : vector<32x256xf32> to vector<32x256xbf16>
    %c0_62 = arith.constant 0 : index
    %c0_63 = arith.constant 0 : index
    %c0_64 = arith.constant 0 : index
    %54 = vector.load %arg4[%c0_62, %c0_63, %c0_64] : memref<1x32x256xbf16, #tpu.memory_space<vmem>>, vector<1x32x256xbf16>
    %55 = vector.shape_cast %54 : vector<1x32x256xbf16> to vector<32x256xbf16>
    %56 = vector.shape_cast %53 : vector<32x256xbf16> to vector<1x32x256xbf16>
    tpu.vector_store %arg4[%c0_62, %c0_63, %c0_64], %56 {strides = array<i32>} : memref<1x32x256xbf16, #tpu.memory_space<vmem>>, vector<1x32x256xbf16>,
    %cst_65 = arith.constant dense<0.000000e+00> : vector<256xf32>
    %57 = vector.multi_reduction <add>, %52, %cst_65 [0] : vector<32x256xf32> to vector<256xf32>
    %58 = vector.shape_cast %57 : vector<256xf32> to vector<1x256xf32>
    %c0_66 = arith.constant 0 : index
    %c0_67 = arith.constant 0 : index
    %c0_68 = arith.constant 0 : index
    %59 = vector.load %arg5[%c0_66, %c0_67, %c0_68] : memref<1x1x256xf32, #tpu.memory_space<vmem>>, vector<1x1x256xf32>
    %60 = vector.shape_cast %59 : vector<1x1x256xf32> to vector<1x256xf32>
    %61 = vector.shape_cast %58 : vector<1x256xf32> to vector<1x1x256xf32>
    tpu.vector_store %arg5[%c0_66, %c0_67, %c0_68], %61 {strides = array<i32>} : memref<1x1x256xf32, #tpu.memory_space<vmem>>, vector<1x1x256xf32>,
    %cst_69 = arith.constant 3.125000e-02 : f32
    %62 = vector.broadcast %cst_69 : f32 to vector<1x256xf32>
    %63 = arith.mulf %58, %62 : vector<1x256xf32>
    %64 = vector.broadcast %63 : vector<1x256xf32> to vector<32x256xf32>
    %65 = arith.subf %52, %64 : vector<32x256xf32>
    %66 = arith.mulf %65, %65 : vector<32x256xf32>
    %cst_70 = arith.constant dense<0.000000e+00> : vector<256xf32>
    %67 = vector.multi_reduction <add>, %66, %cst_70 [0] : vector<32x256xf32> to vector<256xf32>
    %68 = vector.shape_cast %67 : vector<256xf32> to vector<1x256xf32>
    %c0_71 = arith.constant 0 : index
    %c0_72 = arith.constant 0 : index
    %c0_73 = arith.constant 0 : index
    %69 = vector.load %arg6[%c0_71, %c0_72, %c0_73] : memref<1x1x256xf32, #tpu.memory_space<vmem>>, vector<1x1x256xf32>
    %70 = vector.shape_cast %69 : vector<1x1x256xf32> to vector<1x256xf32>
    %71 = vector.shape_cast %68 : vector<1x256xf32> to vector<1x1x256xf32>
    tpu.vector_store %arg6[%c0_71, %c0_72, %c0_73], %71 {strides = array<i32>} : memref<1x1x256xf32, #tpu.memory_space<vmem>>, vector<1x1x256xf32>,
    return
  }
  func.func @transform_0(%arg0: i32, %arg1: i32) -> (i32, i32, i32, i32) {
    %c0_i32 = arith.constant 0 : i32
    %c0_i32_0 = arith.constant 0 : i32
    %c0_i32_1 = arith.constant 0 : i32
    %c0_i32_2 = arith.constant 0 : i32
    return %c0_i32, %arg1, %c0_i32_0, %c0_i32_1 : i32, i32, i32, i32
  }
  func.func @transform_1(%arg0: i32, %arg1: i32) -> (i32, i32, i32) {
    %c0_i32 = arith.constant 0 : i32
    %c0_i32_0 = arith.constant 0 : i32
    %c0_i32_1 = arith.constant 0 : i32
    return %c0_i32, %c0_i32_0, %arg0 : i32, i32, i32
  }
  func.func @transform_2(%arg0: i32, %arg1: i32) -> (i32, i32, i32) {
    %c0_i32 = arith.constant 0 : i32
    %c0_i32_0 = arith.constant 0 : i32
    return %arg1, %c0_i32, %arg0 : i32, i32, i32
  }
  func.func @transform_3(%arg0: i32, %arg1: i32) -> (i32, i32, i32) {
    %c0_i32 = arith.constant 0 : i32
    %c0_i32_0 = arith.constant 0 : i32
    return %arg1, %c0_i32, %arg0 : i32, i32, i32
  }
  func.func @transform_4(%arg0: i32, %arg1: i32) -> (i32, i32, i32) {
    %c0_i32 = arith.constant 0 : i32
    %c0_i32_0 = arith.constant 0 : i32
    return %arg1, %c0_i32, %arg0 : i32, i32, i32
  }
}

</mosaic_0001>

<llo_original>
// kernel: conv_layer.1
$region0: #{conv_layer.1}
  #allocation0 [shape = 'u32[]', space=smem, size = 0x4, offset = 0x4, fixed_abs, tag = 'smem constant byte address 0x4 - core index']
  #allocation1 [shape = 'u32[72,128]{1,0:T(1,128)}', space=vmem, size = 0x9000, scoped, tag = 'internal scratch']
  %s0 = inlined_call_operand.vmem [shape: bf16[9,4,32,512], index: 0, kind: input, shape index: {}]
  %s1 = inlined_call_operand.vmem [shape: bf16[9,512,256], index: 1, kind: input, shape index: {}]
  %s2 = inlined_call_operand.vmem [shape: bf16[4,32,256], index: 2, kind: output, shape index: {0}]
  %s3 = inlined_call_operand.vmem [shape: f32[4,1,256], index: 3, kind: output, shape index: {1}]
  %s4 = inlined_call_operand.vmem [shape: f32[4,1,256], index: 4, kind: output, shape index: {2}]
  %5 = xla_tuple %s2, %s3, %s4
  %s6 = sld [smem:[#allocation0]]
  $region80: #{conv_layer.1} parent=0
    _
  %s8 = ssub.s32 1, %s6
  %s9 = scalar_select 0, %s8, %s6
  $region1: #{conv_layer.1} parent=0
    #allocation2 [shape = 'u8[589824]{0}', space=vmem, size = 0x90000, scoped, tag = 'input window, operand 0']
    loop: start=0, step=1, limit=6
    $region2: #{conv_layer.1} parent=1 // loop_pre_header
      _
    $region3: #{conv_layer.1} parent=1 // loop_header
      %s11 = sphi 0, %s15
      %p12 = scmp.ge.s32.totalorder %s11, 6
      %s18 = sphi 0, %s30
      %s19 = sphi 0, %s26
      %s20 = sphi 0, %s18
      %s21 = sphi 0, %s19
      %s22 = sphi 0, %s20
      %s23 = sphi 0, %s21
      %s33 = sphi 0, %s35
      %s36 = sphi 0, %s33
      %s37 = sphi 0, %s36
      %s53 = sphi 0, %s37
      %s59 = sphi 0, %s61
      %s62 = sphi 0, %s59
      %s63 = sphi 0, %s62
      %s79 = sphi 0, %s63
      %s87 = sphi 0, %s89
      %s90 = sphi 0, %s87
      %s91 = sphi 0, %s90
      %s107 = sphi 0, %s91
      %s115 = sphi 0, %s117
      %s118 = sphi 0, %s115
      %s119 = sphi 0, %s118
      %s135 = sphi 0, %s119
      %s143 = sphi 0, %s145
      %s146 = sphi 0, %s143
      %s147 = sphi 0, %s146
      %s163 = sphi 0, %s147
    $region4: #{conv_layer.1} parent=1 // loop_header_branch
      %14 = sbr.rel (%p12) target = $region8
    $region5: #{conv_layer.1} parent=1 // loop_body
      %s16 = ssub.s32 %s11, 1
      %s17 = ssub.s32 %s11, 2
      %s24 = sadd.s32 1, %s19
      %p25 = scmp.ge.s32.totalorder %s24, 4
      %s26 = scalar_select %p25, 0, %s24
      %s27 = sadd.s32 1, %s18
      %s28 = scalar_select %p25, %s27, %s18
      %p29 = scmp.ge.s32.totalorder %s28, 1
      %s30 = scalar_select %p29, 0, %s28
      %s31 = ssub.s32 %s19, %s26
      %p32 = scmp.eq.s32.totalorder %s31, 0
      %s34 = sadd.s32 %s33, 1
      %s35 = scalar_select %p32, %s33, %s34
      %p38 = pneg %p32
      %p39 = scmp.eq.s32.totalorder %s11, 3
      %p40 = por %p38, %p39
      %p41 = scmp.ne.s32.totalorder %s33, %s36
      %p42 = scmp.eq.s32.totalorder %s11, 0
      %p43 = por %p41, %p42
      %p44 = scmp.ne.s32.totalorder %s33, %s36
      %p45 = scmp.eq.s32.totalorder %s16, 3
      %p46 = por %p44, %p45
      %p47 = scmp.ne.s32.totalorder %s36, %s37
      %p48 = scmp.eq.s32.totalorder %s16, 0
      %p49 = por %p47, %p48
      %p50 = scmp.ne.s32.totalorder %s36, %s37
      %p51 = scmp.eq.s32.totalorder %s17, 3
      %p52 = por %p50, %p51
      %p54 = scmp.ne.s32.totalorder %s37, %s53
      %p55 = scmp.eq.s32.totalorder %s17, 0
      %p56 = por %p54, %p55
      %s57 = ssub.s32 %s18, %s30
      %p58 = scmp.eq.s32.totalorder %s57, 0
      %s60 = sadd.s32 %s59, 1
      %s61 = scalar_select %p58, %s59, %s60
      %p64 = pneg %p58
      %p65 = scmp.eq.s32.totalorder %s11, 3
      %p66 = por %p64, %p65
      %p67 = scmp.ne.s32.totalorder %s59, %s62
      %p68 = scmp.eq.s32.totalorder %s11, 0
      %p69 = por %p67, %p68
      %p70 = scmp.ne.s32.totalorder %s59, %s62
      %p71 = scmp.eq.s32.totalorder %s16, 3
      %p72 = por %p70, %p71
      %p73 = scmp.ne.s32.totalorder %s62, %s63
      %p74 = scmp.eq.s32.totalorder %s16, 0
      %p75 = por %p73, %p74
      %p76 = scmp.ne.s32.totalorder %s62, %s63
      %p77 = scmp.eq.s32.totalorder %s17, 3
      %p78 = por %p76, %p77
      %p80 = scmp.ne.s32.totalorder %s63, %s79
      %p81 = scmp.eq.s32.totalorder %s17, 0
      %p82 = por %p80, %p81
      %s83 = ssub.s32 %s19, %s26
      %s84 = ssub.s32 %s18, %s30
      %s85 = sor.u32 %s83, %s84
      %p86 = scmp.eq.s32.totalorder %s85, 0
      %s88 = sadd.s32 %s87, 1
      %s89 = scalar_select %p86, %s87, %s88
      %p92 = pneg %p86
      %p93 = scmp.eq.s32.totalorder %s11, 3
      %p94 = por %p92, %p93
      %p95 = scmp.ne.s32.totalorder %s87, %s90
      %p96 = scmp.eq.s32.totalorder %s11, 0
      %p97 = por %p95, %p96
      %p98 = scmp.ne.s32.totalorder %s87, %s90
      %p99 = scmp.eq.s32.totalorder %s16, 3
      %p100 = por %p98, %p99
      %p101 = scmp.ne.s32.totalorder %s90, %s91
      %p102 = scmp.eq.s32.totalorder %s16, 0
      %p103 = por %p101, %p102
      %p104 = scmp.ne.s32.totalorder %s90, %s91
      %p105 = scmp.eq.s32.totalorder %s17, 3
      %p106 = por %p104, %p105
      %p108 = scmp.ne.s32.totalorder %s91, %s107
      %p109 = scmp.eq.s32.totalorder %s17, 0
      %p110 = por %p108, %p109
      %s111 = ssub.s32 %s19, %s26
      %s112 = ssub.s32 %s18, %s30
      %s113 = sor.u32 %s111, %s112
      %p114 = scmp.eq.s32.totalorder %s113, 0
      %s116 = sadd.s32 %s115, 1
      %s117 = scalar_select %p114, %s115, %s116
      %p120 = pneg %p114
      %p121 = scmp.eq.s32.totalorder %s11, 3
      %p122 = por %p120, %p121
      %p123 = scmp.ne.s32.totalorder %s115, %s118
      %p124 = scmp.eq.s32.totalorder %s11, 0
      %p125 = por %p123, %p124
      %p126 = scmp.ne.s32.totalorder %s115, %s118
      %p127 = scmp.eq.s32.totalorder %s16, 3
      %p128 = por %p126, %p127
      %p129 = scmp.ne.s32.totalorder %s118, %s119
      %p130 = scmp.eq.s32.totalorder %s16, 0
      %p131 = por %p129, %p130
      %p132 = scmp.ne.s32.totalorder %s118, %s119
      %p133 = scmp.eq.s32.totalorder %s17, 3
      %p134 = por %p132, %p133
      %p136 = scmp.ne.s32.totalorder %s119, %s135
      %p137 = scmp.eq.s32.totalorder %s17, 0
      %p138 = por %p136, %p137
      %s139 = ssub.s32 %s19, %s26
      %s140 = ssub.s32 %s18, %s30
      %s141 = sor.u32 %s139, %s140
      %p142 = scmp.eq.s32.totalorder %s141, 0
      %s144 = sadd.s32 %s143, 1
      %s145 = scalar_select %p142, %s143, %s144
      %p148 = pneg %p142
      %p149 = scmp.eq.s32.totalorder %s11, 3
      %p150 = por %p148, %p149
      %p151 = scmp.ne.s32.totalorder %s143, %s146
      %p152 = scmp.eq.s32.totalorder %s11, 0
      %p153 = por %p151, %p152
      %p154 = scmp.ne.s32.totalorder %s143, %s146
      %p155 = scmp.eq.s32.totalorder %s16, 3
      %p156 = por %p154, %p155
      %p157 = scmp.ne.s32.totalorder %s146, %s147
      %p158 = scmp.eq.s32.totalorder %s16, 0
      %p159 = por %p157, %p158
      %p160 = scmp.ne.s32.totalorder %s146, %s147
      %p161 = scmp.eq.s32.totalorder %s17, 3
      %p162 = por %p160, %p161
      %p164 = scmp.ne.s32.totalorder %s147, %s163
      %p165 = scmp.eq.s32.totalorder %s17, 0
      %p166 = por %p164, %p165
      %p167 = scmp.le.s32.totalorder 1, %s11
      %p168 = scmp.lt.s32.totalorder %s11, 5
      %p169 = pnand %p167, %p168
      %p170 = pneg %p169
      // Predicated region
      $region9: #{conv_layer.1} parent=5 // pred_check
        _
      $region10: #{conv_layer.1} parent=5 // pred_check_branch
        %172 = sbr.rel (%p169) target = $region12
      $region11: #{conv_layer.1} parent=5 // pred_region
        %s173 = ssub.s32 %s11, 1
        // Predicated region
        $region13: #{conv_layer.1} parent=11 // pred_check
          %p174 = pneg %p75
        $region14: #{conv_layer.1} parent=11 // pred_check_branch
          %176 = sbr.rel (%p174) target = $region16
        $region15: #{conv_layer.1} parent=11 // pred_region
          %s177 = smul.u32 2, %s20
          %p178 = scmp.lt.s32.totalorder %s177, 1
          %s179 = scalar_select %p178, %s177, 1
          %s180 = smul.addr %s179, 4
          %s181 = scalar_lea.vmem %s1, %s180
          %s182 = smul.u32 2, %s20
        $region16: #{conv_layer.1} parent=11 // pred_fallthru
          _
      $region12: #{conv_layer.1} parent=5 // pred_fallthru
        _
      %p183 = scmp.lt.s32.totalorder %s11, 4
      // Predicated region
      $region17: #{conv_layer.1} parent=5 // pred_check
        %p184 = pneg %p183
      $region18: #{conv_layer.1} parent=5 // pred_check_branch
        %186 = sbr.rel (%p184) target = $region20
      $region19: #{conv_layer.1} parent=5 // pred_region
        // Predicated region
        $region21: #{conv_layer.1} parent=19 // pred_check
          %p187 = pneg %p43
        $region22: #{conv_layer.1} parent=19 // pred_check_branch
          %189 = sbr.rel (%p187) target = $region24
        $region23: #{conv_layer.1} parent=19 // pred_region
          %s190 = sand.u32 %s33, 1
          %s191 = sand.u32 %s33, 1
          %s192 = smul.addr %s191, 576
          %s193 = scalar_lea.vmem [#allocation2], %s192
          %s194 = smul.addr %s19, 16
          %s195 = smul.addr %s194, 4
          %s196 = scalar_lea.vmem %s0, %s195
          // Predicated region
          $region25: #{conv_layer.1} parent=23 // pred_check
            _
          $region26: #{conv_layer.1} parent=23 // pred_check_branch
            %198 = sbr.rel (0) target = $region28
          $region27: #{conv_layer.1} parent=23 // pred_region
            // Predicated region
            $region29: #{conv_layer.1} parent=27 // pred_check
              _
            $region30: #{conv_layer.1} parent=27 // pred_check_branch
              %200 = sbr.rel (0) target = $region32
            $region31: #{conv_layer.1} parent=27 // pred_region
              loop: start=0, step=1, limit=1
              $region33: #{conv_layer.1} parent=31 // loop_pre_header
                _
              $region34: #{conv_layer.1} parent=31 // loop_header
                %s202 = sphi 0, %s206
                %p203 = scmp.ge.s32.totalorder %s202, 1
                %s207 = sphi %s196, %s196
                %s208 = sphi %s193, %s193
              $region35: #{conv_layer.1} parent=31 // loop_header_branch
                %205 = sbr.rel (%p203) target = $region39
              $region36: #{conv_layer.1} parent=31 // loop_body
                %v209 = vld [vmem:[%s207] sm:$0xff]
                %210 = vst [vmem:[%s208] sm:$0xff] %v209
                %v211 = vld [vmem:[%s207 + $0x8] sm:$0xff]
                %212 = vst [vmem:[%s208 + $0x8] sm:$0xff] %v211
                %v213 = vld [vmem:[%s207 + $0x10] sm:$0xff]
                %214 = vst [vmem:[%s208 + $0x10] sm:$0xff] %v213
                %v215 = vld [vmem:[%s207 + $0x18] sm:$0xff]
                %216 = vst [vmem:[%s208 + $0x18] sm:$0xff] %v215
                %v217 = vld [vmem:[%s207 + $0x20] sm:$0xff]
                %218 = vst [vmem:[%s208 + $0x20] sm:$0xff] %v217
                %v219 = vld [vmem:[%s207 + $0x28] sm:$0xff]
                %220 = vst [vmem:[%s208 + $0x28] sm:$0xff] %v219
                %v221 = vld [vmem:[%s207 + $0x30] sm:$0xff]
                %222 = vst [vmem:[%s208 + $0x30] sm:$0xff] %v221
                %v223 = vld [vmem:[%s207 + $0x38] sm:$0xff]
                %224 = vst [vmem:[%s208 + $0x38] sm:$0xff] %v223
                %v225 = vld [vmem:[%s207 + $0x100] sm:$0xff]
                %226 = vst [vmem:[%s208 + $0x40] sm:$0xff] %v225
                %v227 = vld [vmem:[%s207 + $0x108] sm:$0xff]
                %228 = vst [vmem:[%s208 + $0x48] sm:$0xff] %v227
                %v229 = vld [vmem:[%s207 + $0x110] sm:$0xff]
                %230 = vst [vmem:[%s208 + $0x50] sm:$0xff] %v229
                %v231 = vld [vmem:[%s207 + $0x118] sm:$0xff]
                %232 = vst [vmem:[%s208 + $0x58] sm:$0xff] %v231
                %v233 = vld [vmem:[%s207 + $0x120] sm:$0xff]
                %234 = vst [vmem:[%s208 + $0x60] sm:$0xff] %v233
                %v235 = vld [vmem:[%s207 + $0x128] sm:$0xff]
                %236 = vst [vmem:[%s208 + $0x68] sm:$0xff] %v235
                %v237 = vld [vmem:[%s207 + $0x130] sm:$0xff]
                %238 = vst [vmem:[%s208 + $0x70] sm:$0xff] %v237
                %v239 = vld [vmem:[%s207 + $0x138] sm:$0xff]
                %240 = vst [vmem:[%s208 + $0x78] sm:$0xff] %v239
                %v241 = vld [vmem:[%s207 + $0x200] sm:$0xff]
                %242 = vst [vmem:[%s208 + $0x80] sm:$0xff] %v241
                %v243 = vld [vmem:[%s207 + $0x208] sm:$0xff]
                %244 = vst [vmem:[%s208 + $0x88] sm:$0xff] %v243
                %v245 = vld [vmem:[%s207 + $0x210] sm:$0xff]
                %246 = vst [vmem:[%s208 + $0x90] sm:$0xff] %v245
                %v247 = vld [vmem:[%s207 + $0x218] sm:$0xff]
                %248 = vst [vmem:[%s208 + $0x98] sm:$0xff] %v247
                %v249 = vld [vmem:[%s207 + $0x220] sm:$0xff]
                %250 = vst [vmem:[%s208 + $0xa0] sm:$0xff] %v249
                %v251 = vld [vmem:[%s207 + $0x228] sm:$0xff]
                %252 = vst [vmem:[%s208 + $0xa8] sm:$0xff] %v251
                %v253 = vld [vmem:[%s207 + $0x230] sm:$0xff]
                %254 = vst [vmem:[%s208 + $0xb0] sm:$0xff] %v253
                %v255 = vld [vmem:[%s207 + $0x238] sm:$0xff]
                %256 = vst [vmem:[%s208 + $0xb8] sm:$0xff] %v255
                %v257 = vld [vmem:[%s207 + $0x300] sm:$0xff]
                %258 = vst [vmem:[%s208 + $0xc0] sm:$0xff] %v257
                %v259 = vld [vmem:[%s207 + $0x308] sm:$0xff]
                %260 = vst [vmem:[%s208 + $0xc8] sm:$0xff] %v259
                %v261 = vld [vmem:[%s207 + $0x310] sm:$0xff]
                %262 = vst [vmem:[%s208 + $0xd0] sm:$0xff] %v261
                %v263 = vld [vmem:[%s207 + $0x318] sm:$0xff]
                %264 = vst [vmem:[%s208 + $0xd8] sm:$0xff] %v263
                %v265 = vld [vmem:[%s207 + $0x320] sm:$0xff]
                %266 = vst [vmem:[%s208 + $0xe0] sm:$0xff] %v265
                %v267 = vld [vmem:[%s207 + $0x328] sm:$0xff]
                %268 = vst [vmem:[%s208 + $0xe8] sm:$0xff] %v267
                %v269 = vld [vmem:[%s207 + $0x330] sm:$0xff]
                %270 = vst [vmem:[%s208 + $0xf0] sm:$0xff] %v269
                %v271 = vld [vmem:[%s207 + $0x338] sm:$0xff]
                %272 = vst [vmem:[%s208 + $0xf8] sm:$0xff] %v271
                %v273 = vld [vmem:[%s207 + $0x400] sm:$0xff]
                %274 = vst [vmem:[%s208 + $0x100] sm:$0xff] %v273
                %v275 = vld [vmem:[%s207 + $0x408] sm:$0xff]
                %276 = vst [vmem:[%s208 + $0x108] sm:$0xff] %v275
                %v277 = vld [vmem:[%s207 + $0x410] sm:$0xff]
                %278 = vst [vmem:[%s208 + $0x110] sm:$0xff] %v277
                %v279 = vld [vmem:[%s207 + $0x418] sm:$0xff]
                %280 = vst [vmem:[%s208 + $0x118] sm:$0xff] %v279
                %v281 = vld [vmem:[%s207 + $0x420] sm:$0xff]
                %282 = vst [vmem:[%s208 + $0x120] sm:$0xff] %v281
                %v283 = vld [vmem:[%s207 + $0x428] sm:$0xff]
                %284 = vst [vmem:[%s208 + $0x128] sm:$0xff] %v283
                %v285 = vld [vmem:[%s207 + $0x430] sm:$0xff]
                %286 = vst [vmem:[%s208 + $0x130] sm:$0xff] %v285
                %v287 = vld [vmem:[%s207 + $0x438] sm:$0xff]
                %288 = vst [vmem:[%s208 + $0x138] sm:$0xff] %v287
                %v289 = vld [vmem:[%s207 + $0x500] sm:$0xff]
                %290 = vst [vmem:[%s208 + $0x140] sm:$0xff] %v289
                %v291 = vld [vmem:[%s207 + $0x508] sm:$0xff]
                %292 = vst [vmem:[%s208 + $0x148] sm:$0xff] %v291
                %v293 = vld [vmem:[%s207 + $0x510] sm:$0xff]
                %294 = vst [vmem:[%s208 + $0x150] sm:$0xff] %v293
                %v295 = vld [vmem:[%s207 + $0x518] sm:$0xff]
                %296 = vst [vmem:[%s208 + $0x158] sm:$0xff] %v295
                %v297 = vld [vmem:[%s207 + $0x520] sm:$0xff]
                %298 = vst [vmem:[%s208 + $0x160] sm:$0xff] %v297
                %v299 = vld [vmem:[%s207 + $0x528] sm:$0xff]
                %300 = vst [vmem:[%s208 + $0x168] sm:$0xff] %v299
                %v301 = vld [vmem:[%s207 + $0x530] sm:$0xff]
                %302 = vst [vmem:[%s208 + $0x170] sm:$0xff] %v301
                %v303 = vld [vmem:[%s207 + $0x538] sm:$0xff]
                %304 = vst [vmem:[%s208 + $0x178] sm:$0xff] %v303
                %v305 = vld [vmem:[%s207 + $0x600] sm:$0xff]
                %306 = vst [vmem:[%s208 + $0x180] sm:$0xff] %v305
                %v307 = vld [vmem:[%s207 + $0x608] sm:$0xff]
                %308 = vst [vmem:[%s208 + $0x188] sm:$0xff] %v307
                %v309 = vld [vmem:[%s207 + $0x610] sm:$0xff]
                %310 = vst [vmem:[%s208 + $0x190] sm:$0xff] %v309
                %v311 = vld [vmem:[%s207 + $0x618] sm:$0xff]
                %312 = vst [vmem:[%s208 + $0x198] sm:$0xff] %v311
                %v313 = vld [vmem:[%s207 + $0x620] sm:$0xff]
                %314 = vst [vmem:[%s208 + $0x1a0] sm:$0xff] %v313
                %v315 = vld [vmem:[%s207 + $0x628] sm:$0xff]
                %316 = vst [vmem:[%s208 + $0x1a8] sm:$0xff] %v315
                %v317 = vld [vmem:[%s207 + $0x630] sm:$0xff]
                %318 = vst [vmem:[%s208 + $0x1b0] sm:$0xff] %v317
                %v319 = vld [vmem:[%s207 + $0x638] sm:$0xff]
                %320 = vst [vmem:[%s208 + $0x1b8] sm:$0xff] %v319
                %v321 = vld [vmem:[%s207 + $0x700] sm:$0xff]
                %322 = vst [vmem:[%s208 + $0x1c0] sm:$0xff] %v321
                %v323 = vld [vmem:[%s207 + $0x708] sm:$0xff]
                %324 = vst [vmem:[%s208 + $0x1c8] sm:$0xff] %v323
                %v325 = vld [vmem:[%s207 + $0x710] sm:$0xff]
                %326 = vst [vmem:[%s208 + $0x1d0] sm:$0xff] %v325
                %v327 = vld [vmem:[%s207 + $0x718] sm:$0xff]
                %328 = vst [vmem:[%s208 + $0x1d8] sm:$0xff] %v327
                %v329 = vld [vmem:[%s207 + $0x720] sm:$0xff]
                %330 = vst [vmem:[%s208 + $0x1e0] sm:$0xff] %v329
                %v331 = vld [vmem:[%s207 + $0x728] sm:$0xff]
                %332 = vst [vmem:[%s208 + $0x1e8] sm:$0xff] %v331
                %v333 = vld [vmem:[%s207 + $0x730] sm:$0xff]
                %334 = vst [vmem:[%s208 + $0x1f0] sm:$0xff] %v333
                %v335 = vld [vmem:[%s207 + $0x738] sm:$0xff]
                %336 = vst [vmem:[%s208 + $0x1f8] sm:$0xff] %v335
                %v337 = vld [vmem:[%s207 + $0x800] sm:$0xff]
                %338 = vst [vmem:[%s208 + $0x200] sm:$0xff] %v337
                %v339 = vld [vmem:[%s207 + $0x808] sm:$0xff]
                %340 = vst [vmem:[%s208 + $0x208] sm:$0xff] %v339
                %v341 = vld [vmem:[%s207 + $0x810] sm:$0xff]
                %342 = vst [vmem:[%s208 + $0x210] sm:$0xff] %v341
                %v343 = vld [vmem:[%s207 + $0x818] sm:$0xff]
                %344 = vst [vmem:[%s208 + $0x218] sm:$0xff] %v343
                %v345 = vld [vmem:[%s207 + $0x820] sm:$0xff]
                %346 = vst [vmem:[%s208 + $0x220] sm:$0xff] %v345
                %v347 = vld [vmem:[%s207 + $0x828] sm:$0xff]
                %348 = vst [vmem:[%s208 + $0x228] sm:$0xff] %v347
                %v349 = vld [vmem:[%s207 + $0x830] sm:$0xff]
                %350 = vst [vmem:[%s208 + $0x230] sm:$0xff] %v349
                %v351 = vld [vmem:[%s207 + $0x838] sm:$0xff]
                %352 = vst [vmem:[%s208 + $0x238] sm:$0xff] %v351
              $region37: #{conv_layer.1} parent=31 // loop_footer
                %s206 = sadd.s32 1, %s202
              $region38: #{conv_layer.1} parent=31 // loop_footer_branch
                %201 = sbr.rel target = $region34
              $region39: #{conv_layer.1} parent=31 // loop_exit
                _
            $region32: #{conv_layer.1} parent=27 // pred_fallthru
              _
            // Predicated region
            $region40: #{conv_layer.1} parent=27 // pred_check
              _
            $region41: #{conv_layer.1} parent=27 // pred_check_branch
              %354 = sbr.rel target = $region43
            $region42: #{conv_layer.1} parent=27 // pred_region
              _
            $region43: #{conv_layer.1} parent=27 // pred_fallthru
              _
          $region28: #{conv_layer.1} parent=23 // pred_fallthru
            _
          %355 = vnop
        $region24: #{conv_layer.1} parent=19 // pred_fallthru
          _
      $region20: #{conv_layer.1} parent=5 // pred_fallthru
        _
      %p356 = scmp.le.s32.totalorder 1, %s11
      %p357 = scmp.lt.s32.totalorder %s11, 5
      %p358 = pnand %p356, %p357
      %p359 = pneg %p358
      // Predicated region
      $region44: #{conv_layer.1} parent=5 // pred_check
        _
      $region45: #{conv_layer.1} parent=5 // pred_check_branch
        %361 = sbr.rel (%p358) target = $region47
      $region46: #{conv_layer.1} parent=5 // pred_region
        %s362 = ssub.s32 %s11, 1
        %s363 = sand.u32 %s36, 1
        %s364 = sand.u32 %s36, 1
        %s365 = smul.addr %s364, 576
        %s366 = scalar_lea.vmem [#allocation2], %s365
        // Predicated region
        $region48: #{conv_layer.1} parent=46 // pred_check
          %p367 = pneg %p49
        $region49: #{conv_layer.1} parent=46 // pred_check_branch
          %369 = sbr.rel (%p367) target = $region51
        $region50: #{conv_layer.1} parent=46 // pred_region
          _
        $region51: #{conv_layer.1} parent=46 // pred_fallthru
          _
        %s370 = sand.u32 %s36, 1
        %s371 = sand.u32 %s36, 1
        %s372 = smul.addr %s371, 576
        %s373 = scalar_lea.vmem [#allocation2], %s372
        %p374 = pneg %p49
        %p375 = pneg %p46
        %s376 = smul.u32 2, %s20
        %p377 = scmp.lt.s32.totalorder %s376, 1
        %s378 = scalar_select %p377, %s376, 1
        %s379 = smul.addr %s378, 4
        %s380 = scalar_lea.vmem %s1, %s379
        %p381 = pneg %p75
        %p382 = pneg %p72
        %p383 = pneg %p103
        %p384 = pneg %p100
        %s385 = smul.u32 2, %s20
        %p386 = scmp.lt.s32.totalorder %s21, 3
        %s387 = scalar_select %p386, %s21, 3
        %p388 = scmp.lt.s32.totalorder %s385, 1
        %s389 = scalar_select %p388, %s385, 1
        %s390 = smul.addr %s387, 8
        %s391 = sadd.s32 %s389, %s390
        %s392 = smul.addr %s391, 4
        %s393 = scalar_lea.vmem %s2, %s392
        %p394 = pneg %p131
        %p395 = pneg %p128
        %s396 = smul.u32 2, %s20
        %p397 = scmp.lt.s32.totalorder %s21, 3
        %s398 = scalar_select %p397, %s21, 3
        %p399 = scmp.lt.s32.totalorder %s396, 1
        %s400 = scalar_select %p399, %s396, 1
        %s401 = smul.addr %s398, 2
        %s402 = sadd.s32 %s400, %s401
        %s403 = scalar_lea.vmem %s3, %s402
        %p404 = pneg %p159
        %p405 = pneg %p156
        %s406 = smul.u32 2, %s20
        %p407 = scmp.lt.s32.totalorder %s21, 3
        %s408 = scalar_select %p407, %s21, 3
        %p409 = scmp.lt.s32.totalorder %s406, 1
        %s410 = scalar_select %p409, %s406, 1
        %s411 = smul.addr %s408, 2
        %s412 = sadd.s32 %s410, %s411
        %s413 = scalar_lea.vmem %s4, %s412
        %s414 = smul.u32 2, %s20
        %p415 = scmp.lt.s32.totalorder %s414, 1
        %s416 = scalar_select %p415, %s414, 1
        %s417 = smul.addr %s416, 4
        %s418 = scalar_lea.vmem %s1, %s417
        %s419 = smul.u32 2, %s20
        %s420 = smul.u32 2, %s20
        %p421 = scmp.lt.s32.totalorder %s21, 3
        %s422 = scalar_select %p421, %s21, 3
        %p423 = scmp.lt.s32.totalorder %s420, 1
        %s424 = scalar_select %p423, %s420, 1
        %s425 = smul.addr %s422, 8
        %s426 = sadd.s32 %s424, %s425
        %s427 = smul.addr %s426, 4
        %s428 = scalar_lea.vmem %s2, %s427
        %s429 = smul.u32 2, %s20
        %s430 = smul.u32 2, %s20
        %p431 = scmp.lt.s32.totalorder %s21, 3
        %s432 = scalar_select %p431, %s21, 3
        %p433 = scmp.lt.s32.totalorder %s430, 1
        %s434 = scalar_select %p433, %s430, 1
        %s435 = smul.addr %s432, 2
        %s436 = sadd.s32 %s434, %s435
        %s437 = scalar_lea.vmem %s3, %s436
        %s438 = smul.u32 2, %s20
        %s439 = smul.u32 2, %s20
        %p440 = scmp.lt.s32.totalorder %s21, 3
        %s441 = scalar_select %p440, %s21, 3
        %p442 = scmp.lt.s32.totalorder %s439, 1
        %s443 = scalar_select %p442, %s439, 1
        %s444 = smul.addr %s441, 2
        %s445 = sadd.s32 %s443, %s444
        %s446 = scalar_lea.vmem %s4, %s445
        %s447 = smul.u32 2, %s20
        %v448 = vld [vmem:[%s366] sm:$0xff]
        %v449 = vld [vmem:[%s366 + $0x8] sm:$0xff]
        %v450 = vld [vmem:[%s366 + $0x10] sm:$0xff]
        %v451 = vld [vmem:[%s366 + $0x18] sm:$0xff]
        %v452 = vld [vmem:[%s366 + $0x20] sm:$0xff]
        %v453 = vld [vmem:[%s366 + $0x28] sm:$0xff]
        %v454 = vld [vmem:[%s366 + $0x30] sm:$0xff]
        %v455 = vld [vmem:[%s366 + $0x38] sm:$0xff]
        %v456 = vld [vmem:[%s418] sm:$0xff]
        %v457 = vld [vmem:[%s418 + $0x8] sm:$0xff]
        %v458 = vld [vmem:[%s418 + $0x10] sm:$0xff]
        %v459 = vld [vmem:[%s418 + $0x18] sm:$0xff]
        %v460 = vld [vmem:[%s418 + $0x20] sm:$0xff]
        %v461 = vld [vmem:[%s418 + $0x28] sm:$0xff]
        %v462 = vld [vmem:[%s418 + $0x30] sm:$0xff]
        %v463 = vld [vmem:[%s418 + $0x38] sm:$0xff]
        %v464 = vld [vmem:[%s418 + $0x40] sm:$0xff]
        %v465 = vld [vmem:[%s418 + $0x48] sm:$0xff]
        %v466 = vld [vmem:[%s418 + $0x50] sm:$0xff]
        %v467 = vld [vmem:[%s418 + $0x58] sm:$0xff]
        %v468 = vld [vmem:[%s418 + $0x60] sm:$0xff]
        %v469 = vld [vmem:[%s418 + $0x68] sm:$0xff]
        %v470 = vld [vmem:[%s418 + $0x70] sm:$0xff]
        %v471 = vld [vmem:[%s418 + $0x78] sm:$0xff]
        %v472 = vld [vmem:[%s418 + $0x80] sm:$0xff]
        %v473 = vld [vmem:[%s418 + $0x88] sm:$0xff]
        %v474 = vld [vmem:[%s418 + $0x90] sm:$0xff]
        %v475 = vld [vmem:[%s418 + $0x98] sm:$0xff]
        %v476 = vld [vmem:[%s418 + $0xa0] sm:$0xff]
        %v477 = vld [vmem:[%s418 + $0xa8] sm:$0xff]
        %v478 = vld [vmem:[%s418 + $0xb0] sm:$0xff]
        %v479 = vld [vmem:[%s418 + $0xb8] sm:$0xff]
        %v480 = vld [vmem:[%s418 + $0xc0] sm:$0xff]
        %v481 = vld [vmem:[%s418 + $0xc8] sm:$0xff]
        %v482 = vld [vmem:[%s418 + $0xd0] sm:$0xff]
        %v483 = vld [vmem:[%s418 + $0xd8] sm:$0xff]
        %v484 = vld [vmem:[%s418 + $0xe0] sm:$0xff]
        %v485 = vld [vmem:[%s418 + $0xe8] sm:$0xff]
        %v486 = vld [vmem:[%s418 + $0xf0] sm:$0xff]
        %v487 = vld [vmem:[%s418 + $0xf8] sm:$0xff]
        %v488 = vld [vmem:[%s418 + $0x100] sm:$0xff]
        %v489 = vld [vmem:[%s418 + $0x108] sm:$0xff]
        %v490 = vld [vmem:[%s418 + $0x110] sm:$0xff]
        %v491 = vld [vmem:[%s418 + $0x118] sm:$0xff]
        %v492 = vld [vmem:[%s418 + $0x120] sm:$0xff]
        %v493 = vld [vmem:[%s418 + $0x128] sm:$0xff]
        %v494 = vld [vmem:[%s418 + $0x130] sm:$0xff]
        %v495 = vld [vmem:[%s418 + $0x138] sm:$0xff]
        %v496 = vld [vmem:[%s418 + $0x140] sm:$0xff]
        %v497 = vld [vmem:[%s418 + $0x148] sm:$0xff]
        %v498 = vld [vmem:[%s418 + $0x150] sm:$0xff]
        %v499 = vld [vmem:[%s418 + $0x158] sm:$0xff]
        %v500 = vld [vmem:[%s418 + $0x160] sm:$0xff]
        %v501 = vld [vmem:[%s418 + $0x168] sm:$0xff]
        %v502 = vld [vmem:[%s418 + $0x170] sm:$0xff]
        %v503 = vld [vmem:[%s418 + $0x178] sm:$0xff]
        %v504 = vld [vmem:[%s418 + $0x180] sm:$0xff]
        %v505 = vld [vmem:[%s418 + $0x188] sm:$0xff]
        %v506 = vld [vmem:[%s418 + $0x190] sm:$0xff]
        %v507 = vld [vmem:[%s418 + $0x198] sm:$0xff]
        %v508 = vld [vmem:[%s418 + $0x1a0] sm:$0xff]
        %v509 = vld [vmem:[%s418 + $0x1a8] sm:$0xff]
        %v510 = vld [vmem:[%s418 + $0x1b0] sm:$0xff]
        %v511 = vld [vmem:[%s418 + $0x1b8] sm:$0xff]
        %v512 = vld [vmem:[%s418 + $0x1c0] sm:$0xff]
        %v513 = vld [vmem:[%s418 + $0x1c8] sm:$0xff]
        %v514 = vld [vmem:[%s418 + $0x1d0] sm:$0xff]
        %v515 = vld [vmem:[%s418 + $0x1d8] sm:$0xff]
        %v516 = vld [vmem:[%s418 + $0x1e0] sm:$0xff]
        %v517 = vld [vmem:[%s418 + $0x1e8] sm:$0xff]
        %v518 = vld [vmem:[%s418 + $0x1f0] sm:$0xff]
        %v519 = vld [vmem:[%s418 + $0x1f8] sm:$0xff]
        %s520 = scalar_lea.vmem %s366, 64 [#allocation2]
        %v521 = vld [vmem:[%s520] sm:$0xff]
        %v522 = vld [vmem:[%s520 + $0x8] sm:$0xff]
        %v523 = vld [vmem:[%s520 + $0x10] sm:$0xff]
        %v524 = vld [vmem:[%s520 + $0x18] sm:$0xff]
        %v525 = vld [vmem:[%s520 + $0x20] sm:$0xff]
        %v526 = vld [vmem:[%s520 + $0x28] sm:$0xff]
        %v527 = vld [vmem:[%s520 + $0x30] sm:$0xff]
        %v528 = vld [vmem:[%s520 + $0x38] sm:$0xff]
        %s529 = scalar_lea.vmem %s418, 512
        %v530 = vld [vmem:[%s529] sm:$0xff]
        %v531 = vld [vmem:[%s529 + $0x8] sm:$0xff]
        %v532 = vld [vmem:[%s529 + $0x10] sm:$0xff]
        %v533 = vld [vmem:[%s529 + $0x18] sm:$0xff]
        %v534 = vld [vmem:[%s529 + $0x20] sm:$0xff]
        %v535 = vld [vmem:[%s529 + $0x28] sm:$0xff]
        %v536 = vld [vmem:[%s529 + $0x30] sm:$0xff]
        %v537 = vld [vmem:[%s529 + $0x38] sm:$0xff]
        %v538 = vld [vmem:[%s529 + $0x40] sm:$0xff]
        %v539 = vld [vmem:[%s529 + $0x48] sm:$0xff]
        %v540 = vld [vmem:[%s529 + $0x50] sm:$0xff]
        %v541 = vld [vmem:[%s529 + $0x58] sm:$0xff]
        %v542 = vld [vmem:[%s529 + $0x60] sm:$0xff]
        %v543 = vld [vmem:[%s529 + $0x68] sm:$0xff]
        %v544 = vld [vmem:[%s529 + $0x70] sm:$0xff]
        %v545 = vld [vmem:[%s529 + $0x78] sm:$0xff]
        %v546 = vld [vmem:[%s529 + $0x80] sm:$0xff]
        %v547 = vld [vmem:[%s529 + $0x88] sm:$0xff]
        %v548 = vld [vmem:[%s529 + $0x90] sm:$0xff]
        %v549 = vld [vmem:[%s529 + $0x98] sm:$0xff]
        %v550 = vld [vmem:[%s529 + $0xa0] sm:$0xff]
        %v551 = vld [vmem:[%s529 + $0xa8] sm:$0xff]
        %v552 = vld [vmem:[%s529 + $0xb0] sm:$0xff]
        %v553 = vld [vmem:[%s529 + $0xb8] sm:$0xff]
        %v554 = vld [vmem:[%s529 + $0xc0] sm:$0xff]
        %v555 = vld [vmem:[%s529 + $0xc8] sm:$0xff]
        %v556 = vld [vmem:[%s529 + $0xd0] sm:$0xff]
        %v557 = vld [vmem:[%s529 + $0xd8] sm:$0xff]
        %v558 = vld [vmem:[%s529 + $0xe0] sm:$0xff]
        %v559 = vld [vmem:[%s529 + $0xe8] sm:$0xff]
        %v560 = vld [vmem:[%s529 + $0xf0] sm:$0xff]
        %v561 = vld [vmem:[%s529 + $0xf8] sm:$0xff]
        %v562 = vld [vmem:[%s529 + $0x100] sm:$0xff]
        %v563 = vld [vmem:[%s529 + $0x108] sm:$0xff]
        %v564 = vld [vmem:[%s529 + $0x110] sm:$0xff]
        %v565 = vld [vmem:[%s529 + $0x118] sm:$0xff]
        %v566 = vld [vmem:[%s529 + $0x120] sm:$0xff]
        %v567 = vld [vmem:[%s529 + $0x128] sm:$0xff]
        %v568 = vld [vmem:[%s529 + $0x130] sm:$0xff]
        %v569 = vld [vmem:[%s529 + $0x138] sm:$0xff]
        %v570 = vld [vmem:[%s529 + $0x140] sm:$0xff]
        %v571 = vld [vmem:[%s529 + $0x148] sm:$0xff]
        %v572 = vld [vmem:[%s529 + $0x150] sm:$0xff]
        %v573 = vld [vmem:[%s529 + $0x158] sm:$0xff]
        %v574 = vld [vmem:[%s529 + $0x160] sm:$0xff]
        %v575 = vld [vmem:[%s529 + $0x168] sm:$0xff]
        %v576 = vld [vmem:[%s529 + $0x170] sm:$0xff]
        %v577 = vld [vmem:[%s529 + $0x178] sm:$0xff]
        %v578 = vld [vmem:[%s529 + $0x180] sm:$0xff]
        %v579 = vld [vmem:[%s529 + $0x188] sm:$0xff]
        %v580 = vld [vmem:[%s529 + $0x190] sm:$0xff]
        %v581 = vld [vmem:[%s529 + $0x198] sm:$0xff]
        %v582 = vld [vmem:[%s529 + $0x1a0] sm:$0xff]
        %v583 = vld [vmem:[%s529 + $0x1a8] sm:$0xff]
        %v584 = vld [vmem:[%s529 + $0x1b0] sm:$0xff]
        %v585 = vld [vmem:[%s529 + $0x1b8] sm:$0xff]
        %v586 = vld [vmem:[%s529 + $0x1c0] sm:$0xff]
        %v587 = vld [vmem:[%s529 + $0x1c8] sm:$0xff]
        %v588 = vld [vmem:[%s529 + $0x1d0] sm:$0xff]
        %v589 = vld [vmem:[%s529 + $0x1d8] sm:$0xff]
        %v590 = vld [vmem:[%s529 + $0x1e0] sm:$0xff]
        %v591 = vld [vmem:[%s529 + $0x1e8] sm:$0xff]
        %v592 = vld [vmem:[%s529 + $0x1f0] sm:$0xff]
        %v593 = vld [vmem:[%s529 + $0x1f8] sm:$0xff]
        %v602 = vunpack.c.l.b16 %v521
        %v603 = vunpack.c.h.b16 %v521
        %v604 = vunpack.c.l.b16 %v522
        %v605 = vunpack.c.h.b16 %v522
        %v606 = vunpack.c.l.b16 %v523
        %v607 = vunpack.c.h.b16 %v523
        %v608 = vunpack.c.l.b16 %v524
        %v609 = vunpack.c.h.b16 %v524
        %v610 = vunpack.c.l.b16 %v525
        %v611 = vunpack.c.h.b16 %v525
        %v612 = vunpack.c.l.b16 %v526
        %v613 = vunpack.c.h.b16 %v526
        %v614 = vunpack.c.l.b16 %v527
        %v615 = vunpack.c.h.b16 %v527
        %v616 = vunpack.c.l.b16 %v528
        %v617 = vunpack.c.h.b16 %v528
        %v618 = vpack.c.b16 %v606, %v602
        %v619 = vpack.c.b16 %v607, %v603
        %v620 = vpack.c.b16 %v608, %v604
        %v621 = vpack.c.b16 %v609, %v605
        %v622 = vpack.c.b16 %v614, %v610
        %v623 = vpack.c.b16 %v615, %v611
        %v624 = vpack.c.b16 %v616, %v612
        %v625 = vpack.c.b16 %v617, %v613
        %v698 = vunpack.c.l.b16 %v530
        %v699 = vunpack.c.h.b16 %v530
        %v700 = vunpack.c.l.b16 %v531
        %v701 = vunpack.c.h.b16 %v531
        %v702 = vunpack.c.l.b16 %v532
        %v703 = vunpack.c.h.b16 %v532
        %v704 = vunpack.c.l.b16 %v533
        %v705 = vunpack.c.h.b16 %v533
        %v706 = vunpack.c.l.b16 %v534
        %v707 = vunpack.c.h.b16 %v534
        %v708 = vunpack.c.l.b16 %v535
        %v709 = vunpack.c.h.b16 %v535
        %v710 = vunpack.c.l.b16 %v536
        %v711 = vunpack.c.h.b16 %v536
        %v712 = vunpack.c.l.b16 %v537
        %v713 = vunpack.c.h.b16 %v537
        %v714 = vunpack.c.l.b16 %v538
        %v715 = vunpack.c.h.b16 %v538
        %v716 = vunpack.c.l.b16 %v539
        %v717 = vunpack.c.h.b16 %v539
        %v718 = vunpack.c.l.b16 %v540
        %v719 = vunpack.c.h.b16 %v540
        %v720 = vunpack.c.l.b16 %v541
        %v721 = vunpack.c.h.b16 %v541
        %v722 = vunpack.c.l.b16 %v542
        %v723 = vunpack.c.h.b16 %v542
        %v724 = vunpack.c.l.b16 %v543
        %v725 = vunpack.c.h.b16 %v543
        %v726 = vunpack.c.l.b16 %v544
        %v727 = vunpack.c.h.b16 %v544
        %v728 = vunpack.c.l.b16 %v545
        %v729 = vunpack.c.h.b16 %v545
        %v730 = vunpack.c.l.b16 %v546
        %v731 = vunpack.c.h.b16 %v546
        %v732 = vunpack.c.l.b16 %v547
        %v733 = vunpack.c.h.b16 %v547
        %v734 = vunpack.c.l.b16 %v548
        %v735 = vunpack.c.h.b16 %v548
        %v736 = vunpack.c.l.b16 %v549
        %v737 = vunpack.c.h.b16 %v549
        %v738 = vunpack.c.l.b16 %v550
        %v739 = vunpack.c.h.b16 %v550
        %v740 = vunpack.c.l.b16 %v551
        %v741 = vunpack.c.h.b16 %v551
        %v742 = vunpack.c.l.b16 %v552
        %v743 = vunpack.c.h.b16 %v552
        %v744 = vunpack.c.l.b16 %v553
        %v745 = vunpack.c.h.b16 %v553
        %v746 = vunpack.c.l.b16 %v554
        %v747 = vunpack.c.h.b16 %v554
        %v748 = vunpack.c.l.b16 %v555
        %v749 = vunpack.c.h.b16 %v555
        %v750 = vunpack.c.l.b16 %v556
        %v751 = vunpack.c.h.b16 %v556
        %v752 = vunpack.c.l.b16 %v557
        %v753 = vunpack.c.h.b16 %v557
        %v754 = vunpack.c.l.b16 %v558
        %v755 = vunpack.c.h.b16 %v558
        %v756 = vunpack.c.l.b16 %v559
        %v757 = vunpack.c.h.b16 %v559
        %v758 = vunpack.c.l.b16 %v560
        %v759 = vunpack.c.h.b16 %v560
        %v760 = vunpack.c.l.b16 %v561
        %v761 = vunpack.c.h.b16 %v561
        %v762 = vunpack.c.l.b16 %v562
        %v763 = vunpack.c.h.b16 %v562
        %v764 = vunpack.c.l.b16 %v563
        %v765 = vunpack.c.h.b16 %v563
        %v766 = vunpack.c.l.b16 %v564
        %v767 = vunpack.c.h.b16 %v564
        %v768 = vunpack.c.l.b16 %v565
        %v769 = vunpack.c.h.b16 %v565
        %v770 = vunpack.c.l.b16 %v566
        %v771 = vunpack.c.h.b16 %v566
        %v772 = vunpack.c.l.b16 %v567
        %v773 = vunpack.c.h.b16 %v567
        %v774 = vunpack.c.l.b16 %v568
        %v775 = vunpack.c.h.b16 %v568
        %v776 = vunpack.c.l.b16 %v569
        %v777 = vunpack.c.h.b16 %v569
        %v778 = vunpack.c.l.b16 %v570
        %v779 = vunpack.c.h.b16 %v570
        %v780 = vunpack.c.l.b16 %v571
        %v781 = vunpack.c.h.b16 %v571
        %v782 = vunpack.c.l.b16 %v572
        %v783 = vunpack.c.h.b16 %v572
        %v784 = vunpack.c.l.b16 %v573
        %v785 = vunpack.c.h.b16 %v573
        %v786 = vunpack.c.l.b16 %v574
        %v787 = vunpack.c.h.b16 %v574
        %v788 = vunpack.c.l.b16 %v575
        %v789 = vunpack.c.h.b16 %v575
        %v790 = vunpack.c.l.b16 %v576
        %v791 = vunpack.c.h.b16 %v576
        %v792 = vunpack.c.l.b16 %v577
        %v793 = vunpack.c.h.b16 %v577
        %v794 = vunpack.c.l.b16 %v578
        %v795 = vunpack.c.h.b16 %v578
        %v796 = vunpack.c.l.b16 %v579
        %v797 = vunpack.c.h.b16 %v579
        %v798 = vunpack.c.l.b16 %v580
        %v799 = vunpack.c.h.b16 %v580
        %v800 = vunpack.c.l.b16 %v581
        %v801 = vunpack.c.h.b16 %v581
        %v802 = vunpack.c.l.b16 %v582
        %v803 = vunpack.c.h.b16 %v582
        %v804 = vunpack.c.l.b16 %v583
        %v805 = vunpack.c.h.b16 %v583
        %v806 = vunpack.c.l.b16 %v584
        %v807 = vunpack.c.h.b16 %v584
        %v808 = vunpack.c.l.b16 %v585
        %v809 = vunpack.c.h.b16 %v585
        %v810 = vunpack.c.l.b16 %v586
        %v811 = vunpack.c.h.b16 %v586
        %v812 = vunpack.c.l.b16 %v587
        %v813 = vunpack.c.h.b16 %v587
        %v814 = vunpack.c.l.b16 %v588
        %v815 = vunpack.c.h.b16 %v588
        %v816 = vunpack.c.l.b16 %v589
        %v817 = vunpack.c.h.b16 %v589
        %v818 = vunpack.c.l.b16 %v590
        %v819 = vunpack.c.h.b16 %v590
        %v820 = vunpack.c.l.b16 %v591
        %v821 = vunpack.c.h.b16 %v591
        %v822 = vunpack.c.l.b16 %v592
        %v823 = vunpack.c.h.b16 %v592
        %v824 = vunpack.c.l.b16 %v593
        %v825 = vunpack.c.h.b16 %v593
        %v826 = vpack.c.b16 %v700, %v698
        %v827 = vpack.c.b16 %v701, %v699
        %v828 = vpack.c.b16 %v704, %v702
        %v829 = vpack.c.b16 %v705, %v703
        %v830 = vpack.c.b16 %v708, %v706
        %v831 = vpack.c.b16 %v709, %v707
        %v832 = vpack.c.b16 %v712, %v710
        %v833 = vpack.c.b16 %v713, %v711
        %v834 = vpack.c.b16 %v716, %v714
        %v835 = vpack.c.b16 %v717, %v715
        %v836 = vpack.c.b16 %v720, %v718
        %v837 = vpack.c.b16 %v721, %v719
        %v838 = vpack.c.b16 %v724, %v722
        %v839 = vpack.c.b16 %v725, %v723
        %v840 = vpack.c.b16 %v728, %v726
        %v841 = vpack.c.b16 %v729, %v727
        %v842 = vpack.c.b16 %v732, %v730
        %v843 = vpack.c.b16 %v733, %v731
        %v844 = vpack.c.b16 %v736, %v734
        %v845 = vpack.c.b16 %v737, %v735
        %v846 = vpack.c.b16 %v740, %v738
        %v847 = vpack.c.b16 %v741, %v739
        %v848 = vpack.c.b16 %v744, %v742
        %v849 = vpack.c.b16 %v745, %v743
        %v850 = vpack.c.b16 %v748, %v746
        %v851 = vpack.c.b16 %v749, %v747
        %v852 = vpack.c.b16 %v752, %v750
        %v853 = vpack.c.b16 %v753, %v751
        %v854 = vpack.c.b16 %v756, %v754
        %v855 = vpack.c.b16 %v757, %v755
        %v856 = vpack.c.b16 %v760, %v758
        %v857 = vpack.c.b16 %v761, %v759
        %v858 = vpack.c.b16 %v764, %v762
        %v859 = vpack.c.b16 %v765, %v763
        %v860 = vpack.c.b16 %v768, %v766
        %v861 = vpack.c.b16 %v769, %v767
        %v862 = vpack.c.b16 %v772, %v770
        %v863 = vpack.c.b16 %v773, %v771
        %v864 = vpack.c.b16 %v776, %v774
        %v865 = vpack.c.b16 %v777, %v775
        %v866 = vpack.c.b16 %v780, %v778
        %v867 = vpack.c.b16 %v781, %v779
        %v868 = vpack.c.b16 %v784, %v782
        %v869 = vpack.c.b16 %v785, %v783
        %v870 = vpack.c.b16 %v788, %v786
        %v871 = vpack.c.b16 %v789, %v787
        %v872 = vpack.c.b16 %v792, %v790
        %v873 = vpack.c.b16 %v793, %v791
        %v874 = vpack.c.b16 %v796, %v794
        %v875 = vpack.c.b16 %v797, %v795
        %v876 = vpack.c.b16 %v800, %v798
        %v877 = vpack.c.b16 %v801, %v799
        %v878 = vpack.c.b16 %v804, %v802
        %v879 = vpack.c.b16 %v805, %v803
        %v880 = vpack.c.b16 %v808, %v806
        %v881 = vpack.c.b16 %v809, %v807
        %v882 = vpack.c.b16 %v812, %v810
        %v883 = vpack.c.b16 %v813, %v811
        %v884 = vpack.c.b16 %v816, %v814
        %v885 = vpack.c.b16 %v817, %v815
        %v886 = vpack.c.b16 %v820, %v818
        %v887 = vpack.c.b16 %v821, %v819
        %v888 = vpack.c.b16 %v824, %v822
        %v889 = vpack.c.b16 %v825, %v823
        %954 = vmatpush.bf16.msra.mxu0 %v840
        %955 = vmatpush.bf16.msra.mxu0 %v838
        %956 = vmatpush.bf16.msra.mxu0 %v836
        %957 = vmatpush.bf16.msra.mxu0 %v834
        %958 = vmatpush.bf16.msra.mxu0 %v832
        %959 = vmatpush.bf16.msra.mxu0 %v830
        %960 = vmatpush.bf16.msra.mxu0 %v828
        %961 = vmatpush.bf16.msra.mxu0 %v826
        %962 = vmatmul.bf16.gmra.mxu0 %v618
        %v963 = vpop.f32.mrf.mxu0
        %v964 = vadd.f32 0.0, %v963
        %v965 = vpop.f32.mrf.mxu0
        %v966 = vadd.f32 0.0, %v965
        %967 = vmatmul.bf16.gmra.mxu0 %v622
        %v968 = vpop.f32.mrf.mxu0
        %v969 = vadd.f32 0.0, %v968
        %v970 = vpop.f32.mrf.mxu0
        %v971 = vadd.f32 0.0, %v970
        %972 = vdwg.mxu0
        %973 = vmatpush.bf16.msra.mxu0 %v856
        %974 = vmatpush.bf16.msra.mxu0 %v854
        %975 = vmatpush.bf16.msra.mxu0 %v852
        %976 = vmatpush.bf16.msra.mxu0 %v850
        %977 = vmatpush.bf16.msra.mxu0 %v848
        %978 = vmatpush.bf16.msra.mxu0 %v846
        %979 = vmatpush.bf16.msra.mxu0 %v844
        %980 = vmatpush.bf16.msra.mxu0 %v842
        %981 = vmatmul.bf16.gmra.mxu0 %v619
        %v982 = vpop.f32.mrf.mxu0
        %v983 = vadd.f32 %v964, %v982
        %v984 = vpop.f32.mrf.mxu0
        %v985 = vadd.f32 %v966, %v984
        %986 = vmatmul.bf16.gmra.mxu0 %v623
        %v987 = vpop.f32.mrf.mxu0
        %v988 = vadd.f32 %v969, %v987
        %v989 = vpop.f32.mrf.mxu0
        %v990 = vadd.f32 %v971, %v989
        %991 = vdwg.mxu0
        %992 = vmatpush.bf16.msra.mxu0 %v872
        %993 = vmatpush.bf16.msra.mxu0 %v870
        %994 = vmatpush.bf16.msra.mxu0 %v868
        %995 = vmatpush.bf16.msra.mxu0 %v866
        %996 = vmatpush.bf16.msra.mxu0 %v864
        %997 = vmatpush.bf16.msra.mxu0 %v862
        %998 = vmatpush.bf16.msra.mxu0 %v860
        %999 = vmatpush.bf16.msra.mxu0 %v858
        %1000 = vmatmul.bf16.gmra.mxu0 %v620
        %v1001 = vpop.f32.mrf.mxu0
        %v1002 = vadd.f32 %v983, %v1001
        %v1003 = vpop.f32.mrf.mxu0
        %v1004 = vadd.f32 %v985, %v1003
        %1005 = vmatmul.bf16.gmra.mxu0 %v624
        %v1006 = vpop.f32.mrf.mxu0
        %v1007 = vadd.f32 %v988, %v1006
        %v1008 = vpop.f32.mrf.mxu0
        %v1009 = vadd.f32 %v990, %v1008
        %1010 = vdwg.mxu0
        %1011 = vmatpush.bf16.msra.mxu0 %v888
        %1012 = vmatpush.bf16.msra.mxu0 %v886
        %1013 = vmatpush.bf16.msra.mxu0 %v884
        %1014 = vmatpush.bf16.msra.mxu0 %v882
        %1015 = vmatpush.bf16.msra.mxu0 %v880
        %1016 = vmatpush.bf16.msra.mxu0 %v878
        %1017 = vmatpush.bf16.msra.mxu0 %v876
        %1018 = vmatpush.bf16.msra.mxu0 %v874
        %1019 = vmatmul.bf16.gmra.mxu0 %v621
        %v1020 = vpop.f32.mrf.mxu0
        %v1021 = vadd.f32 %v1002, %v1020
        %v1022 = vpop.f32.mrf.mxu0
        %v1023 = vadd.f32 %v1004, %v1022
        %1024 = vmatmul.bf16.gmra.mxu0 %v625
        %v1025 = vpop.f32.mrf.mxu0
        %v1026 = vadd.f32 %v1007, %v1025
        %v1027 = vpop.f32.mrf.mxu0
        %v1028 = vadd.f32 %v1009, %v1027
        %1029 = vdwg.mxu0
        %1030 = vmatpush.bf16.msra.mxu0 %v841
        %1031 = vmatpush.bf16.msra.mxu0 %v839
        %1032 = vmatpush.bf16.msra.mxu0 %v837
        %1033 = vmatpush.bf16.msra.mxu0 %v835
        %1034 = vmatpush.bf16.msra.mxu0 %v833
        %1035 = vmatpush.bf16.msra.mxu0 %v831
        %1036 = vmatpush.bf16.msra.mxu0 %v829
        %1037 = vmatpush.bf16.msra.mxu0 %v827
        %1038 = vmatmul.bf16.gmra.mxu0 %v618
        %v1039 = vpop.f32.mrf.mxu0
        %v1040 = vadd.f32 0.0, %v1039
        %v1041 = vpop.f32.mrf.mxu0
        %v1042 = vadd.f32 0.0, %v1041
        %1043 = vmatmul.bf16.gmra.mxu0 %v622
        %v1044 = vpop.f32.mrf.mxu0
        %v1045 = vadd.f32 0.0, %v1044
        %v1046 = vpop.f32.mrf.mxu0
        %v1047 = vadd.f32 0.0, %v1046
        %1048 = vdwg.mxu0
        %1049 = vmatpush.bf16.msra.mxu0 %v857
        %1050 = vmatpush.bf16.msra.mxu0 %v855
        %1051 = vmatpush.bf16.msra.mxu0 %v853
        %1052 = vmatpush.bf16.msra.mxu0 %v851
        %1053 = vmatpush.bf16.msra.mxu0 %v849
        %1054 = vmatpush.bf16.msra.mxu0 %v847
        %1055 = vmatpush.bf16.msra.mxu0 %v845
        %1056 = vmatpush.bf16.msra.mxu0 %v843
        %1057 = vmatmul.bf16.gmra.mxu0 %v619
        %v1058 = vpop.f32.mrf.mxu0
        %v1059 = vadd.f32 %v1040, %v1058
        %v1060 = vpop.f32.mrf.mxu0
        %v1061 = vadd.f32 %v1042, %v1060
        %1062 = vmatmul.bf16.gmra.mxu0 %v623
        %v1063 = vpop.f32.mrf.mxu0
        %v1064 = vadd.f32 %v1045, %v1063
        %v1065 = vpop.f32.mrf.mxu0
        %v1066 = vadd.f32 %v1047, %v1065
        %1067 = vdwg.mxu0
        %1068 = vmatpush.bf16.msra.mxu0 %v873
        %1069 = vmatpush.bf16.msra.mxu0 %v871
        %1070 = vmatpush.bf16.msra.mxu0 %v869
        %1071 = vmatpush.bf16.msra.mxu0 %v867
        %1072 = vmatpush.bf16.msra.mxu0 %v865
        %1073 = vmatpush.bf16.msra.mxu0 %v863
        %1074 = vmatpush.bf16.msra.mxu0 %v861
        %1075 = vmatpush.bf16.msra.mxu0 %v859
        %1076 = vmatmul.bf16.gmra.mxu0 %v620
        %v1077 = vpop.f32.mrf.mxu0
        %v1078 = vadd.f32 %v1059, %v1077
        %v1079 = vpop.f32.mrf.mxu0
        %v1080 = vadd.f32 %v1061, %v1079
        %1081 = vmatmul.bf16.gmra.mxu0 %v624
        %v1082 = vpop.f32.mrf.mxu0
        %v1083 = vadd.f32 %v1064, %v1082
        %v1084 = vpop.f32.mrf.mxu0
        %v1085 = vadd.f32 %v1066, %v1084
        %1086 = vdwg.mxu0
        %1087 = vmatpush.bf16.msra.mxu0 %v889
        %1088 = vmatpush.bf16.msra.mxu0 %v887
        %1089 = vmatpush.bf16.msra.mxu0 %v885
        %1090 = vmatpush.bf16.msra.mxu0 %v883
        %1091 = vmatpush.bf16.msra.mxu0 %v881
        %1092 = vmatpush.bf16.msra.mxu0 %v879
        %1093 = vmatpush.bf16.msra.mxu0 %v877
        %1094 = vmatpush.bf16.msra.mxu0 %v875
        %1095 = vmatmul.bf16.gmra.mxu0 %v621
        %v1096 = vpop.f32.mrf.mxu0
        %v1097 = vadd.f32 %v1078, %v1096
        %v1098 = vpop.f32.mrf.mxu0
        %v1099 = vadd.f32 %v1080, %v1098
        %1100 = vmatmul.bf16.gmra.mxu0 %v625
        %v1101 = vpop.f32.mrf.mxu0
        %v1102 = vadd.f32 %v1083, %v1101
        %v1103 = vpop.f32.mrf.mxu0
        %v1104 = vadd.f32 %v1085, %v1103
        %1105 = vdwg.mxu0
        %v1114 = vunpack.c.l.b16 %v448
        %v1115 = vunpack.c.h.b16 %v448
        %v1116 = vunpack.c.l.b16 %v449
        %v1117 = vunpack.c.h.b16 %v449
        %v1118 = vunpack.c.l.b16 %v450
        %v1119 = vunpack.c.h.b16 %v450
        %v1120 = vunpack.c.l.b16 %v451
        %v1121 = vunpack.c.h.b16 %v451
        %v1122 = vunpack.c.l.b16 %v452
        %v1123 = vunpack.c.h.b16 %v452
        %v1124 = vunpack.c.l.b16 %v453
        %v1125 = vunpack.c.h.b16 %v453
        %v1126 = vunpack.c.l.b16 %v454
        %v1127 = vunpack.c.h.b16 %v454
        %v1128 = vunpack.c.l.b16 %v455
        %v1129 = vunpack.c.h.b16 %v455
        %v1130 = vpack.c.b16 %v1118, %v1114
        %v1131 = vpack.c.b16 %v1119, %v1115
        %v1132 = vpack.c.b16 %v1120, %v1116
        %v1133 = vpack.c.b16 %v1121, %v1117
        %v1134 = vpack.c.b16 %v1126, %v1122
        %v1135 = vpack.c.b16 %v1127, %v1123
        %v1136 = vpack.c.b16 %v1128, %v1124
        %v1137 = vpack.c.b16 %v1129, %v1125
        %v1210 = vunpack.c.l.b16 %v456
        %v1211 = vunpack.c.h.b16 %v456
        %v1212 = vunpack.c.l.b16 %v457
        %v1213 = vunpack.c.h.b16 %v457
        %v1214 = vunpack.c.l.b16 %v458
        %v1215 = vunpack.c.h.b16 %v458
        %v1216 = vunpack.c.l.b16 %v459
        %v1217 = vunpack.c.h.b16 %v459
        %v1218 = vunpack.c.l.b16 %v460
        %v1219 = vunpack.c.h.b16 %v460
        %v1220 = vunpack.c.l.b16 %v461
        %v1221 = vunpack.c.h.b16 %v461
        %v1222 = vunpack.c.l.b16 %v462
        %v1223 = vunpack.c.h.b16 %v462
        %v1224 = vunpack.c.l.b16 %v463
        %v1225 = vunpack.c.h.b16 %v463
        %v1226 = vunpack.c.l.b16 %v464
        %v1227 = vunpack.c.h.b16 %v464
        %v1228 = vunpack.c.l.b16 %v465
        %v1229 = vunpack.c.h.b16 %v465
        %v1230 = vunpack.c.l.b16 %v466
        %v1231 = vunpack.c.h.b16 %v466
        %v1232 = vunpack.c.l.b16 %v467
        %v1233 = vunpack.c.h.b16 %v467
        %v1234 = vunpack.c.l.b16 %v468
        %v1235 = vunpack.c.h.b16 %v468
        %v1236 = vunpack.c.l.b16 %v469
        %v1237 = vunpack.c.h.b16 %v469
        %v1238 = vunpack.c.l.b16 %v470
        %v1239 = vunpack.c.h.b16 %v470
        %v1240 = vunpack.c.l.b16 %v471
        %v1241 = vunpack.c.h.b16 %v471
        %v1242 = vunpack.c.l.b16 %v472
        %v1243 = vunpack.c.h.b16 %v472
        %v1244 = vunpack.c.l.b16 %v473
        %v1245 = vunpack.c.h.b16 %v473
        %v1246 = vunpack.c.l.b16 %v474
        %v1247 = vunpack.c.h.b16 %v474
        %v1248 = vunpack.c.l.b16 %v475
        %v1249 = vunpack.c.h.b16 %v475
        %v1250 = vunpack.c.l.b16 %v476
        %v1251 = vunpack.c.h.b16 %v476
        %v1252 = vunpack.c.l.b16 %v477
        %v1253 = vunpack.c.h.b16 %v477
        %v1254 = vunpack.c.l.b16 %v478
        %v1255 = vunpack.c.h.b16 %v478
        %v1256 = vunpack.c.l.b16 %v479
        %v1257 = vunpack.c.h.b16 %v479
        %v1258 = vunpack.c.l.b16 %v480
        %v1259 = vunpack.c.h.b16 %v480
        %v1260 = vunpack.c.l.b16 %v481
        %v1261 = vunpack.c.h.b16 %v481
        %v1262 = vunpack.c.l.b16 %v482
        %v1263 = vunpack.c.h.b16 %v482
        %v1264 = vunpack.c.l.b16 %v483
        %v1265 = vunpack.c.h.b16 %v483
        %v1266 = vunpack.c.l.b16 %v484
        %v1267 = vunpack.c.h.b16 %v484
        %v1268 = vunpack.c.l.b16 %v485
        %v1269 = vunpack.c.h.b16 %v485
        %v1270 = vunpack.c.l.b16 %v486
        %v1271 = vunpack.c.h.b16 %v486
        %v1272 = vunpack.c.l.b16 %v487
        %v1273 = vunpack.c.h.b16 %v487
        %v1274 = vunpack.c.l.b16 %v488
        %v1275 = vunpack.c.h.b16 %v488
        %v1276 = vunpack.c.l.b16 %v489
        %v1277 = vunpack.c.h.b16 %v489
        %v1278 = vunpack.c.l.b16 %v490
        %v1279 = vunpack.c.h.b16 %v490
        %v1280 = vunpack.c.l.b16 %v491
        %v1281 = vunpack.c.h.b16 %v491
        %v1282 = vunpack.c.l.b16 %v492
        %v1283 = vunpack.c.h.b16 %v492
        %v1284 = vunpack.c.l.b16 %v493
        %v1285 = vunpack.c.h.b16 %v493
        %v1286 = vunpack.c.l.b16 %v494
        %v1287 = vunpack.c.h.b16 %v494
        %v1288 = vunpack.c.l.b16 %v495
        %v1289 = vunpack.c.h.b16 %v495
        %v1290 = vunpack.c.l.b16 %v496
        %v1291 = vunpack.c.h.b16 %v496
        %v1292 = vunpack.c.l.b16 %v497
        %v1293 = vunpack.c.h.b16 %v497
        %v1294 = vunpack.c.l.b16 %v498
        %v1295 = vunpack.c.h.b16 %v498
        %v1296 = vunpack.c.l.b16 %v499
        %v1297 = vunpack.c.h.b16 %v499
        %v1298 = vunpack.c.l.b16 %v500
        %v1299 = vunpack.c.h.b16 %v500
        %v1300 = vunpack.c.l.b16 %v501
        %v1301 = vunpack.c.h.b16 %v501
        %v1302 = vunpack.c.l.b16 %v502
        %v1303 = vunpack.c.h.b16 %v502
        %v1304 = vunpack.c.l.b16 %v503
        %v1305 = vunpack.c.h.b16 %v503
        %v1306 = vunpack.c.l.b16 %v504
        %v1307 = vunpack.c.h.b16 %v504
        %v1308 = vunpack.c.l.b16 %v505
        %v1309 = vunpack.c.h.b16 %v505
        %v1310 = vunpack.c.l.b16 %v506
        %v1311 = vunpack.c.h.b16 %v506
        %v1312 = vunpack.c.l.b16 %v507
        %v1313 = vunpack.c.h.b16 %v507
        %v1314 = vunpack.c.l.b16 %v508
        %v1315 = vunpack.c.h.b16 %v508
        %v1316 = vunpack.c.l.b16 %v509
        %v1317 = vunpack.c.h.b16 %v509
        %v1318 = vunpack.c.l.b16 %v510
        %v1319 = vunpack.c.h.b16 %v510
        %v1320 = vunpack.c.l.b16 %v511
        %v1321 = vunpack.c.h.b16 %v511
        %v1322 = vunpack.c.l.b16 %v512
        %v1323 = vunpack.c.h.b16 %v512
        %v1324 = vunpack.c.l.b16 %v513
        %v1325 = vunpack.c.h.b16 %v513
        %v1326 = vunpack.c.l.b16 %v514
        %v1327 = vunpack.c.h.b16 %v514
        %v1328 = vunpack.c.l.b16 %v515
        %v1329 = vunpack.c.h.b16 %v515
        %v1330 = vunpack.c.l.b16 %v516
        %v1331 = vunpack.c.h.b16 %v516
        %v1332 = vunpack.c.l.b16 %v517
        %v1333 = vunpack.c.h.b16 %v517
        %v1334 = vunpack.c.l.b16 %v518
        %v1335 = vunpack.c.h.b16 %v518
        %v1336 = vunpack.c.l.b16 %v519
        %v1337 = vunpack.c.h.b16 %v519
        %v1338 = vpack.c.b16 %v1212, %v1210
        %v1339 = vpack.c.b16 %v1213, %v1211
        %v1340 = vpack.c.b16 %v1216, %v1214
        %v1341 = vpack.c.b16 %v1217, %v1215
        %v1342 = vpack.c.b16 %v1220, %v1218
        %v1343 = vpack.c.b16 %v1221, %v1219
        %v1344 = vpack.c.b16 %v1224, %v1222
        %v1345 = vpack.c.b16 %v1225, %v1223
        %v1346 = vpack.c.b16 %v1228, %v1226
        %v1347 = vpack.c.b16 %v1229, %v1227
        %v1348 = vpack.c.b16 %v1232, %v1230
        %v1349 = vpack.c.b16 %v1233, %v1231
        %v1350 = vpack.c.b16 %v1236, %v1234
        %v1351 = vpack.c.b16 %v1237, %v1235
        %v1352 = vpack.c.b16 %v1240, %v1238
        %v1353 = vpack.c.b16 %v1241, %v1239
        %v1354 = vpack.c.b16 %v1244, %v1242
        %v1355 = vpack.c.b16 %v1245, %v1243
        %v1356 = vpack.c.b16 %v1248, %v1246
        %v1357 = vpack.c.b16 %v1249, %v1247
        %v1358 = vpack.c.b16 %v1252, %v1250
        %v1359 = vpack.c.b16 %v1253, %v1251
        %v1360 = vpack.c.b16 %v1256, %v1254
        %v1361 = vpack.c.b16 %v1257, %v1255
        %v1362 = vpack.c.b16 %v1260, %v1258
        %v1363 = vpack.c.b16 %v1261, %v1259
        %v1364 = vpack.c.b16 %v1264, %v1262
        %v1365 = vpack.c.b16 %v1265, %v1263
        %v1366 = vpack.c.b16 %v1268, %v1266
        %v1367 = vpack.c.b16 %v1269, %v1267
        %v1368 = vpack.c.b16 %v1272, %v1270
        %v1369 = vpack.c.b16 %v1273, %v1271
        %v1370 = vpack.c.b16 %v1276, %v1274
        %v1371 = vpack.c.b16 %v1277, %v1275
        %v1372 = vpack.c.b16 %v1280, %v1278
        %v1373 = vpack.c.b16 %v1281, %v1279
        %v1374 = vpack.c.b16 %v1284, %v1282
        %v1375 = vpack.c.b16 %v1285, %v1283
        %v1376 = vpack.c.b16 %v1288, %v1286
        %v1377 = vpack.c.b16 %v1289, %v1287
        %v1378 = vpack.c.b16 %v1292, %v1290
        %v1379 = vpack.c.b16 %v1293, %v1291
        %v1380 = vpack.c.b16 %v1296, %v1294
        %v1381 = vpack.c.b16 %v1297, %v1295
        %v1382 = vpack.c.b16 %v1300, %v1298
        %v1383 = vpack.c.b16 %v1301, %v1299
        %v1384 = vpack.c.b16 %v1304, %v1302
        %v1385 = vpack.c.b16 %v1305, %v1303
        %v1386 = vpack.c.b16 %v1308, %v1306
        %v1387 = vpack.c.b16 %v1309, %v1307
        %v1388 = vpack.c.b16 %v1312, %v1310
        %v1389 = vpack.c.b16 %v1313, %v1311
        %v1390 = vpack.c.b16 %v1316, %v1314
        %v1391 = vpack.c.b16 %v1317, %v1315
        %v1392 = vpack.c.b16 %v1320, %v1318
        %v1393 = vpack.c.b16 %v1321, %v1319
        %v1394 = vpack.c.b16 %v1324, %v1322
        %v1395 = vpack.c.b16 %v1325, %v1323
        %v1396 = vpack.c.b16 %v1328, %v1326
        %v1397 = vpack.c.b16 %v1329, %v1327
        %v1398 = vpack.c.b16 %v1332, %v1330
        %v1399 = vpack.c.b16 %v1333, %v1331
        %v1400 = vpack.c.b16 %v1336, %v1334
        %v1401 = vpack.c.b16 %v1337, %v1335
        %1466 = vmatpush.bf16.msra.mxu0 %v1352
        %1467 = vmatpush.bf16.msra.mxu0 %v1350
        %1468 = vmatpush.bf16.msra.mxu0 %v1348
        %1469 = vmatpush.bf16.msra.mxu0 %v1346
        %1470 = vmatpush.bf16.msra.mxu0 %v1344
        %1471 = vmatpush.bf16.msra.mxu0 %v1342
        %1472 = vmatpush.bf16.msra.mxu0 %v1340
        %1473 = vmatpush.bf16.msra.mxu0 %v1338
        %1474 = vmatmul.bf16.gmra.mxu0 %v1130
        %v1475 = vpop.f32.mrf.mxu0
        %v1476 = vadd.f32 %v1021, %v1475
        %v1477 = vpop.f32.mrf.mxu0
        %v1478 = vadd.f32 %v1023, %v1477
        %1479 = vmatmul.bf16.gmra.mxu0 %v1134
        %v1480 = vpop.f32.mrf.mxu0
        %v1481 = vadd.f32 %v1026, %v1480
        %v1482 = vpop.f32.mrf.mxu0
        %v1483 = vadd.f32 %v1028, %v1482
        %1484 = vdwg.mxu0
        %1485 = vmatpush.bf16.msra.mxu0 %v1368
        %1486 = vmatpush.bf16.msra.mxu0 %v1366
        %1487 = vmatpush.bf16.msra.mxu0 %v1364
        %1488 = vmatpush.bf16.msra.mxu0 %v1362
        %1489 = vmatpush.bf16.msra.mxu0 %v1360
        %1490 = vmatpush.bf16.msra.mxu0 %v1358
        %1491 = vmatpush.bf16.msra.mxu0 %v1356
        %1492 = vmatpush.bf16.msra.mxu0 %v1354
        %1493 = vmatmul.bf16.gmra.mxu0 %v1131
        %v1494 = vpop.f32.mrf.mxu0
        %v1495 = vadd.f32 %v1476, %v1494
        %v1496 = vpop.f32.mrf.mxu0
        %v1497 = vadd.f32 %v1478, %v1496
        %1498 = vmatmul.bf16.gmra.mxu0 %v1135
        %v1499 = vpop.f32.mrf.mxu0
        %v1500 = vadd.f32 %v1481, %v1499
        %v1501 = vpop.f32.mrf.mxu0
        %v1502 = vadd.f32 %v1483, %v1501
        %1503 = vdwg.mxu0
        %1504 = vmatpush.bf16.msra.mxu0 %v1384
        %1505 = vmatpush.bf16.msra.mxu0 %v1382
        %1506 = vmatpush.bf16.msra.mxu0 %v1380
        %1507 = vmatpush.bf16.msra.mxu0 %v1378
        %1508 = vmatpush.bf16.msra.mxu0 %v1376
        %1509 = vmatpush.bf16.msra.mxu0 %v1374
        %1510 = vmatpush.bf16.msra.mxu0 %v1372
        %1511 = vmatpush.bf16.msra.mxu0 %v1370
        %1512 = vmatmul.bf16.gmra.mxu0 %v1132
        %v1513 = vpop.f32.mrf.mxu0
        %v1514 = vadd.f32 %v1495, %v1513
        %v1515 = vpop.f32.mrf.mxu0
        %v1516 = vadd.f32 %v1497, %v1515
        %1517 = vmatmul.bf16.gmra.mxu0 %v1136
        %v1518 = vpop.f32.mrf.mxu0
        %v1519 = vadd.f32 %v1500, %v1518
        %v1520 = vpop.f32.mrf.mxu0
        %v1521 = vadd.f32 %v1502, %v1520
        %1522 = vdwg.mxu0
        %1523 = vmatpush.bf16.msra.mxu0 %v1400
        %1524 = vmatpush.bf16.msra.mxu0 %v1398
        %1525 = vmatpush.bf16.msra.mxu0 %v1396
        %1526 = vmatpush.bf16.msra.mxu0 %v1394
        %1527 = vmatpush.bf16.msra.mxu0 %v1392
        %1528 = vmatpush.bf16.msra.mxu0 %v1390
        %1529 = vmatpush.bf16.msra.mxu0 %v1388
        %1530 = vmatpush.bf16.msra.mxu0 %v1386
        %1531 = vmatmul.bf16.gmra.mxu0 %v1133
        %v1532 = vpop.f32.mrf.mxu0
        %v1533 = vadd.f32 %v1514, %v1532
        %v1534 = vpop.f32.mrf.mxu0
        %v1535 = vadd.f32 %v1516, %v1534
        %1536 = vmatmul.bf16.gmra.mxu0 %v1137
        %v1537 = vpop.f32.mrf.mxu0
        %v1538 = vadd.f32 %v1519, %v1537
        %v1539 = vpop.f32.mrf.mxu0
        %v1540 = vadd.f32 %v1521, %v1539
        %1541 = vdwg.mxu0
        %1542 = vmatpush.bf16.msra.mxu0 %v1353
        %1543 = vmatpush.bf16.msra.mxu0 %v1351
        %1544 = vmatpush.bf16.msra.mxu0 %v1349
        %1545 = vmatpush.bf16.msra.mxu0 %v1347
        %1546 = vmatpush.bf16.msra.mxu0 %v1345
        %1547 = vmatpush.bf16.msra.mxu0 %v1343
        %1548 = vmatpush.bf16.msra.mxu0 %v1341
        %1549 = vmatpush.bf16.msra.mxu0 %v1339
        %1550 = vmatmul.bf16.gmra.mxu0 %v1130
        %v1551 = vpop.f32.mrf.mxu0
        %v1552 = vadd.f32 %v1097, %v1551
        %v1553 = vpop.f32.mrf.mxu0
        %v1554 = vadd.f32 %v1099, %v1553
        %1555 = vmatmul.bf16.gmra.mxu0 %v1134
        %v1556 = vpop.f32.mrf.mxu0
        %v1557 = vadd.f32 %v1102, %v1556
        %v1558 = vpop.f32.mrf.mxu0
        %v1559 = vadd.f32 %v1104, %v1558
        %1560 = vdwg.mxu0
        %1561 = vmatpush.bf16.msra.mxu0 %v1369
        %1562 = vmatpush.bf16.msra.mxu0 %v1367
        %1563 = vmatpush.bf16.msra.mxu0 %v1365
        %1564 = vmatpush.bf16.msra.mxu0 %v1363
        %1565 = vmatpush.bf16.msra.mxu0 %v1361
        %1566 = vmatpush.bf16.msra.mxu0 %v1359
        %1567 = vmatpush.bf16.msra.mxu0 %v1357
        %1568 = vmatpush.bf16.msra.mxu0 %v1355
        %1569 = vmatmul.bf16.gmra.mxu0 %v1131
        %v1570 = vpop.f32.mrf.mxu0
        %v1571 = vadd.f32 %v1552, %v1570
        %v1572 = vpop.f32.mrf.mxu0
        %v1573 = vadd.f32 %v1554, %v1572
        %1574 = vmatmul.bf16.gmra.mxu0 %v1135
        %v1575 = vpop.f32.mrf.mxu0
        %v1576 = vadd.f32 %v1557, %v1575
        %v1577 = vpop.f32.mrf.mxu0
        %v1578 = vadd.f32 %v1559, %v1577
        %1579 = vdwg.mxu0
        %1580 = vmatpush.bf16.msra.mxu0 %v1385
        %1581 = vmatpush.bf16.msra.mxu0 %v1383
        %1582 = vmatpush.bf16.msra.mxu0 %v1381
        %1583 = vmatpush.bf16.msra.mxu0 %v1379
        %1584 = vmatpush.bf16.msra.mxu0 %v1377
        %1585 = vmatpush.bf16.msra.mxu0 %v1375
        %1586 = vmatpush.bf16.msra.mxu0 %v1373
        %1587 = vmatpush.bf16.msra.mxu0 %v1371
        %1588 = vmatmul.bf16.gmra.mxu0 %v1132
        %v1589 = vpop.f32.mrf.mxu0
        %v1590 = vadd.f32 %v1571, %v1589
        %v1591 = vpop.f32.mrf.mxu0
        %v1592 = vadd.f32 %v1573, %v1591
        %1593 = vmatmul.bf16.gmra.mxu0 %v1136
        %v1594 = vpop.f32.mrf.mxu0
        %v1595 = vadd.f32 %v1576, %v1594
        %v1596 = vpop.f32.mrf.mxu0
        %v1597 = vadd.f32 %v1578, %v1596
        %1598 = vdwg.mxu0
        %1599 = vmatpush.bf16.msra.mxu0 %v1401
        %1600 = vmatpush.bf16.msra.mxu0 %v1399
        %1601 = vmatpush.bf16.msra.mxu0 %v1397
        %1602 = vmatpush.bf16.msra.mxu0 %v1395
        %1603 = vmatpush.bf16.msra.mxu0 %v1393
        %1604 = vmatpush.bf16.msra.mxu0 %v1391
        %1605 = vmatpush.bf16.msra.mxu0 %v1389
        %1606 = vmatpush.bf16.msra.mxu0 %v1387
        %1607 = vmatmul.bf16.gmra.mxu0 %v1133
        %v1608 = vpop.f32.mrf.mxu0
        %v1609 = vadd.f32 %v1590, %v1608
        %v1610 = vpop.f32.mrf.mxu0
        %v1611 = vadd.f32 %v1592, %v1610
        %1612 = vmatmul.bf16.gmra.mxu0 %v1137
        %v1613 = vpop.f32.mrf.mxu0
        %v1614 = vadd.f32 %v1595, %v1613
        %v1615 = vpop.f32.mrf.mxu0
        %v1616 = vadd.f32 %v1597, %v1615
        %1617 = vdwg.mxu0
        %s1618 = scalar_lea.vmem %s366, 128 [#allocation2]
        %v1619 = vld [vmem:[%s1618] sm:$0xff]
        %v1620 = vld [vmem:[%s1618 + $0x8] sm:$0xff]
        %v1621 = vld [vmem:[%s1618 + $0x10] sm:$0xff]
        %v1622 = vld [vmem:[%s1618 + $0x18] sm:$0xff]
        %v1623 = vld [vmem:[%s1618 + $0x20] sm:$0xff]
        %v1624 = vld [vmem:[%s1618 + $0x28] sm:$0xff]
        %v1625 = vld [vmem:[%s1618 + $0x30] sm:$0xff]
        %v1626 = vld [vmem:[%s1618 + $0x38] sm:$0xff]
        %s1627 = scalar_lea.vmem %s418, 1024
        %v1628 = vld [vmem:[%s1627] sm:$0xff]
        %v1629 = vld [vmem:[%s1627 + $0x8] sm:$0xff]
        %v1630 = vld [vmem:[%s1627 + $0x10] sm:$0xff]
        %v1631 = vld [vmem:[%s1627 + $0x18] sm:$0xff]
        %v1632 = vld [vmem:[%s1627 + $0x20] sm:$0xff]
        %v1633 = vld [vmem:[%s1627 + $0x28] sm:$0xff]
        %v1634 = vld [vmem:[%s1627 + $0x30] sm:$0xff]
        %v1635 = vld [vmem:[%s1627 + $0x38] sm:$0xff]
        %v1636 = vld [vmem:[%s1627 + $0x40] sm:$0xff]
        %v1637 = vld [vmem:[%s1627 + $0x48] sm:$0xff]
        %v1638 = vld [vmem:[%s1627 + $0x50] sm:$0xff]
        %v1639 = vld [vmem:[%s1627 + $0x58] sm:$0xff]
        %v1640 = vld [vmem:[%s1627 + $0x60] sm:$0xff]
        %v1641 = vld [vmem:[%s1627 + $0x68] sm:$0xff]
        %v1642 = vld [vmem:[%s1627 + $0x70] sm:$0xff]
        %v1643 = vld [vmem:[%s1627 + $0x78] sm:$0xff]
        %v1644 = vld [vmem:[%s1627 + $0x80] sm:$0xff]
        %v1645 = vld [vmem:[%s1627 + $0x88] sm:$0xff]
        %v1646 = vld [vmem:[%s1627 + $0x90] sm:$0xff]
        %v1647 = vld [vmem:[%s1627 + $0x98] sm:$0xff]
        %v1648 = vld [vmem:[%s1627 + $0xa0] sm:$0xff]
        %v1649 = vld [vmem:[%s1627 + $0xa8] sm:$0xff]
        %v1650 = vld [vmem:[%s1627 + $0xb0] sm:$0xff]
        %v1651 = vld [vmem:[%s1627 + $0xb8] sm:$0xff]
        %v1652 = vld [vmem:[%s1627 + $0xc0] sm:$0xff]
        %v1653 = vld [vmem:[%s1627 + $0xc8] sm:$0xff]
        %v1654 = vld [vmem:[%s1627 + $0xd0] sm:$0xff]
        %v1655 = vld [vmem:[%s1627 + $0xd8] sm:$0xff]
        %v1656 = vld [vmem:[%s1627 + $0xe0] sm:$0xff]
        %v1657 = vld [vmem:[%s1627 + $0xe8] sm:$0xff]
        %v1658 = vld [vmem:[%s1627 + $0xf0] sm:$0xff]
        %v1659 = vld [vmem:[%s1627 + $0xf8] sm:$0xff]
        %v1660 = vld [vmem:[%s1627 + $0x100] sm:$0xff]
        %v1661 = vld [vmem:[%s1627 + $0x108] sm:$0xff]
        %v1662 = vld [vmem:[%s1627 + $0x110] sm:$0xff]
        %v1663 = vld [vmem:[%s1627 + $0x118] sm:$0xff]
        %v1664 = vld [vmem:[%s1627 + $0x120] sm:$0xff]
        %v1665 = vld [vmem:[%s1627 + $0x128] sm:$0xff]
        %v1666 = vld [vmem:[%s1627 + $0x130] sm:$0xff]
        %v1667 = vld [vmem:[%s1627 + $0x138] sm:$0xff]
        %v1668 = vld [vmem:[%s1627 + $0x140] sm:$0xff]
        %v1669 = vld [vmem:[%s1627 + $0x148] sm:$0xff]
        %v1670 = vld [vmem:[%s1627 + $0x150] sm:$0xff]
        %v1671 = vld [vmem:[%s1627 + $0x158] sm:$0xff]
        %v1672 = vld [vmem:[%s1627 + $0x160] sm:$0xff]
        %v1673 = vld [vmem:[%s1627 + $0x168] sm:$0xff]
        %v1674 = vld [vmem:[%s1627 + $0x170] sm:$0xff]
        %v1675 = vld [vmem:[%s1627 + $0x178] sm:$0xff]
        %v1676 = vld [vmem:[%s1627 + $0x180] sm:$0xff]
        %v1677 = vld [vmem:[%s1627 + $0x188] sm:$0xff]
        %v1678 = vld [vmem:[%s1627 + $0x190] sm:$0xff]
        %v1679 = vld [vmem:[%s1627 + $0x198] sm:$0xff]
        %v1680 = vld [vmem:[%s1627 + $0x1a0] sm:$0xff]
        %v1681 = vld [vmem:[%s1627 + $0x1a8] sm:$0xff]
        %v1682 = vld [vmem:[%s1627 + $0x1b0] sm:$0xff]
        %v1683 = vld [vmem:[%s1627 + $0x1b8] sm:$0xff]
        %v1684 = vld [vmem:[%s1627 + $0x1c0] sm:$0xff]
        %v1685 = vld [vmem:[%s1627 + $0x1c8] sm:$0xff]
        %v1686 = vld [vmem:[%s1627 + $0x1d0] sm:$0xff]
        %v1687 = vld [vmem:[%s1627 + $0x1d8] sm:$0xff]
        %v1688 = vld [vmem:[%s1627 + $0x1e0] sm:$0xff]
        %v1689 = vld [vmem:[%s1627 + $0x1e8] sm:$0xff]
        %v1690 = vld [vmem:[%s1627 + $0x1f0] sm:$0xff]
        %v1691 = vld [vmem:[%s1627 + $0x1f8] sm:$0xff]
        %v1700 = vunpack.c.l.b16 %v1619
        %v1701 = vunpack.c.h.b16 %v1619
        %v1702 = vunpack.c.l.b16 %v1620
        %v1703 = vunpack.c.h.b16 %v1620
        %v1704 = vunpack.c.l.b16 %v1621
        %v1705 = vunpack.c.h.b16 %v1621
        %v1706 = vunpack.c.l.b16 %v1622
        %v1707 = vunpack.c.h.b16 %v1622
        %v1708 = vunpack.c.l.b16 %v1623
        %v1709 = vunpack.c.h.b16 %v1623
        %v1710 = vunpack.c.l.b16 %v1624
        %v1711 = vunpack.c.h.b16 %v1624
        %v1712 = vunpack.c.l.b16 %v1625
        %v1713 = vunpack.c.h.b16 %v1625
        %v1714 = vunpack.c.l.b16 %v1626
        %v1715 = vunpack.c.h.b16 %v1626
        %v1716 = vpack.c.b16 %v1704, %v1700
        %v1717 = vpack.c.b16 %v1705, %v1701
        %v1718 = vpack.c.b16 %v1706, %v1702
        %v1719 = vpack.c.b16 %v1707, %v1703
        %v1720 = vpack.c.b16 %v1712, %v1708
        %v1721 = vpack.c.b16 %v1713, %v1709
        %v1722 = vpack.c.b16 %v1714, %v1710
        %v1723 = vpack.c.b16 %v1715, %v1711
        %v1796 = vunpack.c.l.b16 %v1628
        %v1797 = vunpack.c.h.b16 %v1628
        %v1798 = vunpack.c.l.b16 %v1629
        %v1799 = vunpack.c.h.b16 %v1629
        %v1800 = vunpack.c.l.b16 %v1630
        %v1801 = vunpack.c.h.b16 %v1630
        %v1802 = vunpack.c.l.b16 %v1631
        %v1803 = vunpack.c.h.b16 %v1631
        %v1804 = vunpack.c.l.b16 %v1632
        %v1805 = vunpack.c.h.b16 %v1632
        %v1806 = vunpack.c.l.b16 %v1633
        %v1807 = vunpack.c.h.b16 %v1633
        %v1808 = vunpack.c.l.b16 %v1634
        %v1809 = vunpack.c.h.b16 %v1634
        %v1810 = vunpack.c.l.b16 %v1635
        %v1811 = vunpack.c.h.b16 %v1635
        %v1812 = vunpack.c.l.b16 %v1636
        %v1813 = vunpack.c.h.b16 %v1636
        %v1814 = vunpack.c.l.b16 %v1637
        %v1815 = vunpack.c.h.b16 %v1637
        %v1816 = vunpack.c.l.b16 %v1638
        %v1817 = vunpack.c.h.b16 %v1638
        %v1818 = vunpack.c.l.b16 %v1639
        %v1819 = vunpack.c.h.b16 %v1639
        %v1820 = vunpack.c.l.b16 %v1640
        %v1821 = vunpack.c.h.b16 %v1640
        %v1822 = vunpack.c.l.b16 %v1641
        %v1823 = vunpack.c.h.b16 %v1641
        %v1824 = vunpack.c.l.b16 %v1642
        %v1825 = vunpack.c.h.b16 %v1642
        %v1826 = vunpack.c.l.b16 %v1643
        %v1827 = vunpack.c.h.b16 %v1643
        %v1828 = vunpack.c.l.b16 %v1644
        %v1829 = vunpack.c.h.b16 %v1644
        %v1830 = vunpack.c.l.b16 %v1645
        %v1831 = vunpack.c.h.b16 %v1645
        %v1832 = vunpack.c.l.b16 %v1646
        %v1833 = vunpack.c.h.b16 %v1646
        %v1834 = vunpack.c.l.b16 %v1647
        %v1835 = vunpack.c.h.b16 %v1647
        %v1836 = vunpack.c.l.b16 %v1648
        %v1837 = vunpack.c.h.b16 %v1648
        %v1838 = vunpack.c.l.b16 %v1649
        %v1839 = vunpack.c.h.b16 %v1649
        %v1840 = vunpack.c.l.b16 %v1650
        %v1841 = vunpack.c.h.b16 %v1650
        %v1842 = vunpack.c.l.b16 %v1651
        %v1843 = vunpack.c.h.b16 %v1651
        %v1844 = vunpack.c.l.b16 %v1652
        %v1845 = vunpack.c.h.b16 %v1652
        %v1846 = vunpack.c.l.b16 %v1653
        %v1847 = vunpack.c.h.b16 %v1653
        %v1848 = vunpack.c.l.b16 %v1654
        %v1849 = vunpack.c.h.b16 %v1654
        %v1850 = vunpack.c.l.b16 %v1655
        %v1851 = vunpack.c.h.b16 %v1655
        %v1852 = vunpack.c.l.b16 %v1656
        %v1853 = vunpack.c.h.b16 %v1656
        %v1854 = vunpack.c.l.b16 %v1657
        %v1855 = vunpack.c.h.b16 %v1657
        %v1856 = vunpack.c.l.b16 %v1658
        %v1857 = vunpack.c.h.b16 %v1658
        %v1858 = vunpack.c.l.b16 %v1659
        %v1859 = vunpack.c.h.b16 %v1659
        %v1860 = vunpack.c.l.b16 %v1660
        %v1861 = vunpack.c.h.b16 %v1660
        %v1862 = vunpack.c.l.b16 %v1661
        %v1863 = vunpack.c.h.b16 %v1661
        %v1864 = vunpack.c.l.b16 %v1662
        %v1865 = vunpack.c.h.b16 %v1662
        %v1866 = vunpack.c.l.b16 %v1663
        %v1867 = vunpack.c.h.b16 %v1663
        %v1868 = vunpack.c.l.b16 %v1664
        %v1869 = vunpack.c.h.b16 %v1664
        %v1870 = vunpack.c.l.b16 %v1665
        %v1871 = vunpack.c.h.b16 %v1665
        %v1872 = vunpack.c.l.b16 %v1666
        %v1873 = vunpack.c.h.b16 %v1666
        %v1874 = vunpack.c.l.b16 %v1667
        %v1875 = vunpack.c.h.b16 %v1667
        %v1876 = vunpack.c.l.b16 %v1668
        %v1877 = vunpack.c.h.b16 %v1668
        %v1878 = vunpack.c.l.b16 %v1669
        %v1879 = vunpack.c.h.b16 %v1669
        %v1880 = vunpack.c.l.b16 %v1670
        %v1881 = vunpack.c.h.b16 %v1670
        %v1882 = vunpack.c.l.b16 %v1671
        %v1883 = vunpack.c.h.b16 %v1671
        %v1884 = vunpack.c.l.b16 %v1672
        %v1885 = vunpack.c.h.b16 %v1672
        %v1886 = vunpack.c.l.b16 %v1673
        %v1887 = vunpack.c.h.b16 %v1673
        %v1888 = vunpack.c.l.b16 %v1674
        %v1889 = vunpack.c.h.b16 %v1674
        %v1890 = vunpack.c.l.b16 %v1675
        %v1891 = vunpack.c.h.b16 %v1675
        %v1892 = vunpack.c.l.b16 %v1676
        %v1893 = vunpack.c.h.b16 %v1676
        %v1894 = vunpack.c.l.b16 %v1677
        %v1895 = vunpack.c.h.b16 %v1677
        %v1896 = vunpack.c.l.b16 %v1678
        %v1897 = vunpack.c.h.b16 %v1678
        %v1898 = vunpack.c.l.b16 %v1679
        %v1899 = vunpack.c.h.b16 %v1679
        %v1900 = vunpack.c.l.b16 %v1680
        %v1901 = vunpack.c.h.b16 %v1680
        %v1902 = vunpack.c.l.b16 %v1681
        %v1903 = vunpack.c.h.b16 %v1681
        %v1904 = vunpack.c.l.b16 %v1682
        %v1905 = vunpack.c.h.b16 %v1682
        %v1906 = vunpack.c.l.b16 %v1683
        %v1907 = vunpack.c.h.b16 %v1683
        %v1908 = vunpack.c.l.b16 %v1684
        %v1909 = vunpack.c.h.b16 %v1684
        %v1910 = vunpack.c.l.b16 %v1685
        %v1911 = vunpack.c.h.b16 %v1685
        %v1912 = vunpack.c.l.b16 %v1686
        %v1913 = vunpack.c.h.b16 %v1686
        %v1914 = vunpack.c.l.b16 %v1687
        %v1915 = vunpack.c.h.b16 %v1687
        %v1916 = vunpack.c.l.b16 %v1688
        %v1917 = vunpack.c.h.b16 %v1688
        %v1918 = vunpack.c.l.b16 %v1689
        %v1919 = vunpack.c.h.b16 %v1689
        %v1920 = vunpack.c.l.b16 %v1690
        %v1921 = vunpack.c.h.b16 %v1690
        %v1922 = vunpack.c.l.b16 %v1691
        %v1923 = vunpack.c.h.b16 %v1691
        %v1924 = vpack.c.b16 %v1798, %v1796
        %v1925 = vpack.c.b16 %v1799, %v1797
        %v1926 = vpack.c.b16 %v1802, %v1800
        %v1927 = vpack.c.b16 %v1803, %v1801
        %v1928 = vpack.c.b16 %v1806, %v1804
        %v1929 = vpack.c.b16 %v1807, %v1805
        %v1930 = vpack.c.b16 %v1810, %v1808
        %v1931 = vpack.c.b16 %v1811, %v1809
        %v1932 = vpack.c.b16 %v1814, %v1812
        %v1933 = vpack.c.b16 %v1815, %v1813
        %v1934 = vpack.c.b16 %v1818, %v1816
        %v1935 = vpack.c.b16 %v1819, %v1817
        %v1936 = vpack.c.b16 %v1822, %v1820
        %v1937 = vpack.c.b16 %v1823, %v1821
        %v1938 = vpack.c.b16 %v1826, %v1824
        %v1939 = vpack.c.b16 %v1827, %v1825
        %v1940 = vpack.c.b16 %v1830, %v1828
        %v1941 = vpack.c.b16 %v1831, %v1829
        %v1942 = vpack.c.b16 %v1834, %v1832
        %v1943 = vpack.c.b16 %v1835, %v1833
        %v1944 = vpack.c.b16 %v1838, %v1836
        %v1945 = vpack.c.b16 %v1839, %v1837
        %v1946 = vpack.c.b16 %v1842, %v1840
        %v1947 = vpack.c.b16 %v1843, %v1841
        %v1948 = vpack.c.b16 %v1846, %v1844
        %v1949 = vpack.c.b16 %v1847, %v1845
        %v1950 = vpack.c.b16 %v1850, %v1848
        %v1951 = vpack.c.b16 %v1851, %v1849
        %v1952 = vpack.c.b16 %v1854, %v1852
        %v1953 = vpack.c.b16 %v1855, %v1853
        %v1954 = vpack.c.b16 %v1858, %v1856
        %v1955 = vpack.c.b16 %v1859, %v1857
        %v1956 = vpack.c.b16 %v1862, %v1860
        %v1957 = vpack.c.b16 %v1863, %v1861
        %v1958 = vpack.c.b16 %v1866, %v1864
        %v1959 = vpack.c.b16 %v1867, %v1865
        %v1960 = vpack.c.b16 %v1870, %v1868
        %v1961 = vpack.c.b16 %v1871, %v1869
        %v1962 = vpack.c.b16 %v1874, %v1872
        %v1963 = vpack.c.b16 %v1875, %v1873
        %v1964 = vpack.c.b16 %v1878, %v1876
        %v1965 = vpack.c.b16 %v1879, %v1877
        %v1966 = vpack.c.b16 %v1882, %v1880
        %v1967 = vpack.c.b16 %v1883, %v1881
        %v1968 = vpack.c.b16 %v1886, %v1884
        %v1969 = vpack.c.b16 %v1887, %v1885
        %v1970 = vpack.c.b16 %v1890, %v1888
        %v1971 = vpack.c.b16 %v1891, %v1889
        %v1972 = vpack.c.b16 %v1894, %v1892
        %v1973 = vpack.c.b16 %v1895, %v1893
        %v1974 = vpack.c.b16 %v1898, %v1896
        %v1975 = vpack.c.b16 %v1899, %v1897
        %v1976 = vpack.c.b16 %v1902, %v1900
        %v1977 = vpack.c.b16 %v1903, %v1901
        %v1978 = vpack.c.b16 %v1906, %v1904
        %v1979 = vpack.c.b16 %v1907, %v1905
        %v1980 = vpack.c.b16 %v1910, %v1908
        %v1981 = vpack.c.b16 %v1911, %v1909
        %v1982 = vpack.c.b16 %v1914, %v1912
        %v1983 = vpack.c.b16 %v1915, %v1913
        %v1984 = vpack.c.b16 %v1918, %v1916
        %v1985 = vpack.c.b16 %v1919, %v1917
        %v1986 = vpack.c.b16 %v1922, %v1920
        %v1987 = vpack.c.b16 %v1923, %v1921
        %2052 = vmatpush.bf16.msra.mxu0 %v1938
        %2053 = vmatpush.bf16.msra.mxu0 %v1936
        %2054 = vmatpush.bf16.msra.mxu0 %v1934
        %2055 = vmatpush.bf16.msra.mxu0 %v1932
        %2056 = vmatpush.bf16.msra.mxu0 %v1930
        %2057 = vmatpush.bf16.msra.mxu0 %v1928
        %2058 = vmatpush.bf16.msra.mxu0 %v1926
        %2059 = vmatpush.bf16.msra.mxu0 %v1924
        %2060 = vmatmul.bf16.gmra.mxu0 %v1716
        %v2061 = vpop.f32.mrf.mxu0
        %v2062 = vadd.f32 0.0, %v2061
        %v2063 = vpop.f32.mrf.mxu0
        %v2064 = vadd.f32 0.0, %v2063
        %2065 = vmatmul.bf16.gmra.mxu0 %v1720
        %v2066 = vpop.f32.mrf.mxu0
        %v2067 = vadd.f32 0.0, %v2066
        %v2068 = vpop.f32.mrf.mxu0
        %v2069 = vadd.f32 0.0, %v2068
        %2070 = vdwg.mxu0
        %2071 = vmatpush.bf16.msra.mxu0 %v1954
        %2072 = vmatpush.bf16.msra.mxu0 %v1952
        %2073 = vmatpush.bf16.msra.mxu0 %v1950
        %2074 = vmatpush.bf16.msra.mxu0 %v1948
        %2075 = vmatpush.bf16.msra.mxu0 %v1946
        %2076 = vmatpush.bf16.msra.mxu0 %v1944
        %2077 = vmatpush.bf16.msra.mxu0 %v1942
        %2078 = vmatpush.bf16.msra.mxu0 %v1940
        %2079 = vmatmul.bf16.gmra.mxu0 %v1717
        %v2080 = vpop.f32.mrf.mxu0
        %v2081 = vadd.f32 %v2062, %v2080
        %v2082 = vpop.f32.mrf.mxu0
        %v2083 = vadd.f32 %v2064, %v2082
        %2084 = vmatmul.bf16.gmra.mxu0 %v1721
        %v2085 = vpop.f32.mrf.mxu0
        %v2086 = vadd.f32 %v2067, %v2085
        %v2087 = vpop.f32.mrf.mxu0
        %v2088 = vadd.f32 %v2069, %v2087
        %2089 = vdwg.mxu0
        %2090 = vmatpush.bf16.msra.mxu0 %v1970
        %2091 = vmatpush.bf16.msra.mxu0 %v1968
        %2092 = vmatpush.bf16.msra.mxu0 %v1966
        %2093 = vmatpush.bf16.msra.mxu0 %v1964
        %2094 = vmatpush.bf16.msra.mxu0 %v1962
        %2095 = vmatpush.bf16.msra.mxu0 %v1960
        %2096 = vmatpush.bf16.msra.mxu0 %v1958
        %2097 = vmatpush.bf16.msra.mxu0 %v1956
        %2098 = vmatmul.bf16.gmra.mxu0 %v1718
        %v2099 = vpop.f32.mrf.mxu0
        %v2100 = vadd.f32 %v2081, %v2099
        %v2101 = vpop.f32.mrf.mxu0
        %v2102 = vadd.f32 %v2083, %v2101
        %2103 = vmatmul.bf16.gmra.mxu0 %v1722
        %v2104 = vpop.f32.mrf.mxu0
        %v2105 = vadd.f32 %v2086, %v2104
        %v2106 = vpop.f32.mrf.mxu0
        %v2107 = vadd.f32 %v2088, %v2106
        %2108 = vdwg.mxu0
        %2109 = vmatpush.bf16.msra.mxu0 %v1986
        %2110 = vmatpush.bf16.msra.mxu0 %v1984
        %2111 = vmatpush.bf16.msra.mxu0 %v1982
        %2112 = vmatpush.bf16.msra.mxu0 %v1980
        %2113 = vmatpush.bf16.msra.mxu0 %v1978
        %2114 = vmatpush.bf16.msra.mxu0 %v1976
        %2115 = vmatpush.bf16.msra.mxu0 %v1974
        %2116 = vmatpush.bf16.msra.mxu0 %v1972
        %2117 = vmatmul.bf16.gmra.mxu0 %v1719
        %v2118 = vpop.f32.mrf.mxu0
        %v2119 = vadd.f32 %v2100, %v2118
        %v2120 = vpop.f32.mrf.mxu0
        %v2121 = vadd.f32 %v2102, %v2120
        %2122 = vmatmul.bf16.gmra.mxu0 %v1723
        %v2123 = vpop.f32.mrf.mxu0
        %v2124 = vadd.f32 %v2105, %v2123
        %v2125 = vpop.f32.mrf.mxu0
        %v2126 = vadd.f32 %v2107, %v2125
        %2127 = vdwg.mxu0
        %2128 = vmatpush.bf16.msra.mxu0 %v1939
        %2129 = vmatpush.bf16.msra.mxu0 %v1937
        %2130 = vmatpush.bf16.msra.mxu0 %v1935
        %2131 = vmatpush.bf16.msra.mxu0 %v1933
        %2132 = vmatpush.bf16.msra.mxu0 %v1931
        %2133 = vmatpush.bf16.msra.mxu0 %v1929
        %2134 = vmatpush.bf16.msra.mxu0 %v1927
        %2135 = vmatpush.bf16.msra.mxu0 %v1925
        %2136 = vmatmul.bf16.gmra.mxu0 %v1716
        %v2137 = vpop.f32.mrf.mxu0
        %v2138 = vadd.f32 0.0, %v2137
        %v2139 = vpop.f32.mrf.mxu0
        %v2140 = vadd.f32 0.0, %v2139
        %2141 = vmatmul.bf16.gmra.mxu0 %v1720
        %v2142 = vpop.f32.mrf.mxu0
        %v2143 = vadd.f32 0.0, %v2142
        %v2144 = vpop.f32.mrf.mxu0
        %v2145 = vadd.f32 0.0, %v2144
        %2146 = vdwg.mxu0
        %2147 = vmatpush.bf16.msra.mxu0 %v1955
        %2148 = vmatpush.bf16.msra.mxu0 %v1953
        %2149 = vmatpush.bf16.msra.mxu0 %v1951
        %2150 = vmatpush.bf16.msra.mxu0 %v1949
        %2151 = vmatpush.bf16.msra.mxu0 %v1947
        %2152 = vmatpush.bf16.msra.mxu0 %v1945
        %2153 = vmatpush.bf16.msra.mxu0 %v1943
        %2154 = vmatpush.bf16.msra.mxu0 %v1941
        %2155 = vmatmul.bf16.gmra.mxu0 %v1717
        %v2156 = vpop.f32.mrf.mxu0
        %v2157 = vadd.f32 %v2138, %v2156
        %v2158 = vpop.f32.mrf.mxu0
        %v2159 = vadd.f32 %v2140, %v2158
        %2160 = vmatmul.bf16.gmra.mxu0 %v1721
        %v2161 = vpop.f32.mrf.mxu0
        %v2162 = vadd.f32 %v2143, %v2161
        %v2163 = vpop.f32.mrf.mxu0
        %v2164 = vadd.f32 %v2145, %v2163
        %2165 = vdwg.mxu0
        %2166 = vmatpush.bf16.msra.mxu0 %v1971
        %2167 = vmatpush.bf16.msra.mxu0 %v1969
        %2168 = vmatpush.bf16.msra.mxu0 %v1967
        %2169 = vmatpush.bf16.msra.mxu0 %v1965
        %2170 = vmatpush.bf16.msra.mxu0 %v1963
        %2171 = vmatpush.bf16.msra.mxu0 %v1961
        %2172 = vmatpush.bf16.msra.mxu0 %v1959
        %2173 = vmatpush.bf16.msra.mxu0 %v1957
        %2174 = vmatmul.bf16.gmra.mxu0 %v1718
        %v2175 = vpop.f32.mrf.mxu0
        %v2176 = vadd.f32 %v2157, %v2175
        %v2177 = vpop.f32.mrf.mxu0
        %v2178 = vadd.f32 %v2159, %v2177
        %2179 = vmatmul.bf16.gmra.mxu0 %v1722
        %v2180 = vpop.f32.mrf.mxu0
        %v2181 = vadd.f32 %v2162, %v2180
        %v2182 = vpop.f32.mrf.mxu0
        %v2183 = vadd.f32 %v2164, %v2182
        %2184 = vdwg.mxu0
        %2185 = vmatpush.bf16.msra.mxu0 %v1987
        %2186 = vmatpush.bf16.msra.mxu0 %v1985
        %2187 = vmatpush.bf16.msra.mxu0 %v1983
        %2188 = vmatpush.bf16.msra.mxu0 %v1981
        %2189 = vmatpush.bf16.msra.mxu0 %v1979
        %2190 = vmatpush.bf16.msra.mxu0 %v1977
        %2191 = vmatpush.bf16.msra.mxu0 %v1975
        %2192 = vmatpush.bf16.msra.mxu0 %v1973
        %2193 = vmatmul.bf16.gmra.mxu0 %v1719
        %v2194 = vpop.f32.mrf.mxu0
        %v2195 = vadd.f32 %v2176, %v2194
        %v2196 = vpop.f32.mrf.mxu0
        %v2197 = vadd.f32 %v2178, %v2196
        %2198 = vmatmul.bf16.gmra.mxu0 %v1723
        %v2199 = vpop.f32.mrf.mxu0
        %v2200 = vadd.f32 %v2181, %v2199
        %v2201 = vpop.f32.mrf.mxu0
        %v2202 = vadd.f32 %v2183, %v2201
        %2203 = vdwg.mxu0
        %v2204 = vadd.f32 %v1533, %v2119
        %v2205 = vadd.f32 %v1609, %v2195
        %v2206 = vadd.f32 %v1535, %v2121
        %v2207 = vadd.f32 %v1611, %v2197
        %v2208 = vadd.f32 %v1538, %v2124
        %v2209 = vadd.f32 %v1614, %v2200
        %v2210 = vadd.f32 %v1540, %v2126
        %v2211 = vadd.f32 %v1616, %v2202
        %s2212 = scalar_lea.vmem %s366, 192 [#allocation2]
        %v2213 = vld [vmem:[%s2212] sm:$0xff]
        %v2214 = vld [vmem:[%s2212 + $0x8] sm:$0xff]
        %v2215 = vld [vmem:[%s2212 + $0x10] sm:$0xff]
        %v2216 = vld [vmem:[%s2212 + $0x18] sm:$0xff]
        %v2217 = vld [vmem:[%s2212 + $0x20] sm:$0xff]
        %v2218 = vld [vmem:[%s2212 + $0x28] sm:$0xff]
        %v2219 = vld [vmem:[%s2212 + $0x30] sm:$0xff]
        %v2220 = vld [vmem:[%s2212 + $0x38] sm:$0xff]
        %s2221 = scalar_lea.vmem %s418, 1536
        %v2222 = vld [vmem:[%s2221] sm:$0xff]
        %v2223 = vld [vmem:[%s2221 + $0x8] sm:$0xff]
        %v2224 = vld [vmem:[%s2221 + $0x10] sm:$0xff]
        %v2225 = vld [vmem:[%s2221 + $0x18] sm:$0xff]
        %v2226 = vld [vmem:[%s2221 + $0x20] sm:$0xff]
        %v2227 = vld [vmem:[%s2221 + $0x28] sm:$0xff]
        %v2228 = vld [vmem:[%s2221 + $0x30] sm:$0xff]
        %v2229 = vld [vmem:[%s2221 + $0x38] sm:$0xff]
        %v2230 = vld [vmem:[%s2221 + $0x40] sm:$0xff]
        %v2231 = vld [vmem:[%s2221 + $0x48] sm:$0xff]
        %v2232 = vld [vmem:[%s2221 + $0x50] sm:$0xff]
        %v2233 = vld [vmem:[%s2221 + $0x58] sm:$0xff]
        %v2234 = vld [vmem:[%s2221 + $0x60] sm:$0xff]
        %v2235 = vld [vmem:[%s2221 + $0x68] sm:$0xff]
        %v2236 = vld [vmem:[%s2221 + $0x70] sm:$0xff]
        %v2237 = vld [vmem:[%s2221 + $0x78] sm:$0xff]
        %v2238 = vld [vmem:[%s2221 + $0x80] sm:$0xff]
        %v2239 = vld [vmem:[%s2221 + $0x88] sm:$0xff]
        %v2240 = vld [vmem:[%s2221 + $0x90] sm:$0xff]
        %v2241 = vld [vmem:[%s2221 + $0x98] sm:$0xff]
        %v2242 = vld [vmem:[%s2221 + $0xa0] sm:$0xff]
        %v2243 = vld [vmem:[%s2221 + $0xa8] sm:$0xff]
        %v2244 = vld [vmem:[%s2221 + $0xb0] sm:$0xff]
        %v2245 = vld [vmem:[%s2221 + $0xb8] sm:$0xff]
        %v2246 = vld [vmem:[%s2221 + $0xc0] sm:$0xff]
        %v2247 = vld [vmem:[%s2221 + $0xc8] sm:$0xff]
        %v2248 = vld [vmem:[%s2221 + $0xd0] sm:$0xff]
        %v2249 = vld [vmem:[%s2221 + $0xd8] sm:$0xff]
        %v2250 = vld [vmem:[%s2221 + $0xe0] sm:$0xff]
        %v2251 = vld [vmem:[%s2221 + $0xe8] sm:$0xff]
        %v2252 = vld [vmem:[%s2221 + $0xf0] sm:$0xff]
        %v2253 = vld [vmem:[%s2221 + $0xf8] sm:$0xff]
        %v2254 = vld [vmem:[%s2221 + $0x100] sm:$0xff]
        %v2255 = vld [vmem:[%s2221 + $0x108] sm:$0xff]
        %v2256 = vld [vmem:[%s2221 + $0x110] sm:$0xff]
        %v2257 = vld [vmem:[%s2221 + $0x118] sm:$0xff]
        %v2258 = vld [vmem:[%s2221 + $0x120] sm:$0xff]
        %v2259 = vld [vmem:[%s2221 + $0x128] sm:$0xff]
        %v2260 = vld [vmem:[%s2221 + $0x130] sm:$0xff]
        %v2261 = vld [vmem:[%s2221 + $0x138] sm:$0xff]
        %v2262 = vld [vmem:[%s2221 + $0x140] sm:$0xff]
        %v2263 = vld [vmem:[%s2221 + $0x148] sm:$0xff]
        %v2264 = vld [vmem:[%s2221 + $0x150] sm:$0xff]
        %v2265 = vld [vmem:[%s2221 + $0x158] sm:$0xff]
        %v2266 = vld [vmem:[%s2221 + $0x160] sm:$0xff]
        %v2267 = vld [vmem:[%s2221 + $0x168] sm:$0xff]
        %v2268 = vld [vmem:[%s2221 + $0x170] sm:$0xff]
        %v2269 = vld [vmem:[%s2221 + $0x178] sm:$0xff]
        %v2270 = vld [vmem:[%s2221 + $0x180] sm:$0xff]
        %v2271 = vld [vmem:[%s2221 + $0x188] sm:$0xff]
        %v2272 = vld [vmem:[%s2221 + $0x190] sm:$0xff]
        %v2273 = vld [vmem:[%s2221 + $0x198] sm:$0xff]
        %v2274 = vld [vmem:[%s2221 + $0x1a0] sm:$0xff]
        %v2275 = vld [vmem:[%s2221 + $0x1a8] sm:$0xff]
        %v2276 = vld [vmem:[%s2221 + $0x1b0] sm:$0xff]
        %v2277 = vld [vmem:[%s2221 + $0x1b8] sm:$0xff]
        %v2278 = vld [vmem:[%s2221 + $0x1c0] sm:$0xff]
        %v2279 = vld [vmem:[%s2221 + $0x1c8] sm:$0xff]
        %v2280 = vld [vmem:[%s2221 + $0x1d0] sm:$0xff]
        %v2281 = vld [vmem:[%s2221 + $0x1d8] sm:$0xff]
        %v2282 = vld [vmem:[%s2221 + $0x1e0] sm:$0xff]
        %v2283 = vld [vmem:[%s2221 + $0x1e8] sm:$0xff]
        %v2284 = vld [vmem:[%s2221 + $0x1f0] sm:$0xff]
        %v2285 = vld [vmem:[%s2221 + $0x1f8] sm:$0xff]
        %v2294 = vunpack.c.l.b16 %v2213
        %v2295 = vunpack.c.h.b16 %v2213
        %v2296 = vunpack.c.l.b16 %v2214
        %v2297 = vunpack.c.h.b16 %v2214
        %v2298 = vunpack.c.l.b16 %v2215
        %v2299 = vunpack.c.h.b16 %v2215
        %v2300 = vunpack.c.l.b16 %v2216
        %v2301 = vunpack.c.h.b16 %v2216
        %v2302 = vunpack.c.l.b16 %v2217
        %v2303 = vunpack.c.h.b16 %v2217
        %v2304 = vunpack.c.l.b16 %v2218
        %v2305 = vunpack.c.h.b16 %v2218
        %v2306 = vunpack.c.l.b16 %v2219
        %v2307 = vunpack.c.h.b16 %v2219
        %v2308 = vunpack.c.l.b16 %v2220
        %v2309 = vunpack.c.h.b16 %v2220
        %v2310 = vpack.c.b16 %v2298, %v2294
        %v2311 = vpack.c.b16 %v2299, %v2295
        %v2312 = vpack.c.b16 %v2300, %v2296
        %v2313 = vpack.c.b16 %v2301, %v2297
        %v2314 = vpack.c.b16 %v2306, %v2302
        %v2315 = vpack.c.b16 %v2307, %v2303
        %v2316 = vpack.c.b16 %v2308, %v2304
        %v2317 = vpack.c.b16 %v2309, %v2305
        %v2390 = vunpack.c.l.b16 %v2222
        %v2391 = vunpack.c.h.b16 %v2222
        %v2392 = vunpack.c.l.b16 %v2223
        %v2393 = vunpack.c.h.b16 %v2223
        %v2394 = vunpack.c.l.b16 %v2224
        %v2395 = vunpack.c.h.b16 %v2224
        %v2396 = vunpack.c.l.b16 %v2225
        %v2397 = vunpack.c.h.b16 %v2225
        %v2398 = vunpack.c.l.b16 %v2226
        %v2399 = vunpack.c.h.b16 %v2226
        %v2400 = vunpack.c.l.b16 %v2227
        %v2401 = vunpack.c.h.b16 %v2227
        %v2402 = vunpack.c.l.b16 %v2228
        %v2403 = vunpack.c.h.b16 %v2228
        %v2404 = vunpack.c.l.b16 %v2229
        %v2405 = vunpack.c.h.b16 %v2229
        %v2406 = vunpack.c.l.b16 %v2230
        %v2407 = vunpack.c.h.b16 %v2230
        %v2408 = vunpack.c.l.b16 %v2231
        %v2409 = vunpack.c.h.b16 %v2231
        %v2410 = vunpack.c.l.b16 %v2232
        %v2411 = vunpack.c.h.b16 %v2232
        %v2412 = vunpack.c.l.b16 %v2233
        %v2413 = vunpack.c.h.b16 %v2233
        %v2414 = vunpack.c.l.b16 %v2234
        %v2415 = vunpack.c.h.b16 %v2234
        %v2416 = vunpack.c.l.b16 %v2235
        %v2417 = vunpack.c.h.b16 %v2235
        %v2418 = vunpack.c.l.b16 %v2236
        %v2419 = vunpack.c.h.b16 %v2236
        %v2420 = vunpack.c.l.b16 %v2237
        %v2421 = vunpack.c.h.b16 %v2237
        %v2422 = vunpack.c.l.b16 %v2238
        %v2423 = vunpack.c.h.b16 %v2238
        %v2424 = vunpack.c.l.b16 %v2239
        %v2425 = vunpack.c.h.b16 %v2239
        %v2426 = vunpack.c.l.b16 %v2240
        %v2427 = vunpack.c.h.b16 %v2240
        %v2428 = vunpack.c.l.b16 %v2241
        %v2429 = vunpack.c.h.b16 %v2241
        %v2430 = vunpack.c.l.b16 %v2242
        %v2431 = vunpack.c.h.b16 %v2242
        %v2432 = vunpack.c.l.b16 %v2243
        %v2433 = vunpack.c.h.b16 %v2243
        %v2434 = vunpack.c.l.b16 %v2244
        %v2435 = vunpack.c.h.b16 %v2244
        %v2436 = vunpack.c.l.b16 %v2245
        %v2437 = vunpack.c.h.b16 %v2245
        %v2438 = vunpack.c.l.b16 %v2246
        %v2439 = vunpack.c.h.b16 %v2246
        %v2440 = vunpack.c.l.b16 %v2247
        %v2441 = vunpack.c.h.b16 %v2247
        %v2442 = vunpack.c.l.b16 %v2248
        %v2443 = vunpack.c.h.b16 %v2248
        %v2444 = vunpack.c.l.b16 %v2249
        %v2445 = vunpack.c.h.b16 %v2249
        %v2446 = vunpack.c.l.b16 %v2250
        %v2447 = vunpack.c.h.b16 %v2250
        %v2448 = vunpack.c.l.b16 %v2251
        %v2449 = vunpack.c.h.b16 %v2251
        %v2450 = vunpack.c.l.b16 %v2252
        %v2451 = vunpack.c.h.b16 %v2252
        %v2452 = vunpack.c.l.b16 %v2253
        %v2453 = vunpack.c.h.b16 %v2253
        %v2454 = vunpack.c.l.b16 %v2254
        %v2455 = vunpack.c.h.b16 %v2254
        %v2456 = vunpack.c.l.b16 %v2255
        %v2457 = vunpack.c.h.b16 %v2255
        %v2458 = vunpack.c.l.b16 %v2256
        %v2459 = vunpack.c.h.b16 %v2256
        %v2460 = vunpack.c.l.b16 %v2257
        %v2461 = vunpack.c.h.b16 %v2257
        %v2462 = vunpack.c.l.b16 %v2258
        %v2463 = vunpack.c.h.b16 %v2258
        %v2464 = vunpack.c.l.b16 %v2259
        %v2465 = vunpack.c.h.b16 %v2259
        %v2466 = vunpack.c.l.b16 %v2260
        %v2467 = vunpack.c.h.b16 %v2260
        %v2468 = vunpack.c.l.b16 %v2261
        %v2469 = vunpack.c.h.b16 %v2261
        %v2470 = vunpack.c.l.b16 %v2262
        %v2471 = vunpack.c.h.b16 %v2262
        %v2472 = vunpack.c.l.b16 %v2263
        %v2473 = vunpack.c.h.b16 %v2263
        %v2474 = vunpack.c.l.b16 %v2264
        %v2475 = vunpack.c.h.b16 %v2264
        %v2476 = vunpack.c.l.b16 %v2265
        %v2477 = vunpack.c.h.b16 %v2265
        %v2478 = vunpack.c.l.b16 %v2266
        %v2479 = vunpack.c.h.b16 %v2266
        %v2480 = vunpack.c.l.b16 %v2267
        %v2481 = vunpack.c.h.b16 %v2267
        %v2482 = vunpack.c.l.b16 %v2268
        %v2483 = vunpack.c.h.b16 %v2268
        %v2484 = vunpack.c.l.b16 %v2269
        %v2485 = vunpack.c.h.b16 %v2269
        %v2486 = vunpack.c.l.b16 %v2270
        %v2487 = vunpack.c.h.b16 %v2270
        %v2488 = vunpack.c.l.b16 %v2271
        %v2489 = vunpack.c.h.b16 %v2271
        %v2490 = vunpack.c.l.b16 %v2272
        %v2491 = vunpack.c.h.b16 %v2272
        %v2492 = vunpack.c.l.b16 %v2273
        %v2493 = vunpack.c.h.b16 %v2273
        %v2494 = vunpack.c.l.b16 %v2274
        %v2495 = vunpack.c.h.b16 %v2274
        %v2496 = vunpack.c.l.b16 %v2275
        %v2497 = vunpack.c.h.b16 %v2275
        %v2498 = vunpack.c.l.b16 %v2276
        %v2499 = vunpack.c.h.b16 %v2276
        %v2500 = vunpack.c.l.b16 %v2277
        %v2501 = vunpack.c.h.b16 %v2277
        %v2502 = vunpack.c.l.b16 %v2278
        %v2503 = vunpack.c.h.b16 %v2278
        %v2504 = vunpack.c.l.b16 %v2279
        %v2505 = vunpack.c.h.b16 %v2279
        %v2506 = vunpack.c.l.b16 %v2280
        %v2507 = vunpack.c.h.b16 %v2280
        %v2508 = vunpack.c.l.b16 %v2281
        %v2509 = vunpack.c.h.b16 %v2281
        %v2510 = vunpack.c.l.b16 %v2282
        %v2511 = vunpack.c.h.b16 %v2282
        %v2512 = vunpack.c.l.b16 %v2283
        %v2513 = vunpack.c.h.b16 %v2283
        %v2514 = vunpack.c.l.b16 %v2284
        %v2515 = vunpack.c.h.b16 %v2284
        %v2516 = vunpack.c.l.b16 %v2285
        %v2517 = vunpack.c.h.b16 %v2285
        %v2518 = vpack.c.b16 %v2392, %v2390
        %v2519 = vpack.c.b16 %v2393, %v2391
        %v2520 = vpack.c.b16 %v2396, %v2394
        %v2521 = vpack.c.b16 %v2397, %v2395
        %v2522 = vpack.c.b16 %v2400, %v2398
        %v2523 = vpack.c.b16 %v2401, %v2399
        %v2524 = vpack.c.b16 %v2404, %v2402
        %v2525 = vpack.c.b16 %v2405, %v2403
        %v2526 = vpack.c.b16 %v2408, %v2406
        %v2527 = vpack.c.b16 %v2409, %v2407
        %v2528 = vpack.c.b16 %v2412, %v2410
        %v2529 = vpack.c.b16 %v2413, %v2411
        %v2530 = vpack.c.b16 %v2416, %v2414
        %v2531 = vpack.c.b16 %v2417, %v2415
        %v2532 = vpack.c.b16 %v2420, %v2418
        %v2533 = vpack.c.b16 %v2421, %v2419
        %v2534 = vpack.c.b16 %v2424, %v2422
        %v2535 = vpack.c.b16 %v2425, %v2423
        %v2536 = vpack.c.b16 %v2428, %v2426
        %v2537 = vpack.c.b16 %v2429, %v2427
        %v2538 = vpack.c.b16 %v2432, %v2430
        %v2539 = vpack.c.b16 %v2433, %v2431
        %v2540 = vpack.c.b16 %v2436, %v2434
        %v2541 = vpack.c.b16 %v2437, %v2435
        %v2542 = vpack.c.b16 %v2440, %v2438
        %v2543 = vpack.c.b16 %v2441, %v2439
        %v2544 = vpack.c.b16 %v2444, %v2442
        %v2545 = vpack.c.b16 %v2445, %v2443
        %v2546 = vpack.c.b16 %v2448, %v2446
        %v2547 = vpack.c.b16 %v2449, %v2447
        %v2548 = vpack.c.b16 %v2452, %v2450
        %v2549 = vpack.c.b16 %v2453, %v2451
        %v2550 = vpack.c.b16 %v2456, %v2454
        %v2551 = vpack.c.b16 %v2457, %v2455
        %v2552 = vpack.c.b16 %v2460, %v2458
        %v2553 = vpack.c.b16 %v2461, %v2459
        %v2554 = vpack.c.b16 %v2464, %v2462
        %v2555 = vpack.c.b16 %v2465, %v2463
        %v2556 = vpack.c.b16 %v2468, %v2466
        %v2557 = vpack.c.b16 %v2469, %v2467
        %v2558 = vpack.c.b16 %v2472, %v2470
        %v2559 = vpack.c.b16 %v2473, %v2471
        %v2560 = vpack.c.b16 %v2476, %v2474
        %v2561 = vpack.c.b16 %v2477, %v2475
        %v2562 = vpack.c.b16 %v2480, %v2478
        %v2563 = vpack.c.b16 %v2481, %v2479
        %v2564 = vpack.c.b16 %v2484, %v2482
        %v2565 = vpack.c.b16 %v2485, %v2483
        %v2566 = vpack.c.b16 %v2488, %v2486
        %v2567 = vpack.c.b16 %v2489, %v2487
        %v2568 = vpack.c.b16 %v2492, %v2490
        %v2569 = vpack.c.b16 %v2493, %v2491
        %v2570 = vpack.c.b16 %v2496, %v2494
        %v2571 = vpack.c.b16 %v2497, %v2495
        %v2572 = vpack.c.b16 %v2500, %v2498
        %v2573 = vpack.c.b16 %v2501, %v2499
        %v2574 = vpack.c.b16 %v2504, %v2502
        %v2575 = vpack.c.b16 %v2505, %v2503
        %v2576 = vpack.c.b16 %v2508, %v2506
        %v2577 = vpack.c.b16 %v2509, %v2507
        %v2578 = vpack.c.b16 %v2512, %v2510
        %v2579 = vpack.c.b16 %v2513, %v2511
        %v2580 = vpack.c.b16 %v2516, %v2514
        %v2581 = vpack.c.b16 %v2517, %v2515
        %2646 = vmatpush.bf16.msra.mxu0 %v2532
        %2647 = vmatpush.bf16.msra.mxu0 %v2530
        %2648 = vmatpush.bf16.msra.mxu0 %v2528
        %2649 = vmatpush.bf16.msra.mxu0 %v2526
        %2650 = vmatpush.bf16.msra.mxu0 %v2524
        %2651 = vmatpush.bf16.msra.mxu0 %v2522
        %2652 = vmatpush.bf16.msra.mxu0 %v2520
        %2653 = vmatpush.bf16.msra.mxu0 %v2518
        %2654 = vmatmul.bf16.gmra.mxu0 %v2310
        %v2655 = vpop.f32.mrf.mxu0
        %v2656 = vadd.f32 0.0, %v2655
        %v2657 = vpop.f32.mrf.mxu0
        %v2658 = vadd.f32 0.0, %v2657
        %2659 = vmatmul.bf16.gmra.mxu0 %v2314
        %v2660 = vpop.f32.mrf.mxu0
        %v2661 = vadd.f32 0.0, %v2660
        %v2662 = vpop.f32.mrf.mxu0
        %v2663 = vadd.f32 0.0, %v2662
        %2664 = vdwg.mxu0
        %2665 = vmatpush.bf16.msra.mxu0 %v2548
        %2666 = vmatpush.bf16.msra.mxu0 %v2546
        %2667 = vmatpush.bf16.msra.mxu0 %v2544
        %2668 = vmatpush.bf16.msra.mxu0 %v2542
        %2669 = vmatpush.bf16.msra.mxu0 %v2540
        %2670 = vmatpush.bf16.msra.mxu0 %v2538
        %2671 = vmatpush.bf16.msra.mxu0 %v2536
        %2672 = vmatpush.bf16.msra.mxu0 %v2534
        %2673 = vmatmul.bf16.gmra.mxu0 %v2311
        %v2674 = vpop.f32.mrf.mxu0
        %v2675 = vadd.f32 %v2656, %v2674
        %v2676 = vpop.f32.mrf.mxu0
        %v2677 = vadd.f32 %v2658, %v2676
        %2678 = vmatmul.bf16.gmra.mxu0 %v2315
        %v2679 = vpop.f32.mrf.mxu0
        %v2680 = vadd.f32 %v2661, %v2679
        %v2681 = vpop.f32.mrf.mxu0
        %v2682 = vadd.f32 %v2663, %v2681
        %2683 = vdwg.mxu0
        %2684 = vmatpush.bf16.msra.mxu0 %v2564
        %2685 = vmatpush.bf16.msra.mxu0 %v2562
        %2686 = vmatpush.bf16.msra.mxu0 %v2560
        %2687 = vmatpush.bf16.msra.mxu0 %v2558
        %2688 = vmatpush.bf16.msra.mxu0 %v2556
        %2689 = vmatpush.bf16.msra.mxu0 %v2554
        %2690 = vmatpush.bf16.msra.mxu0 %v2552
        %2691 = vmatpush.bf16.msra.mxu0 %v2550
        %2692 = vmatmul.bf16.gmra.mxu0 %v2312
        %v2693 = vpop.f32.mrf.mxu0
        %v2694 = vadd.f32 %v2675, %v2693
        %v2695 = vpop.f32.mrf.mxu0
        %v2696 = vadd.f32 %v2677, %v2695
        %2697 = vmatmul.bf16.gmra.mxu0 %v2316
        %v2698 = vpop.f32.mrf.mxu0
        %v2699 = vadd.f32 %v2680, %v2698
        %v2700 = vpop.f32.mrf.mxu0
        %v2701 = vadd.f32 %v2682, %v2700
        %2702 = vdwg.mxu0
        %2703 = vmatpush.bf16.msra.mxu0 %v2580
        %2704 = vmatpush.bf16.msra.mxu0 %v2578
        %2705 = vmatpush.bf16.msra.mxu0 %v2576
        %2706 = vmatpush.bf16.msra.mxu0 %v2574
        %2707 = vmatpush.bf16.msra.mxu0 %v2572
        %2708 = vmatpush.bf16.msra.mxu0 %v2570
        %2709 = vmatpush.bf16.msra.mxu0 %v2568
        %2710 = vmatpush.bf16.msra.mxu0 %v2566
        %2711 = vmatmul.bf16.gmra.mxu0 %v2313
        %v2712 = vpop.f32.mrf.mxu0
        %v2713 = vadd.f32 %v2694, %v2712
        %v2714 = vpop.f32.mrf.mxu0
        %v2715 = vadd.f32 %v2696, %v2714
        %2716 = vmatmul.bf16.gmra.mxu0 %v2317
        %v2717 = vpop.f32.mrf.mxu0
        %v2718 = vadd.f32 %v2699, %v2717
        %v2719 = vpop.f32.mrf.mxu0
        %v2720 = vadd.f32 %v2701, %v2719
        %2721 = vdwg.mxu0
        %2722 = vmatpush.bf16.msra.mxu0 %v2533
        %2723 = vmatpush.bf16.msra.mxu0 %v2531
        %2724 = vmatpush.bf16.msra.mxu0 %v2529
        %2725 = vmatpush.bf16.msra.mxu0 %v2527
        %2726 = vmatpush.bf16.msra.mxu0 %v2525
        %2727 = vmatpush.bf16.msra.mxu0 %v2523
        %2728 = vmatpush.bf16.msra.mxu0 %v2521
        %2729 = vmatpush.bf16.msra.mxu0 %v2519
        %2730 = vmatmul.bf16.gmra.mxu0 %v2310
        %v2731 = vpop.f32.mrf.mxu0
        %v2732 = vadd.f32 0.0, %v2731
        %v2733 = vpop.f32.mrf.mxu0
        %v2734 = vadd.f32 0.0, %v2733
        %2735 = vmatmul.bf16.gmra.mxu0 %v2314
        %v2736 = vpop.f32.mrf.mxu0
        %v2737 = vadd.f32 0.0, %v2736
        %v2738 = vpop.f32.mrf.mxu0
        %v2739 = vadd.f32 0.0, %v2738
        %2740 = vdwg.mxu0
        %2741 = vmatpush.bf16.msra.mxu0 %v2549
        %2742 = vmatpush.bf16.msra.mxu0 %v2547
        %2743 = vmatpush.bf16.msra.mxu0 %v2545
        %2744 = vmatpush.bf16.msra.mxu0 %v2543
        %2745 = vmatpush.bf16.msra.mxu0 %v2541
        %2746 = vmatpush.bf16.msra.mxu0 %v2539
        %2747 = vmatpush.bf16.msra.mxu0 %v2537
        %2748 = vmatpush.bf16.msra.mxu0 %v2535
        %2749 = vmatmul.bf16.gmra.mxu0 %v2311
        %v2750 = vpop.f32.mrf.mxu0
        %v2751 = vadd.f32 %v2732, %v2750
        %v2752 = vpop.f32.mrf.mxu0
        %v2753 = vadd.f32 %v2734, %v2752
        %2754 = vmatmul.bf16.gmra.mxu0 %v2315
        %v2755 = vpop.f32.mrf.mxu0
        %v2756 = vadd.f32 %v2737, %v2755
        %v2757 = vpop.f32.mrf.mxu0
        %v2758 = vadd.f32 %v2739, %v2757
        %2759 = vdwg.mxu0
        %2760 = vmatpush.bf16.msra.mxu0 %v2565
        %2761 = vmatpush.bf16.msra.mxu0 %v2563
        %2762 = vmatpush.bf16.msra.mxu0 %v2561
        %2763 = vmatpush.bf16.msra.mxu0 %v2559
        %2764 = vmatpush.bf16.msra.mxu0 %v2557
        %2765 = vmatpush.bf16.msra.mxu0 %v2555
        %2766 = vmatpush.bf16.msra.mxu0 %v2553
        %2767 = vmatpush.bf16.msra.mxu0 %v2551
        %2768 = vmatmul.bf16.gmra.mxu0 %v2312
        %v2769 = vpop.f32.mrf.mxu0
        %v2770 = vadd.f32 %v2751, %v2769
        %v2771 = vpop.f32.mrf.mxu0
        %v2772 = vadd.f32 %v2753, %v2771
        %2773 = vmatmul.bf16.gmra.mxu0 %v2316
        %v2774 = vpop.f32.mrf.mxu0
        %v2775 = vadd.f32 %v2756, %v2774
        %v2776 = vpop.f32.mrf.mxu0
        %v2777 = vadd.f32 %v2758, %v2776
        %2778 = vdwg.mxu0
        %2779 = vmatpush.bf16.msra.mxu0 %v2581
        %2780 = vmatpush.bf16.msra.mxu0 %v2579
        %2781 = vmatpush.bf16.msra.mxu0 %v2577
        %2782 = vmatpush.bf16.msra.mxu0 %v2575
        %2783 = vmatpush.bf16.msra.mxu0 %v2573
        %2784 = vmatpush.bf16.msra.mxu0 %v2571
        %2785 = vmatpush.bf16.msra.mxu0 %v2569
        %2786 = vmatpush.bf16.msra.mxu0 %v2567
        %2787 = vmatmul.bf16.gmra.mxu0 %v2313
        %v2788 = vpop.f32.mrf.mxu0
        %v2789 = vadd.f32 %v2770, %v2788
        %v2790 = vpop.f32.mrf.mxu0
        %v2791 = vadd.f32 %v2772, %v2790
        %2792 = vmatmul.bf16.gmra.mxu0 %v2317
        %v2793 = vpop.f32.mrf.mxu0
        %v2794 = vadd.f32 %v2775, %v2793
        %v2795 = vpop.f32.mrf.mxu0
        %v2796 = vadd.f32 %v2777, %v2795
        %2797 = vdwg.mxu0
        %v2798 = vadd.f32 %v2204, %v2713
        %v2799 = vadd.f32 %v2205, %v2789
        %v2800 = vadd.f32 %v2206, %v2715
        %v2801 = vadd.f32 %v2207, %v2791
        %v2802 = vadd.f32 %v2208, %v2718
        %v2803 = vadd.f32 %v2209, %v2794
        %v2804 = vadd.f32 %v2210, %v2720
        %v2805 = vadd.f32 %v2211, %v2796
        %s2806 = scalar_lea.vmem %s366, 256 [#allocation2]
        %v2807 = vld [vmem:[%s2806] sm:$0xff]
        %v2808 = vld [vmem:[%s2806 + $0x8] sm:$0xff]
        %v2809 = vld [vmem:[%s2806 + $0x10] sm:$0xff]
        %v2810 = vld [vmem:[%s2806 + $0x18] sm:$0xff]
        %v2811 = vld [vmem:[%s2806 + $0x20] sm:$0xff]
        %v2812 = vld [vmem:[%s2806 + $0x28] sm:$0xff]
        %v2813 = vld [vmem:[%s2806 + $0x30] sm:$0xff]
        %v2814 = vld [vmem:[%s2806 + $0x38] sm:$0xff]
        %s2815 = scalar_lea.vmem %s418, 2048
        %v2816 = vld [vmem:[%s2815] sm:$0xff]
        %v2817 = vld [vmem:[%s2815 + $0x8] sm:$0xff]
        %v2818 = vld [vmem:[%s2815 + $0x10] sm:$0xff]
        %v2819 = vld [vmem:[%s2815 + $0x18] sm:$0xff]
        %v2820 = vld [vmem:[%s2815 + $0x20] sm:$0xff]
        %v2821 = vld [vmem:[%s2815 + $0x28] sm:$0xff]
        %v2822 = vld [vmem:[%s2815 + $0x30] sm:$0xff]
        %v2823 = vld [vmem:[%s2815 + $0x38] sm:$0xff]
        %v2824 = vld [vmem:[%s2815 + $0x40] sm:$0xff]
        %v2825 = vld [vmem:[%s2815 + $0x48] sm:$0xff]
        %v2826 = vld [vmem:[%s2815 + $0x50] sm:$0xff]
        %v2827 = vld [vmem:[%s2815 + $0x58] sm:$0xff]
        %v2828 = vld [vmem:[%s2815 + $0x60] sm:$0xff]
        %v2829 = vld [vmem:[%s2815 + $0x68] sm:$0xff]
        %v2830 = vld [vmem:[%s2815 + $0x70] sm:$0xff]
        %v2831 = vld [vmem:[%s2815 + $0x78] sm:$0xff]
        %v2832 = vld [vmem:[%s2815 + $0x80] sm:$0xff]
        %v2833 = vld [vmem:[%s2815 + $0x88] sm:$0xff]
        %v2834 = vld [vmem:[%s2815 + $0x90] sm:$0xff]
        %v2835 = vld [vmem:[%s2815 + $0x98] sm:$0xff]
        %v2836 = vld [vmem:[%s2815 + $0xa0] sm:$0xff]
        %v2837 = vld [vmem:[%s2815 + $0xa8] sm:$0xff]
        %v2838 = vld [vmem:[%s2815 + $0xb0] sm:$0xff]
        %v2839 = vld [vmem:[%s2815 + $0xb8] sm:$0xff]
        %v2840 = vld [vmem:[%s2815 + $0xc0] sm:$0xff]
        %v2841 = vld [vmem:[%s2815 + $0xc8] sm:$0xff]
        %v2842 = vld [vmem:[%s2815 + $0xd0] sm:$0xff]
        %v2843 = vld [vmem:[%s2815 + $0xd8] sm:$0xff]
        %v2844 = vld [vmem:[%s2815 + $0xe0] sm:$0xff]
        %v2845 = vld [vmem:[%s2815 + $0xe8] sm:$0xff]
        %v2846 = vld [vmem:[%s2815 + $0xf0] sm:$0xff]
        %v2847 = vld [vmem:[%s2815 + $0xf8] sm:$0xff]
        %v2848 = vld [vmem:[%s2815 + $0x100] sm:$0xff]
        %v2849 = vld [vmem:[%s2815 + $0x108] sm:$0xff]
        %v2850 = vld [vmem:[%s2815 + $0x110] sm:$0xff]
        %v2851 = vld [vmem:[%s2815 + $0x118] sm:$0xff]
        %v2852 = vld [vmem:[%s2815 + $0x120] sm:$0xff]
        %v2853 = vld [vmem:[%s2815 + $0x128] sm:$0xff]
        %v2854 = vld [vmem:[%s2815 + $0x130] sm:$0xff]
        %v2855 = vld [vmem:[%s2815 + $0x138] sm:$0xff]
        %v2856 = vld [vmem:[%s2815 + $0x140] sm:$0xff]
        %v2857 = vld [vmem:[%s2815 + $0x148] sm:$0xff]
        %v2858 = vld [vmem:[%s2815 + $0x150] sm:$0xff]
        %v2859 = vld [vmem:[%s2815 + $0x158] sm:$0xff]
        %v2860 = vld [vmem:[%s2815 + $0x160] sm:$0xff]
        %v2861 = vld [vmem:[%s2815 + $0x168] sm:$0xff]
        %v2862 = vld [vmem:[%s2815 + $0x170] sm:$0xff]
        %v2863 = vld [vmem:[%s2815 + $0x178] sm:$0xff]
        %v2864 = vld [vmem:[%s2815 + $0x180] sm:$0xff]
        %v2865 = vld [vmem:[%s2815 + $0x188] sm:$0xff]
        %v2866 = vld [vmem:[%s2815 + $0x190] sm:$0xff]
        %v2867 = vld [vmem:[%s2815 + $0x198] sm:$0xff]
        %v2868 = vld [vmem:[%s2815 + $0x1a0] sm:$0xff]
        %v2869 = vld [vmem:[%s2815 + $0x1a8] sm:$0xff]
        %v2870 = vld [vmem:[%s2815 + $0x1b0] sm:$0xff]
        %v2871 = vld [vmem:[%s2815 + $0x1b8] sm:$0xff]
        %v2872 = vld [vmem:[%s2815 + $0x1c0] sm:$0xff]
        %v2873 = vld [vmem:[%s2815 + $0x1c8] sm:$0xff]
        %v2874 = vld [vmem:[%s2815 + $0x1d0] sm:$0xff]
        %v2875 = vld [vmem:[%s2815 + $0x1d8] sm:$0xff]
        %v2876 = vld [vmem:[%s2815 + $0x1e0] sm:$0xff]
        %v2877 = vld [vmem:[%s2815 + $0x1e8] sm:$0xff]
        %v2878 = vld [vmem:[%s2815 + $0x1f0] sm:$0xff]
        %v2879 = vld [vmem:[%s2815 + $0x1f8] sm:$0xff]
        %v2888 = vunpack.c.l.b16 %v2807
        %v2889 = vunpack.c.h.b16 %v2807
        %v2890 = vunpack.c.l.b16 %v2808
        %v2891 = vunpack.c.h.b16 %v2808
        %v2892 = vunpack.c.l.b16 %v2809
        %v2893 = vunpack.c.h.b16 %v2809
        %v2894 = vunpack.c.l.b16 %v2810
        %v2895 = vunpack.c.h.b16 %v2810
        %v2896 = vunpack.c.l.b16 %v2811
        %v2897 = vunpack.c.h.b16 %v2811
        %v2898 = vunpack.c.l.b16 %v2812
        %v2899 = vunpack.c.h.b16 %v2812
        %v2900 = vunpack.c.l.b16 %v2813
        %v2901 = vunpack.c.h.b16 %v2813
        %v2902 = vunpack.c.l.b16 %v2814
        %v2903 = vunpack.c.h.b16 %v2814
        %v2904 = vpack.c.b16 %v2892, %v2888
        %v2905 = vpack.c.b16 %v2893, %v2889
        %v2906 = vpack.c.b16 %v2894, %v2890
        %v2907 = vpack.c.b16 %v2895, %v2891
        %v2908 = vpack.c.b16 %v2900, %v2896
        %v2909 = vpack.c.b16 %v2901, %v2897
        %v2910 = vpack.c.b16 %v2902, %v2898
        %v2911 = vpack.c.b16 %v2903, %v2899
        %v2984 = vunpack.c.l.b16 %v2816
        %v2985 = vunpack.c.h.b16 %v2816
        %v2986 = vunpack.c.l.b16 %v2817
        %v2987 = vunpack.c.h.b16 %v2817
        %v2988 = vunpack.c.l.b16 %v2818
        %v2989 = vunpack.c.h.b16 %v2818
        %v2990 = vunpack.c.l.b16 %v2819
        %v2991 = vunpack.c.h.b16 %v2819
        %v2992 = vunpack.c.l.b16 %v2820
        %v2993 = vunpack.c.h.b16 %v2820
        %v2994 = vunpack.c.l.b16 %v2821
        %v2995 = vunpack.c.h.b16 %v2821
        %v2996 = vunpack.c.l.b16 %v2822
        %v2997 = vunpack.c.h.b16 %v2822
        %v2998 = vunpack.c.l.b16 %v2823
        %v2999 = vunpack.c.h.b16 %v2823
        %v3000 = vunpack.c.l.b16 %v2824
        %v3001 = vunpack.c.h.b16 %v2824
        %v3002 = vunpack.c.l.b16 %v2825
        %v3003 = vunpack.c.h.b16 %v2825
        %v3004 = vunpack.c.l.b16 %v2826
        %v3005 = vunpack.c.h.b16 %v2826
        %v3006 = vunpack.c.l.b16 %v2827
        %v3007 = vunpack.c.h.b16 %v2827
        %v3008 = vunpack.c.l.b16 %v2828
        %v3009 = vunpack.c.h.b16 %v2828
        %v3010 = vunpack.c.l.b16 %v2829
        %v3011 = vunpack.c.h.b16 %v2829
        %v3012 = vunpack.c.l.b16 %v2830
        %v3013 = vunpack.c.h.b16 %v2830
        %v3014 = vunpack.c.l.b16 %v2831
        %v3015 = vunpack.c.h.b16 %v2831
        %v3016 = vunpack.c.l.b16 %v2832
        %v3017 = vunpack.c.h.b16 %v2832
        %v3018 = vunpack.c.l.b16 %v2833
        %v3019 = vunpack.c.h.b16 %v2833
        %v3020 = vunpack.c.l.b16 %v2834
        %v3021 = vunpack.c.h.b16 %v2834
        %v3022 = vunpack.c.l.b16 %v2835
        %v3023 = vunpack.c.h.b16 %v2835
        %v3024 = vunpack.c.l.b16 %v2836
        %v3025 = vunpack.c.h.b16 %v2836
        %v3026 = vunpack.c.l.b16 %v2837
        %v3027 = vunpack.c.h.b16 %v2837
        %v3028 = vunpack.c.l.b16 %v2838
        %v3029 = vunpack.c.h.b16 %v2838
        %v3030 = vunpack.c.l.b16 %v2839
        %v3031 = vunpack.c.h.b16 %v2839
        %v3032 = vunpack.c.l.b16 %v2840
        %v3033 = vunpack.c.h.b16 %v2840
        %v3034 = vunpack.c.l.b16 %v2841
        %v3035 = vunpack.c.h.b16 %v2841
        %v3036 = vunpack.c.l.b16 %v2842
        %v3037 = vunpack.c.h.b16 %v2842
        %v3038 = vunpack.c.l.b16 %v2843
        %v3039 = vunpack.c.h.b16 %v2843
        %v3040 = vunpack.c.l.b16 %v2844
        %v3041 = vunpack.c.h.b16 %v2844
        %v3042 = vunpack.c.l.b16 %v2845
        %v3043 = vunpack.c.h.b16 %v2845
        %v3044 = vunpack.c.l.b16 %v2846
        %v3045 = vunpack.c.h.b16 %v2846
        %v3046 = vunpack.c.l.b16 %v2847
        %v3047 = vunpack.c.h.b16 %v2847
        %v3048 = vunpack.c.l.b16 %v2848
        %v3049 = vunpack.c.h.b16 %v2848
        %v3050 = vunpack.c.l.b16 %v2849
        %v3051 = vunpack.c.h.b16 %v2849
        %v3052 = vunpack.c.l.b16 %v2850
        %v3053 = vunpack.c.h.b16 %v2850
        %v3054 = vunpack.c.l.b16 %v2851
        %v3055 = vunpack.c.h.b16 %v2851
        %v3056 = vunpack.c.l.b16 %v2852
        %v3057 = vunpack.c.h.b16 %v2852
        %v3058 = vunpack.c.l.b16 %v2853
        %v3059 = vunpack.c.h.b16 %v2853
        %v3060 = vunpack.c.l.b16 %v2854
        %v3061 = vunpack.c.h.b16 %v2854
        %v3062 = vunpack.c.l.b16 %v2855
        %v3063 = vunpack.c.h.b16 %v2855
        %v3064 = vunpack.c.l.b16 %v2856
        %v3065 = vunpack.c.h.b16 %v2856
        %v3066 = vunpack.c.l.b16 %v2857
        %v3067 = vunpack.c.h.b16 %v2857
        %v3068 = vunpack.c.l.b16 %v2858
        %v3069 = vunpack.c.h.b16 %v2858
        %v3070 = vunpack.c.l.b16 %v2859
        %v3071 = vunpack.c.h.b16 %v2859
        %v3072 = vunpack.c.l.b16 %v2860
        %v3073 = vunpack.c.h.b16 %v2860
        %v3074 = vunpack.c.l.b16 %v2861
        %v3075 = vunpack.c.h.b16 %v2861
        %v3076 = vunpack.c.l.b16 %v2862
        %v3077 = vunpack.c.h.b16 %v2862
        %v3078 = vunpack.c.l.b16 %v2863
        %v3079 = vunpack.c.h.b16 %v2863
        %v3080 = vunpack.c.l.b16 %v2864
        %v3081 = vunpack.c.h.b16 %v2864
        %v3082 = vunpack.c.l.b16 %v2865
        %v3083 = vunpack.c.h.b16 %v2865
        %v3084 = vunpack.c.l.b16 %v2866
        %v3085 = vunpack.c.h.b16 %v2866
        %v3086 = vunpack.c.l.b16 %v2867
        %v3087 = vunpack.c.h.b16 %v2867
        %v3088 = vunpack.c.l.b16 %v2868
        %v3089 = vunpack.c.h.b16 %v2868
        %v3090 = vunpack.c.l.b16 %v2869
        %v3091 = vunpack.c.h.b16 %v2869
        %v3092 = vunpack.c.l.b16 %v2870
        %v3093 = vunpack.c.h.b16 %v2870
        %v3094 = vunpack.c.l.b16 %v2871
        %v3095 = vunpack.c.h.b16 %v2871
        %v3096 = vunpack.c.l.b16 %v2872
        %v3097 = vunpack.c.h.b16 %v2872
        %v3098 = vunpack.c.l.b16 %v2873
        %v3099 = vunpack.c.h.b16 %v2873
        %v3100 = vunpack.c.l.b16 %v2874
        %v3101 = vunpack.c.h.b16 %v2874
        %v3102 = vunpack.c.l.b16 %v2875
        %v3103 = vunpack.c.h.b16 %v2875
        %v3104 = vunpack.c.l.b16 %v2876
        %v3105 = vunpack.c.h.b16 %v2876
        %v3106 = vunpack.c.l.b16 %v2877
        %v3107 = vunpack.c.h.b16 %v2877
        %v3108 = vunpack.c.l.b16 %v2878
        %v3109 = vunpack.c.h.b16 %v2878
        %v3110 = vunpack.c.l.b16 %v2879
        %v3111 = vunpack.c.h.b16 %v2879
        %v3112 = vpack.c.b16 %v2986, %v2984
        %v3113 = vpack.c.b16 %v2987, %v2985
        %v3114 = vpack.c.b16 %v2990, %v2988
        %v3115 = vpack.c.b16 %v2991, %v2989
        %v3116 = vpack.c.b16 %v2994, %v2992
        %v3117 = vpack.c.b16 %v2995, %v2993
        %v3118 = vpack.c.b16 %v2998, %v2996
        %v3119 = vpack.c.b16 %v2999, %v2997
        %v3120 = vpack.c.b16 %v3002, %v3000
        %v3121 = vpack.c.b16 %v3003, %v3001
        %v3122 = vpack.c.b16 %v3006, %v3004
        %v3123 = vpack.c.b16 %v3007, %v3005
        %v3124 = vpack.c.b16 %v3010, %v3008
        %v3125 = vpack.c.b16 %v3011, %v3009
        %v3126 = vpack.c.b16 %v3014, %v3012
        %v3127 = vpack.c.b16 %v3015, %v3013
        %v3128 = vpack.c.b16 %v3018, %v3016
        %v3129 = vpack.c.b16 %v3019, %v3017
        %v3130 = vpack.c.b16 %v3022, %v3020
        %v3131 = vpack.c.b16 %v3023, %v3021
        %v3132 = vpack.c.b16 %v3026, %v3024
        %v3133 = vpack.c.b16 %v3027, %v3025
        %v3134 = vpack.c.b16 %v3030, %v3028
        %v3135 = vpack.c.b16 %v3031, %v3029
        %v3136 = vpack.c.b16 %v3034, %v3032
        %v3137 = vpack.c.b16 %v3035, %v3033
        %v3138 = vpack.c.b16 %v3038, %v3036
        %v3139 = vpack.c.b16 %v3039, %v3037
        %v3140 = vpack.c.b16 %v3042, %v3040
        %v3141 = vpack.c.b16 %v3043, %v3041
        %v3142 = vpack.c.b16 %v3046, %v3044
        %v3143 = vpack.c.b16 %v3047, %v3045
        %v3144 = vpack.c.b16 %v3050, %v3048
        %v3145 = vpack.c.b16 %v3051, %v3049
        %v3146 = vpack.c.b16 %v3054, %v3052
        %v3147 = vpack.c.b16 %v3055, %v3053
        %v3148 = vpack.c.b16 %v3058, %v3056
        %v3149 = vpack.c.b16 %v3059, %v3057
        %v3150 = vpack.c.b16 %v3062, %v3060
        %v3151 = vpack.c.b16 %v3063, %v3061
        %v3152 = vpack.c.b16 %v3066, %v3064
        %v3153 = vpack.c.b16 %v3067, %v3065
        %v3154 = vpack.c.b16 %v3070, %v3068
        %v3155 = vpack.c.b16 %v3071, %v3069
        %v3156 = vpack.c.b16 %v3074, %v3072
        %v3157 = vpack.c.b16 %v3075, %v3073
        %v3158 = vpack.c.b16 %v3078, %v3076
        %v3159 = vpack.c.b16 %v3079, %v3077
        %v3160 = vpack.c.b16 %v3082, %v3080
        %v3161 = vpack.c.b16 %v3083, %v3081
        %v3162 = vpack.c.b16 %v3086, %v3084
        %v3163 = vpack.c.b16 %v3087, %v3085
        %v3164 = vpack.c.b16 %v3090, %v3088
        %v3165 = vpack.c.b16 %v3091, %v3089
        %v3166 = vpack.c.b16 %v3094, %v3092
        %v3167 = vpack.c.b16 %v3095, %v3093
        %v3168 = vpack.c.b16 %v3098, %v3096
        %v3169 = vpack.c.b16 %v3099, %v3097
        %v3170 = vpack.c.b16 %v3102, %v3100
        %v3171 = vpack.c.b16 %v3103, %v3101
        %v3172 = vpack.c.b16 %v3106, %v3104
        %v3173 = vpack.c.b16 %v3107, %v3105
        %v3174 = vpack.c.b16 %v3110, %v3108
        %v3175 = vpack.c.b16 %v3111, %v3109
        %3240 = vmatpush.bf16.msra.mxu0 %v3126
        %3241 = vmatpush.bf16.msra.mxu0 %v3124
        %3242 = vmatpush.bf16.msra.mxu0 %v3122
        %3243 = vmatpush.bf16.msra.mxu0 %v3120
        %3244 = vmatpush.bf16.msra.mxu0 %v3118
        %3245 = vmatpush.bf16.msra.mxu0 %v3116
        %3246 = vmatpush.bf16.msra.mxu0 %v3114
        %3247 = vmatpush.bf16.msra.mxu0 %v3112
        %3248 = vmatmul.bf16.gmra.mxu0 %v2904
        %v3249 = vpop.f32.mrf.mxu0
        %v3250 = vadd.f32 0.0, %v3249
        %v3251 = vpop.f32.mrf.mxu0
        %v3252 = vadd.f32 0.0, %v3251
        %3253 = vmatmul.bf16.gmra.mxu0 %v2908
        %v3254 = vpop.f32.mrf.mxu0
        %v3255 = vadd.f32 0.0, %v3254
        %v3256 = vpop.f32.mrf.mxu0
        %v3257 = vadd.f32 0.0, %v3256
        %3258 = vdwg.mxu0
        %3259 = vmatpush.bf16.msra.mxu0 %v3142
        %3260 = vmatpush.bf16.msra.mxu0 %v3140
        %3261 = vmatpush.bf16.msra.mxu0 %v3138
        %3262 = vmatpush.bf16.msra.mxu0 %v3136
        %3263 = vmatpush.bf16.msra.mxu0 %v3134
        %3264 = vmatpush.bf16.msra.mxu0 %v3132
        %3265 = vmatpush.bf16.msra.mxu0 %v3130
        %3266 = vmatpush.bf16.msra.mxu0 %v3128
        %3267 = vmatmul.bf16.gmra.mxu0 %v2905
        %v3268 = vpop.f32.mrf.mxu0
        %v3269 = vadd.f32 %v3250, %v3268
        %v3270 = vpop.f32.mrf.mxu0
        %v3271 = vadd.f32 %v3252, %v3270
        %3272 = vmatmul.bf16.gmra.mxu0 %v2909
        %v3273 = vpop.f32.mrf.mxu0
        %v3274 = vadd.f32 %v3255, %v3273
        %v3275 = vpop.f32.mrf.mxu0
        %v3276 = vadd.f32 %v3257, %v3275
        %3277 = vdwg.mxu0
        %3278 = vmatpush.bf16.msra.mxu0 %v3158
        %3279 = vmatpush.bf16.msra.mxu0 %v3156
        %3280 = vmatpush.bf16.msra.mxu0 %v3154
        %3281 = vmatpush.bf16.msra.mxu0 %v3152
        %3282 = vmatpush.bf16.msra.mxu0 %v3150
        %3283 = vmatpush.bf16.msra.mxu0 %v3148
        %3284 = vmatpush.bf16.msra.mxu0 %v3146
        %3285 = vmatpush.bf16.msra.mxu0 %v3144
        %3286 = vmatmul.bf16.gmra.mxu0 %v2906
        %v3287 = vpop.f32.mrf.mxu0
        %v3288 = vadd.f32 %v3269, %v3287
        %v3289 = vpop.f32.mrf.mxu0
        %v3290 = vadd.f32 %v3271, %v3289
        %3291 = vmatmul.bf16.gmra.mxu0 %v2910
        %v3292 = vpop.f32.mrf.mxu0
        %v3293 = vadd.f32 %v3274, %v3292
        %v3294 = vpop.f32.mrf.mxu0
        %v3295 = vadd.f32 %v3276, %v3294
        %3296 = vdwg.mxu0
        %3297 = vmatpush.bf16.msra.mxu0 %v3174
        %3298 = vmatpush.bf16.msra.mxu0 %v3172
        %3299 = vmatpush.bf16.msra.mxu0 %v3170
        %3300 = vmatpush.bf16.msra.mxu0 %v3168
        %3301 = vmatpush.bf16.msra.mxu0 %v3166
        %3302 = vmatpush.bf16.msra.mxu0 %v3164
        %3303 = vmatpush.bf16.msra.mxu0 %v3162
        %3304 = vmatpush.bf16.msra.mxu0 %v3160
        %3305 = vmatmul.bf16.gmra.mxu0 %v2907
        %v3306 = vpop.f32.mrf.mxu0
        %v3307 = vadd.f32 %v3288, %v3306
        %v3308 = vpop.f32.mrf.mxu0
        %v3309 = vadd.f32 %v3290, %v3308
        %3310 = vmatmul.bf16.gmra.mxu0 %v2911
        %v3311 = vpop.f32.mrf.mxu0
        %v3312 = vadd.f32 %v3293, %v3311
        %v3313 = vpop.f32.mrf.mxu0
        %v3314 = vadd.f32 %v3295, %v3313
        %3315 = vdwg.mxu0
        %3316 = vmatpush.bf16.msra.mxu0 %v3127
        %3317 = vmatpush.bf16.msra.mxu0 %v3125
        %3318 = vmatpush.bf16.msra.mxu0 %v3123
        %3319 = vmatpush.bf16.msra.mxu0 %v3121
        %3320 = vmatpush.bf16.msra.mxu0 %v3119
        %3321 = vmatpush.bf16.msra.mxu0 %v3117
        %3322 = vmatpush.bf16.msra.mxu0 %v3115
        %3323 = vmatpush.bf16.msra.mxu0 %v3113
        %3324 = vmatmul.bf16.gmra.mxu0 %v2904
        %v3325 = vpop.f32.mrf.mxu0
        %v3326 = vadd.f32 0.0, %v3325
        %v3327 = vpop.f32.mrf.mxu0
        %v3328 = vadd.f32 0.0, %v3327
        %3329 = vmatmul.bf16.gmra.mxu0 %v2908
        %v3330 = vpop.f32.mrf.mxu0
        %v3331 = vadd.f32 0.0, %v3330
        %v3332 = vpop.f32.mrf.mxu0
        %v3333 = vadd.f32 0.0, %v3332
        %3334 = vdwg.mxu0
        %3335 = vmatpush.bf16.msra.mxu0 %v3143
        %3336 = vmatpush.bf16.msra.mxu0 %v3141
        %3337 = vmatpush.bf16.msra.mxu0 %v3139
        %3338 = vmatpush.bf16.msra.mxu0 %v3137
        %3339 = vmatpush.bf16.msra.mxu0 %v3135
        %3340 = vmatpush.bf16.msra.mxu0 %v3133
        %3341 = vmatpush.bf16.msra.mxu0 %v3131
        %3342 = vmatpush.bf16.msra.mxu0 %v3129
        %3343 = vmatmul.bf16.gmra.mxu0 %v2905
        %v3344 = vpop.f32.mrf.mxu0
        %v3345 = vadd.f32 %v3326, %v3344
        %v3346 = vpop.f32.mrf.mxu0
        %v3347 = vadd.f32 %v3328, %v3346
        %3348 = vmatmul.bf16.gmra.mxu0 %v2909
        %v3349 = vpop.f32.mrf.mxu0
        %v3350 = vadd.f32 %v3331, %v3349
        %v3351 = vpop.f32.mrf.mxu0
        %v3352 = vadd.f32 %v3333, %v3351
        %3353 = vdwg.mxu0
        %3354 = vmatpush.bf16.msra.mxu0 %v3159
        %3355 = vmatpush.bf16.msra.mxu0 %v3157
        %3356 = vmatpush.bf16.msra.mxu0 %v3155
        %3357 = vmatpush.bf16.msra.mxu0 %v3153
        %3358 = vmatpush.bf16.msra.mxu0 %v3151
        %3359 = vmatpush.bf16.msra.mxu0 %v3149
        %3360 = vmatpush.bf16.msra.mxu0 %v3147
        %3361 = vmatpush.bf16.msra.mxu0 %v3145
        %3362 = vmatmul.bf16.gmra.mxu0 %v2906
        %v3363 = vpop.f32.mrf.mxu0
        %v3364 = vadd.f32 %v3345, %v3363
        %v3365 = vpop.f32.mrf.mxu0
        %v3366 = vadd.f32 %v3347, %v3365
        %3367 = vmatmul.bf16.gmra.mxu0 %v2910
        %v3368 = vpop.f32.mrf.mxu0
        %v3369 = vadd.f32 %v3350, %v3368
        %v3370 = vpop.f32.mrf.mxu0
        %v3371 = vadd.f32 %v3352, %v3370
        %3372 = vdwg.mxu0
        %3373 = vmatpush.bf16.msra.mxu0 %v3175
        %3374 = vmatpush.bf16.msra.mxu0 %v3173
        %3375 = vmatpush.bf16.msra.mxu0 %v3171
        %3376 = vmatpush.bf16.msra.mxu0 %v3169
        %3377 = vmatpush.bf16.msra.mxu0 %v3167
        %3378 = vmatpush.bf16.msra.mxu0 %v3165
        %3379 = vmatpush.bf16.msra.mxu0 %v3163
        %3380 = vmatpush.bf16.msra.mxu0 %v3161
        %3381 = vmatmul.bf16.gmra.mxu0 %v2907
        %v3382 = vpop.f32.mrf.mxu0
        %v3383 = vadd.f32 %v3364, %v3382
        %v3384 = vpop.f32.mrf.mxu0
        %v3385 = vadd.f32 %v3366, %v3384
        %3386 = vmatmul.bf16.gmra.mxu0 %v2911
        %v3387 = vpop.f32.mrf.mxu0
        %v3388 = vadd.f32 %v3369, %v3387
        %v3389 = vpop.f32.mrf.mxu0
        %v3390 = vadd.f32 %v3371, %v3389
        %3391 = vdwg.mxu0
        %v3392 = vadd.f32 %v2798, %v3307
        %v3393 = vadd.f32 %v2799, %v3383
        %v3394 = vadd.f32 %v2800, %v3309
        %v3395 = vadd.f32 %v2801, %v3385
        %v3396 = vadd.f32 %v2802, %v3312
        %v3397 = vadd.f32 %v2803, %v3388
        %v3398 = vadd.f32 %v2804, %v3314
        %v3399 = vadd.f32 %v2805, %v3390
        %s3400 = scalar_lea.vmem %s366, 320 [#allocation2]
        %v3401 = vld [vmem:[%s3400] sm:$0xff]
        %v3402 = vld [vmem:[%s3400 + $0x8] sm:$0xff]
        %v3403 = vld [vmem:[%s3400 + $0x10] sm:$0xff]
        %v3404 = vld [vmem:[%s3400 + $0x18] sm:$0xff]
        %v3405 = vld [vmem:[%s3400 + $0x20] sm:$0xff]
        %v3406 = vld [vmem:[%s3400 + $0x28] sm:$0xff]
        %v3407 = vld [vmem:[%s3400 + $0x30] sm:$0xff]
        %v3408 = vld [vmem:[%s3400 + $0x38] sm:$0xff]
        %s3409 = scalar_lea.vmem %s418, 2560
        %v3410 = vld [vmem:[%s3409] sm:$0xff]
        %v3411 = vld [vmem:[%s3409 + $0x8] sm:$0xff]
        %v3412 = vld [vmem:[%s3409 + $0x10] sm:$0xff]
        %v3413 = vld [vmem:[%s3409 + $0x18] sm:$0xff]
        %v3414 = vld [vmem:[%s3409 + $0x20] sm:$0xff]
        %v3415 = vld [vmem:[%s3409 + $0x28] sm:$0xff]
        %v3416 = vld [vmem:[%s3409 + $0x30] sm:$0xff]
        %v3417 = vld [vmem:[%s3409 + $0x38] sm:$0xff]
        %v3418 = vld [vmem:[%s3409 + $0x40] sm:$0xff]
        %v3419 = vld [vmem:[%s3409 + $0x48] sm:$0xff]
        %v3420 = vld [vmem:[%s3409 + $0x50] sm:$0xff]
        %v3421 = vld [vmem:[%s3409 + $0x58] sm:$0xff]
        %v3422 = vld [vmem:[%s3409 + $0x60] sm:$0xff]
        %v3423 = vld [vmem:[%s3409 + $0x68] sm:$0xff]
        %v3424 = vld [vmem:[%s3409 + $0x70] sm:$0xff]
        %v3425 = vld [vmem:[%s3409 + $0x78] sm:$0xff]
        %v3426 = vld [vmem:[%s3409 + $0x80] sm:$0xff]
        %v3427 = vld [vmem:[%s3409 + $0x88] sm:$0xff]
        %v3428 = vld [vmem:[%s3409 + $0x90] sm:$0xff]
        %v3429 = vld [vmem:[%s3409 + $0x98] sm:$0xff]
        %v3430 = vld [vmem:[%s3409 + $0xa0] sm:$0xff]
        %v3431 = vld [vmem:[%s3409 + $0xa8] sm:$0xff]
        %v3432 = vld [vmem:[%s3409 + $0xb0] sm:$0xff]
        %v3433 = vld [vmem:[%s3409 + $0xb8] sm:$0xff]
        %v3434 = vld [vmem:[%s3409 + $0xc0] sm:$0xff]
        %v3435 = vld [vmem:[%s3409 + $0xc8] sm:$0xff]
        %v3436 = vld [vmem:[%s3409 + $0xd0] sm:$0xff]
        %v3437 = vld [vmem:[%s3409 + $0xd8] sm:$0xff]
        %v3438 = vld [vmem:[%s3409 + $0xe0] sm:$0xff]
        %v3439 = vld [vmem:[%s3409 + $0xe8] sm:$0xff]
        %v3440 = vld [vmem:[%s3409 + $0xf0] sm:$0xff]
        %v3441 = vld [vmem:[%s3409 + $0xf8] sm:$0xff]
        %v3442 = vld [vmem:[%s3409 + $0x100] sm:$0xff]
        %v3443 = vld [vmem:[%s3409 + $0x108] sm:$0xff]
        %v3444 = vld [vmem:[%s3409 + $0x110] sm:$0xff]
        %v3445 = vld [vmem:[%s3409 + $0x118] sm:$0xff]
        %v3446 = vld [vmem:[%s3409 + $0x120] sm:$0xff]
        %v3447 = vld [vmem:[%s3409 + $0x128] sm:$0xff]
        %v3448 = vld [vmem:[%s3409 + $0x130] sm:$0xff]
        %v3449 = vld [vmem:[%s3409 + $0x138] sm:$0xff]
        %v3450 = vld [vmem:[%s3409 + $0x140] sm:$0xff]
        %v3451 = vld [vmem:[%s3409 + $0x148] sm:$0xff]
        %v3452 = vld [vmem:[%s3409 + $0x150] sm:$0xff]
        %v3453 = vld [vmem:[%s3409 + $0x158] sm:$0xff]
        %v3454 = vld [vmem:[%s3409 + $0x160] sm:$0xff]
        %v3455 = vld [vmem:[%s3409 + $0x168] sm:$0xff]
        %v3456 = vld [vmem:[%s3409 + $0x170] sm:$0xff]
        %v3457 = vld [vmem:[%s3409 + $0x178] sm:$0xff]
        %v3458 = vld [vmem:[%s3409 + $0x180] sm:$0xff]
        %v3459 = vld [vmem:[%s3409 + $0x188] sm:$0xff]
        %v3460 = vld [vmem:[%s3409 + $0x190] sm:$0xff]
        %v3461 = vld [vmem:[%s3409 + $0x198] sm:$0xff]
        %v3462 = vld [vmem:[%s3409 + $0x1a0] sm:$0xff]
        %v3463 = vld [vmem:[%s3409 + $0x1a8] sm:$0xff]
        %v3464 = vld [vmem:[%s3409 + $0x1b0] sm:$0xff]
        %v3465 = vld [vmem:[%s3409 + $0x1b8] sm:$0xff]
        %v3466 = vld [vmem:[%s3409 + $0x1c0] sm:$0xff]
        %v3467 = vld [vmem:[%s3409 + $0x1c8] sm:$0xff]
        %v3468 = vld [vmem:[%s3409 + $0x1d0] sm:$0xff]
        %v3469 = vld [vmem:[%s3409 + $0x1d8] sm:$0xff]
        %v3470 = vld [vmem:[%s3409 + $0x1e0] sm:$0xff]
        %v3471 = vld [vmem:[%s3409 + $0x1e8] sm:$0xff]
        %v3472 = vld [vmem:[%s3409 + $0x1f0] sm:$0xff]
        %v3473 = vld [vmem:[%s3409 + $0x1f8] sm:$0xff]
        %v3482 = vunpack.c.l.b16 %v3401
        %v3483 = vunpack.c.h.b16 %v3401
        %v3484 = vunpack.c.l.b16 %v3402
        %v3485 = vunpack.c.h.b16 %v3402
        %v3486 = vunpack.c.l.b16 %v3403
        %v3487 = vunpack.c.h.b16 %v3403
        %v3488 = vunpack.c.l.b16 %v3404
        %v3489 = vunpack.c.h.b16 %v3404
        %v3490 = vunpack.c.l.b16 %v3405
        %v3491 = vunpack.c.h.b16 %v3405
        %v3492 = vunpack.c.l.b16 %v3406
        %v3493 = vunpack.c.h.b16 %v3406
        %v3494 = vunpack.c.l.b16 %v3407
        %v3495 = vunpack.c.h.b16 %v3407
        %v3496 = vunpack.c.l.b16 %v3408
        %v3497 = vunpack.c.h.b16 %v3408
        %v3498 = vpack.c.b16 %v3486, %v3482
        %v3499 = vpack.c.b16 %v3487, %v3483
        %v3500 = vpack.c.b16 %v3488, %v3484
        %v3501 = vpack.c.b16 %v3489, %v3485
        %v3502 = vpack.c.b16 %v3494, %v3490
        %v3503 = vpack.c.b16 %v3495, %v3491
        %v3504 = vpack.c.b16 %v3496, %v3492
        %v3505 = vpack.c.b16 %v3497, %v3493
        %v3578 = vunpack.c.l.b16 %v3410
        %v3579 = vunpack.c.h.b16 %v3410
        %v3580 = vunpack.c.l.b16 %v3411
        %v3581 = vunpack.c.h.b16 %v3411
        %v3582 = vunpack.c.l.b16 %v3412
        %v3583 = vunpack.c.h.b16 %v3412
        %v3584 = vunpack.c.l.b16 %v3413
        %v3585 = vunpack.c.h.b16 %v3413
        %v3586 = vunpack.c.l.b16 %v3414
        %v3587 = vunpack.c.h.b16 %v3414
        %v3588 = vunpack.c.l.b16 %v3415
        %v3589 = vunpack.c.h.b16 %v3415
        %v3590 = vunpack.c.l.b16 %v3416
        %v3591 = vunpack.c.h.b16 %v3416
        %v3592 = vunpack.c.l.b16 %v3417
        %v3593 = vunpack.c.h.b16 %v3417
        %v3594 = vunpack.c.l.b16 %v3418
        %v3595 = vunpack.c.h.b16 %v3418
        %v3596 = vunpack.c.l.b16 %v3419
        %v3597 = vunpack.c.h.b16 %v3419
        %v3598 = vunpack.c.l.b16 %v3420
        %v3599 = vunpack.c.h.b16 %v3420
        %v3600 = vunpack.c.l.b16 %v3421
        %v3601 = vunpack.c.h.b16 %v3421
        %v3602 = vunpack.c.l.b16 %v3422
        %v3603 = vunpack.c.h.b16 %v3422
        %v3604 = vunpack.c.l.b16 %v3423
        %v3605 = vunpack.c.h.b16 %v3423
        %v3606 = vunpack.c.l.b16 %v3424
        %v3607 = vunpack.c.h.b16 %v3424
        %v3608 = vunpack.c.l.b16 %v3425
        %v3609 = vunpack.c.h.b16 %v3425
        %v3610 = vunpack.c.l.b16 %v3426
        %v3611 = vunpack.c.h.b16 %v3426
        %v3612 = vunpack.c.l.b16 %v3427
        %v3613 = vunpack.c.h.b16 %v3427
        %v3614 = vunpack.c.l.b16 %v3428
        %v3615 = vunpack.c.h.b16 %v3428
        %v3616 = vunpack.c.l.b16 %v3429
        %v3617 = vunpack.c.h.b16 %v3429
        %v3618 = vunpack.c.l.b16 %v3430
        %v3619 = vunpack.c.h.b16 %v3430
        %v3620 = vunpack.c.l.b16 %v3431
        %v3621 = vunpack.c.h.b16 %v3431
        %v3622 = vunpack.c.l.b16 %v3432
        %v3623 = vunpack.c.h.b16 %v3432
        %v3624 = vunpack.c.l.b16 %v3433
        %v3625 = vunpack.c.h.b16 %v3433
        %v3626 = vunpack.c.l.b16 %v3434
        %v3627 = vunpack.c.h.b16 %v3434
        %v3628 = vunpack.c.l.b16 %v3435
        %v3629 = vunpack.c.h.b16 %v3435
        %v3630 = vunpack.c.l.b16 %v3436
        %v3631 = vunpack.c.h.b16 %v3436
        %v3632 = vunpack.c.l.b16 %v3437
        %v3633 = vunpack.c.h.b16 %v3437
        %v3634 = vunpack.c.l.b16 %v3438
        %v3635 = vunpack.c.h.b16 %v3438
        %v3636 = vunpack.c.l.b16 %v3439
        %v3637 = vunpack.c.h.b16 %v3439
        %v3638 = vunpack.c.l.b16 %v3440
        %v3639 = vunpack.c.h.b16 %v3440
        %v3640 = vunpack.c.l.b16 %v3441
        %v3641 = vunpack.c.h.b16 %v3441
        %v3642 = vunpack.c.l.b16 %v3442
        %v3643 = vunpack.c.h.b16 %v3442
        %v3644 = vunpack.c.l.b16 %v3443
        %v3645 = vunpack.c.h.b16 %v3443
        %v3646 = vunpack.c.l.b16 %v3444
        %v3647 = vunpack.c.h.b16 %v3444
        %v3648 = vunpack.c.l.b16 %v3445
        %v3649 = vunpack.c.h.b16 %v3445
        %v3650 = vunpack.c.l.b16 %v3446
        %v3651 = vunpack.c.h.b16 %v3446
        %v3652 = vunpack.c.l.b16 %v3447
        %v3653 = vunpack.c.h.b16 %v3447
        %v3654 = vunpack.c.l.b16 %v3448
        %v3655 = vunpack.c.h.b16 %v3448
        %v3656 = vunpack.c.l.b16 %v3449
        %v3657 = vunpack.c.h.b16 %v3449
        %v3658 = vunpack.c.l.b16 %v3450
        %v3659 = vunpack.c.h.b16 %v3450
        %v3660 = vunpack.c.l.b16 %v3451
        %v3661 = vunpack.c.h.b16 %v3451
        %v3662 = vunpack.c.l.b16 %v3452
        %v3663 = vunpack.c.h.b16 %v3452
        %v3664 = vunpack.c.l.b16 %v3453
        %v3665 = vunpack.c.h.b16 %v3453
        %v3666 = vunpack.c.l.b16 %v3454
        %v3667 = vunpack.c.h.b16 %v3454
        %v3668 = vunpack.c.l.b16 %v3455
        %v3669 = vunpack.c.h.b16 %v3455
        %v3670 = vunpack.c.l.b16 %v3456
        %v3671 = vunpack.c.h.b16 %v3456
        %v3672 = vunpack.c.l.b16 %v3457
        %v3673 = vunpack.c.h.b16 %v3457
        %v3674 = vunpack.c.l.b16 %v3458
        %v3675 = vunpack.c.h.b16 %v3458
        %v3676 = vunpack.c.l.b16 %v3459
        %v3677 = vunpack.c.h.b16 %v3459
        %v3678 = vunpack.c.l.b16 %v3460
        %v3679 = vunpack.c.h.b16 %v3460
        %v3680 = vunpack.c.l.b16 %v3461
        %v3681 = vunpack.c.h.b16 %v3461
        %v3682 = vunpack.c.l.b16 %v3462
        %v3683 = vunpack.c.h.b16 %v3462
        %v3684 = vunpack.c.l.b16 %v3463
        %v3685 = vunpack.c.h.b16 %v3463
        %v3686 = vunpack.c.l.b16 %v3464
        %v3687 = vunpack.c.h.b16 %v3464
        %v3688 = vunpack.c.l.b16 %v3465
        %v3689 = vunpack.c.h.b16 %v3465
        %v3690 = vunpack.c.l.b16 %v3466
        %v3691 = vunpack.c.h.b16 %v3466
        %v3692 = vunpack.c.l.b16 %v3467
        %v3693 = vunpack.c.h.b16 %v3467
        %v3694 = vunpack.c.l.b16 %v3468
        %v3695 = vunpack.c.h.b16 %v3468
        %v3696 = vunpack.c.l.b16 %v3469
        %v3697 = vunpack.c.h.b16 %v3469
        %v3698 = vunpack.c.l.b16 %v3470
        %v3699 = vunpack.c.h.b16 %v3470
        %v3700 = vunpack.c.l.b16 %v3471
        %v3701 = vunpack.c.h.b16 %v3471
        %v3702 = vunpack.c.l.b16 %v3472
        %v3703 = vunpack.c.h.b16 %v3472
        %v3704 = vunpack.c.l.b16 %v3473
        %v3705 = vunpack.c.h.b16 %v3473
        %v3706 = vpack.c.b16 %v3580, %v3578
        %v3707 = vpack.c.b16 %v3581, %v3579
        %v3708 = vpack.c.b16 %v3584, %v3582
        %v3709 = vpack.c.b16 %v3585, %v3583
        %v3710 = vpack.c.b16 %v3588, %v3586
        %v3711 = vpack.c.b16 %v3589, %v3587
        %v3712 = vpack.c.b16 %v3592, %v3590
        %v3713 = vpack.c.b16 %v3593, %v3591
        %v3714 = vpack.c.b16 %v3596, %v3594
        %v3715 = vpack.c.b16 %v3597, %v3595
        %v3716 = vpack.c.b16 %v3600, %v3598
        %v3717 = vpack.c.b16 %v3601, %v3599
        %v3718 = vpack.c.b16 %v3604, %v3602
        %v3719 = vpack.c.b16 %v3605, %v3603
        %v3720 = vpack.c.b16 %v3608, %v3606
        %v3721 = vpack.c.b16 %v3609, %v3607
        %v3722 = vpack.c.b16 %v3612, %v3610
        %v3723 = vpack.c.b16 %v3613, %v3611
        %v3724 = vpack.c.b16 %v3616, %v3614
        %v3725 = vpack.c.b16 %v3617, %v3615
        %v3726 = vpack.c.b16 %v3620, %v3618
        %v3727 = vpack.c.b16 %v3621, %v3619
        %v3728 = vpack.c.b16 %v3624, %v3622
        %v3729 = vpack.c.b16 %v3625, %v3623
        %v3730 = vpack.c.b16 %v3628, %v3626
        %v3731 = vpack.c.b16 %v3629, %v3627
        %v3732 = vpack.c.b16 %v3632, %v3630
        %v3733 = vpack.c.b16 %v3633, %v3631
        %v3734 = vpack.c.b16 %v3636, %v3634
        %v3735 = vpack.c.b16 %v3637, %v3635
        %v3736 = vpack.c.b16 %v3640, %v3638
        %v3737 = vpack.c.b16 %v3641, %v3639
        %v3738 = vpack.c.b16 %v3644, %v3642
        %v3739 = vpack.c.b16 %v3645, %v3643
        %v3740 = vpack.c.b16 %v3648, %v3646
        %v3741 = vpack.c.b16 %v3649, %v3647
        %v3742 = vpack.c.b16 %v3652, %v3650
        %v3743 = vpack.c.b16 %v3653, %v3651
        %v3744 = vpack.c.b16 %v3656, %v3654
        %v3745 = vpack.c.b16 %v3657, %v3655
        %v3746 = vpack.c.b16 %v3660, %v3658
        %v3747 = vpack.c.b16 %v3661, %v3659
        %v3748 = vpack.c.b16 %v3664, %v3662
        %v3749 = vpack.c.b16 %v3665, %v3663
        %v3750 = vpack.c.b16 %v3668, %v3666
        %v3751 = vpack.c.b16 %v3669, %v3667
        %v3752 = vpack.c.b16 %v3672, %v3670
        %v3753 = vpack.c.b16 %v3673, %v3671
        %v3754 = vpack.c.b16 %v3676, %v3674
        %v3755 = vpack.c.b16 %v3677, %v3675
        %v3756 = vpack.c.b16 %v3680, %v3678
        %v3757 = vpack.c.b16 %v3681, %v3679
        %v3758 = vpack.c.b16 %v3684, %v3682
        %v3759 = vpack.c.b16 %v3685, %v3683
        %v3760 = vpack.c.b16 %v3688, %v3686
        %v3761 = vpack.c.b16 %v3689, %v3687
        %v3762 = vpack.c.b16 %v3692, %v3690
        %v3763 = vpack.c.b16 %v3693, %v3691
        %v3764 = vpack.c.b16 %v3696, %v3694
        %v3765 = vpack.c.b16 %v3697, %v3695
        %v3766 = vpack.c.b16 %v3700, %v3698
        %v3767 = vpack.c.b16 %v3701, %v3699
        %v3768 = vpack.c.b16 %v3704, %v3702
        %v3769 = vpack.c.b16 %v3705, %v3703
        %3834 = vmatpush.bf16.msra.mxu0 %v3720
        %3835 = vmatpush.bf16.msra.mxu0 %v3718
        %3836 = vmatpush.bf16.msra.mxu0 %v3716
        %3837 = vmatpush.bf16.msra.mxu0 %v3714
        %3838 = vmatpush.bf16.msra.mxu0 %v3712
        %3839 = vmatpush.bf16.msra.mxu0 %v3710
        %3840 = vmatpush.bf16.msra.mxu0 %v3708
        %3841 = vmatpush.bf16.msra.mxu0 %v3706
        %3842 = vmatmul.bf16.gmra.mxu0 %v3498
        %v3843 = vpop.f32.mrf.mxu0
        %v3844 = vadd.f32 0.0, %v3843
        %v3845 = vpop.f32.mrf.mxu0
        %v3846 = vadd.f32 0.0, %v3845
        %3847 = vmatmul.bf16.gmra.mxu0 %v3502
        %v3848 = vpop.f32.mrf.mxu0
        %v3849 = vadd.f32 0.0, %v3848
        %v3850 = vpop.f32.mrf.mxu0
        %v3851 = vadd.f32 0.0, %v3850
        %3852 = vdwg.mxu0
        %3853 = vmatpush.bf16.msra.mxu0 %v3736
        %3854 = vmatpush.bf16.msra.mxu0 %v3734
        %3855 = vmatpush.bf16.msra.mxu0 %v3732
        %3856 = vmatpush.bf16.msra.mxu0 %v3730
        %3857 = vmatpush.bf16.msra.mxu0 %v3728
        %3858 = vmatpush.bf16.msra.mxu0 %v3726
        %3859 = vmatpush.bf16.msra.mxu0 %v3724
        %3860 = vmatpush.bf16.msra.mxu0 %v3722
        %3861 = vmatmul.bf16.gmra.mxu0 %v3499
        %v3862 = vpop.f32.mrf.mxu0
        %v3863 = vadd.f32 %v3844, %v3862
        %v3864 = vpop.f32.mrf.mxu0
        %v3865 = vadd.f32 %v3846, %v3864
        %3866 = vmatmul.bf16.gmra.mxu0 %v3503
        %v3867 = vpop.f32.mrf.mxu0
        %v3868 = vadd.f32 %v3849, %v3867
        %v3869 = vpop.f32.mrf.mxu0
        %v3870 = vadd.f32 %v3851, %v3869
        %3871 = vdwg.mxu0
        %3872 = vmatpush.bf16.msra.mxu0 %v3752
        %3873 = vmatpush.bf16.msra.mxu0 %v3750
        %3874 = vmatpush.bf16.msra.mxu0 %v3748
        %3875 = vmatpush.bf16.msra.mxu0 %v3746
        %3876 = vmatpush.bf16.msra.mxu0 %v3744
        %3877 = vmatpush.bf16.msra.mxu0 %v3742
        %3878 = vmatpush.bf16.msra.mxu0 %v3740
        %3879 = vmatpush.bf16.msra.mxu0 %v3738
        %3880 = vmatmul.bf16.gmra.mxu0 %v3500
        %v3881 = vpop.f32.mrf.mxu0
        %v3882 = vadd.f32 %v3863, %v3881
        %v3883 = vpop.f32.mrf.mxu0
        %v3884 = vadd.f32 %v3865, %v3883
        %3885 = vmatmul.bf16.gmra.mxu0 %v3504
        %v3886 = vpop.f32.mrf.mxu0
        %v3887 = vadd.f32 %v3868, %v3886
        %v3888 = vpop.f32.mrf.mxu0
        %v3889 = vadd.f32 %v3870, %v3888
        %3890 = vdwg.mxu0
        %3891 = vmatpush.bf16.msra.mxu0 %v3768
        %3892 = vmatpush.bf16.msra.mxu0 %v3766
        %3893 = vmatpush.bf16.msra.mxu0 %v3764
        %3894 = vmatpush.bf16.msra.mxu0 %v3762
        %3895 = vmatpush.bf16.msra.mxu0 %v3760
        %3896 = vmatpush.bf16.msra.mxu0 %v3758
        %3897 = vmatpush.bf16.msra.mxu0 %v3756
        %3898 = vmatpush.bf16.msra.mxu0 %v3754
        %3899 = vmatmul.bf16.gmra.mxu0 %v3501
        %v3900 = vpop.f32.mrf.mxu0
        %v3901 = vadd.f32 %v3882, %v3900
        %v3902 = vpop.f32.mrf.mxu0
        %v3903 = vadd.f32 %v3884, %v3902
        %3904 = vmatmul.bf16.gmra.mxu0 %v3505
        %v3905 = vpop.f32.mrf.mxu0
        %v3906 = vadd.f32 %v3887, %v3905
        %v3907 = vpop.f32.mrf.mxu0
        %v3908 = vadd.f32 %v3889, %v3907
        %3909 = vdwg.mxu0
        %3910 = vmatpush.bf16.msra.mxu0 %v3721
        %3911 = vmatpush.bf16.msra.mxu0 %v3719
        %3912 = vmatpush.bf16.msra.mxu0 %v3717
        %3913 = vmatpush.bf16.msra.mxu0 %v3715
        %3914 = vmatpush.bf16.msra.mxu0 %v3713
        %3915 = vmatpush.bf16.msra.mxu0 %v3711
        %3916 = vmatpush.bf16.msra.mxu0 %v3709
        %3917 = vmatpush.bf16.msra.mxu0 %v3707
        %3918 = vmatmul.bf16.gmra.mxu0 %v3498
        %v3919 = vpop.f32.mrf.mxu0
        %v3920 = vadd.f32 0.0, %v3919
        %v3921 = vpop.f32.mrf.mxu0
        %v3922 = vadd.f32 0.0, %v3921
        %3923 = vmatmul.bf16.gmra.mxu0 %v3502
        %v3924 = vpop.f32.mrf.mxu0
        %v3925 = vadd.f32 0.0, %v3924
        %v3926 = vpop.f32.mrf.mxu0
        %v3927 = vadd.f32 0.0, %v3926
        %3928 = vdwg.mxu0
        %3929 = vmatpush.bf16.msra.mxu0 %v3737
        %3930 = vmatpush.bf16.msra.mxu0 %v3735
        %3931 = vmatpush.bf16.msra.mxu0 %v3733
        %3932 = vmatpush.bf16.msra.mxu0 %v3731
        %3933 = vmatpush.bf16.msra.mxu0 %v3729
        %3934 = vmatpush.bf16.msra.mxu0 %v3727
        %3935 = vmatpush.bf16.msra.mxu0 %v3725
        %3936 = vmatpush.bf16.msra.mxu0 %v3723
        %3937 = vmatmul.bf16.gmra.mxu0 %v3499
        %v3938 = vpop.f32.mrf.mxu0
        %v3939 = vadd.f32 %v3920, %v3938
        %v3940 = vpop.f32.mrf.mxu0
        %v3941 = vadd.f32 %v3922, %v3940
        %3942 = vmatmul.bf16.gmra.mxu0 %v3503
        %v3943 = vpop.f32.mrf.mxu0
        %v3944 = vadd.f32 %v3925, %v3943
        %v3945 = vpop.f32.mrf.mxu0
        %v3946 = vadd.f32 %v3927, %v3945
        %3947 = vdwg.mxu0
        %3948 = vmatpush.bf16.msra.mxu0 %v3753
        %3949 = vmatpush.bf16.msra.mxu0 %v3751
        %3950 = vmatpush.bf16.msra.mxu0 %v3749
        %3951 = vmatpush.bf16.msra.mxu0 %v3747
        %3952 = vmatpush.bf16.msra.mxu0 %v3745
        %3953 = vmatpush.bf16.msra.mxu0 %v3743
        %3954 = vmatpush.bf16.msra.mxu0 %v3741
        %3955 = vmatpush.bf16.msra.mxu0 %v3739
        %3956 = vmatmul.bf16.gmra.mxu0 %v3500
        %v3957 = vpop.f32.mrf.mxu0
        %v3958 = vadd.f32 %v3939, %v3957
        %v3959 = vpop.f32.mrf.mxu0
        %v3960 = vadd.f32 %v3941, %v3959
        %3961 = vmatmul.bf16.gmra.mxu0 %v3504
        %v3962 = vpop.f32.mrf.mxu0
        %v3963 = vadd.f32 %v3944, %v3962
        %v3964 = vpop.f32.mrf.mxu0
        %v3965 = vadd.f32 %v3946, %v3964
        %3966 = vdwg.mxu0
        %3967 = vmatpush.bf16.msra.mxu0 %v3769
        %3968 = vmatpush.bf16.msra.mxu0 %v3767
        %3969 = vmatpush.bf16.msra.mxu0 %v3765
        %3970 = vmatpush.bf16.msra.mxu0 %v3763
        %3971 = vmatpush.bf16.msra.mxu0 %v3761
        %3972 = vmatpush.bf16.msra.mxu0 %v3759
        %3973 = vmatpush.bf16.msra.mxu0 %v3757
        %3974 = vmatpush.bf16.msra.mxu0 %v3755
        %3975 = vmatmul.bf16.gmra.mxu0 %v3501
        %v3976 = vpop.f32.mrf.mxu0
        %v3977 = vadd.f32 %v3958, %v3976
        %v3978 = vpop.f32.mrf.mxu0
        %v3979 = vadd.f32 %v3960, %v3978
        %3980 = vmatmul.bf16.gmra.mxu0 %v3505
        %v3981 = vpop.f32.mrf.mxu0
        %v3982 = vadd.f32 %v3963, %v3981
        %v3983 = vpop.f32.mrf.mxu0
        %v3984 = vadd.f32 %v3965, %v3983
        %3985 = vdwg.mxu0
        %v3986 = vadd.f32 %v3392, %v3901
        %v3987 = vadd.f32 %v3393, %v3977
        %v3988 = vadd.f32 %v3394, %v3903
        %v3989 = vadd.f32 %v3395, %v3979
        %v3990 = vadd.f32 %v3396, %v3906
        %v3991 = vadd.f32 %v3397, %v3982
        %v3992 = vadd.f32 %v3398, %v3908
        %v3993 = vadd.f32 %v3399, %v3984
        %s3994 = scalar_lea.vmem %s366, 384 [#allocation2]
        %v3995 = vld [vmem:[%s3994] sm:$0xff]
        %v3996 = vld [vmem:[%s3994 + $0x8] sm:$0xff]
        %v3997 = vld [vmem:[%s3994 + $0x10] sm:$0xff]
        %v3998 = vld [vmem:[%s3994 + $0x18] sm:$0xff]
        %v3999 = vld [vmem:[%s3994 + $0x20] sm:$0xff]
        %v4000 = vld [vmem:[%s3994 + $0x28] sm:$0xff]
        %v4001 = vld [vmem:[%s3994 + $0x30] sm:$0xff]
        %v4002 = vld [vmem:[%s3994 + $0x38] sm:$0xff]
        %s4003 = scalar_lea.vmem %s418, 3072
        %v4004 = vld [vmem:[%s4003] sm:$0xff]
        %v4005 = vld [vmem:[%s4003 + $0x8] sm:$0xff]
        %v4006 = vld [vmem:[%s4003 + $0x10] sm:$0xff]
        %v4007 = vld [vmem:[%s4003 + $0x18] sm:$0xff]
        %v4008 = vld [vmem:[%s4003 + $0x20] sm:$0xff]
        %v4009 = vld [vmem:[%s4003 + $0x28] sm:$0xff]
        %v4010 = vld [vmem:[%s4003 + $0x30] sm:$0xff]
        %v4011 = vld [vmem:[%s4003 + $0x38] sm:$0xff]
        %v4012 = vld [vmem:[%s4003 + $0x40] sm:$0xff]
        %v4013 = vld [vmem:[%s4003 + $0x48] sm:$0xff]
        %v4014 = vld [vmem:[%s4003 + $0x50] sm:$0xff]
        %v4015 = vld [vmem:[%s4003 + $0x58] sm:$0xff]
        %v4016 = vld [vmem:[%s4003 + $0x60] sm:$0xff]
        %v4017 = vld [vmem:[%s4003 + $0x68] sm:$0xff]
        %v4018 = vld [vmem:[%s4003 + $0x70] sm:$0xff]
        %v4019 = vld [vmem:[%s4003 + $0x78] sm:$0xff]
        %v4020 = vld [vmem:[%s4003 + $0x80] sm:$0xff]
        %v4021 = vld [vmem:[%s4003 + $0x88] sm:$0xff]
        %v4022 = vld [vmem:[%s4003 + $0x90] sm:$0xff]
        %v4023 = vld [vmem:[%s4003 + $0x98] sm:$0xff]
        %v4024 = vld [vmem:[%s4003 + $0xa0] sm:$0xff]
        %v4025 = vld [vmem:[%s4003 + $0xa8] sm:$0xff]
        %v4026 = vld [vmem:[%s4003 + $0xb0] sm:$0xff]
        %v4027 = vld [vmem:[%s4003 + $0xb8] sm:$0xff]
        %v4028 = vld [vmem:[%s4003 + $0xc0] sm:$0xff]
        %v4029 = vld [vmem:[%s4003 + $0xc8] sm:$0xff]
        %v4030 = vld [vmem:[%s4003 + $0xd0] sm:$0xff]
        %v4031 = vld [vmem:[%s4003 + $0xd8] sm:$0xff]
        %v4032 = vld [vmem:[%s4003 + $0xe0] sm:$0xff]
        %v4033 = vld [vmem:[%s4003 + $0xe8] sm:$0xff]
        %v4034 = vld [vmem:[%s4003 + $0xf0] sm:$0xff]
        %v4035 = vld [vmem:[%s4003 + $0xf8] sm:$0xff]
        %v4036 = vld [vmem:[%s4003 + $0x100] sm:$0xff]
        %v4037 = vld [vmem:[%s4003 + $0x108] sm:$0xff]
        %v4038 = vld [vmem:[%s4003 + $0x110] sm:$0xff]
        %v4039 = vld [vmem:[%s4003 + $0x118] sm:$0xff]
        %v4040 = vld [vmem:[%s4003 + $0x120] sm:$0xff]
        %v4041 = vld [vmem:[%s4003 + $0x128] sm:$0xff]
        %v4042 = vld [vmem:[%s4003 + $0x130] sm:$0xff]
        %v4043 = vld [vmem:[%s4003 + $0x138] sm:$0xff]
        %v4044 = vld [vmem:[%s4003 + $0x140] sm:$0xff]
        %v4045 = vld [vmem:[%s4003 + $0x148] sm:$0xff]
        %v4046 = vld [vmem:[%s4003 + $0x150] sm:$0xff]
        %v4047 = vld [vmem:[%s4003 + $0x158] sm:$0xff]
        %v4048 = vld [vmem:[%s4003 + $0x160] sm:$0xff]
        %v4049 = vld [vmem:[%s4003 + $0x168] sm:$0xff]
        %v4050 = vld [vmem:[%s4003 + $0x170] sm:$0xff]
        %v4051 = vld [vmem:[%s4003 + $0x178] sm:$0xff]
        %v4052 = vld [vmem:[%s4003 + $0x180] sm:$0xff]
        %v4053 = vld [vmem:[%s4003 + $0x188] sm:$0xff]
        %v4054 = vld [vmem:[%s4003 + $0x190] sm:$0xff]
        %v4055 = vld [vmem:[%s4003 + $0x198] sm:$0xff]
        %v4056 = vld [vmem:[%s4003 + $0x1a0] sm:$0xff]
        %v4057 = vld [vmem:[%s4003 + $0x1a8] sm:$0xff]
        %v4058 = vld [vmem:[%s4003 + $0x1b0] sm:$0xff]
        %v4059 = vld [vmem:[%s4003 + $0x1b8] sm:$0xff]
        %v4060 = vld [vmem:[%s4003 + $0x1c0] sm:$0xff]
        %v4061 = vld [vmem:[%s4003 + $0x1c8] sm:$0xff]
        %v4062 = vld [vmem:[%s4003 + $0x1d0] sm:$0xff]
        %v4063 = vld [vmem:[%s4003 + $0x1d8] sm:$0xff]
        %v4064 = vld [vmem:[%s4003 + $0x1e0] sm:$0xff]
        %v4065 = vld [vmem:[%s4003 + $0x1e8] sm:$0xff]
        %v4066 = vld [vmem:[%s4003 + $0x1f0] sm:$0xff]
        %v4067 = vld [vmem:[%s4003 + $0x1f8] sm:$0xff]
        %v4076 = vunpack.c.l.b16 %v3995
        %v4077 = vunpack.c.h.b16 %v3995
        %v4078 = vunpack.c.l.b16 %v3996
        %v4079 = vunpack.c.h.b16 %v3996
        %v4080 = vunpack.c.l.b16 %v3997
        %v4081 = vunpack.c.h.b16 %v3997
        %v4082 = vunpack.c.l.b16 %v3998
        %v4083 = vunpack.c.h.b16 %v3998
        %v4084 = vunpack.c.l.b16 %v3999
        %v4085 = vunpack.c.h.b16 %v3999
        %v4086 = vunpack.c.l.b16 %v4000
        %v4087 = vunpack.c.h.b16 %v4000
        %v4088 = vunpack.c.l.b16 %v4001
        %v4089 = vunpack.c.h.b16 %v4001
        %v4090 = vunpack.c.l.b16 %v4002
        %v4091 = vunpack.c.h.b16 %v4002
        %v4092 = vpack.c.b16 %v4080, %v4076
        %v4093 = vpack.c.b16 %v4081, %v4077
        %v4094 = vpack.c.b16 %v4082, %v4078
        %v4095 = vpack.c.b16 %v4083, %v4079
        %v4096 = vpack.c.b16 %v4088, %v4084
        %v4097 = vpack.c.b16 %v4089, %v4085
        %v4098 = vpack.c.b16 %v4090, %v4086
        %v4099 = vpack.c.b16 %v4091, %v4087
        %v4172 = vunpack.c.l.b16 %v4004
        %v4173 = vunpack.c.h.b16 %v4004
        %v4174 = vunpack.c.l.b16 %v4005
        %v4175 = vunpack.c.h.b16 %v4005
        %v4176 = vunpack.c.l.b16 %v4006
        %v4177 = vunpack.c.h.b16 %v4006
        %v4178 = vunpack.c.l.b16 %v4007
        %v4179 = vunpack.c.h.b16 %v4007
        %v4180 = vunpack.c.l.b16 %v4008
        %v4181 = vunpack.c.h.b16 %v4008
        %v4182 = vunpack.c.l.b16 %v4009
        %v4183 = vunpack.c.h.b16 %v4009
        %v4184 = vunpack.c.l.b16 %v4010
        %v4185 = vunpack.c.h.b16 %v4010
        %v4186 = vunpack.c.l.b16 %v4011
        %v4187 = vunpack.c.h.b16 %v4011
        %v4188 = vunpack.c.l.b16 %v4012
        %v4189 = vunpack.c.h.b16 %v4012
        %v4190 = vunpack.c.l.b16 %v4013
        %v4191 = vunpack.c.h.b16 %v4013
        %v4192 = vunpack.c.l.b16 %v4014
        %v4193 = vunpack.c.h.b16 %v4014
        %v4194 = vunpack.c.l.b16 %v4015
        %v4195 = vunpack.c.h.b16 %v4015
        %v4196 = vunpack.c.l.b16 %v4016
        %v4197 = vunpack.c.h.b16 %v4016
        %v4198 = vunpack.c.l.b16 %v4017
        %v4199 = vunpack.c.h.b16 %v4017
        %v4200 = vunpack.c.l.b16 %v4018
        %v4201 = vunpack.c.h.b16 %v4018
        %v4202 = vunpack.c.l.b16 %v4019
        %v4203 = vunpack.c.h.b16 %v4019
        %v4204 = vunpack.c.l.b16 %v4020
        %v4205 = vunpack.c.h.b16 %v4020
        %v4206 = vunpack.c.l.b16 %v4021
        %v4207 = vunpack.c.h.b16 %v4021
        %v4208 = vunpack.c.l.b16 %v4022
        %v4209 = vunpack.c.h.b16 %v4022
        %v4210 = vunpack.c.l.b16 %v4023
        %v4211 = vunpack.c.h.b16 %v4023
        %v4212 = vunpack.c.l.b16 %v4024
        %v4213 = vunpack.c.h.b16 %v4024
        %v4214 = vunpack.c.l.b16 %v4025
        %v4215 = vunpack.c.h.b16 %v4025
        %v4216 = vunpack.c.l.b16 %v4026
        %v4217 = vunpack.c.h.b16 %v4026
        %v4218 = vunpack.c.l.b16 %v4027
        %v4219 = vunpack.c.h.b16 %v4027
        %v4220 = vunpack.c.l.b16 %v4028
        %v4221 = vunpack.c.h.b16 %v4028
        %v4222 = vunpack.c.l.b16 %v4029
        %v4223 = vunpack.c.h.b16 %v4029
        %v4224 = vunpack.c.l.b16 %v4030
        %v4225 = vunpack.c.h.b16 %v4030
        %v4226 = vunpack.c.l.b16 %v4031
        %v4227 = vunpack.c.h.b16 %v4031
        %v4228 = vunpack.c.l.b16 %v4032
        %v4229 = vunpack.c.h.b16 %v4032
        %v4230 = vunpack.c.l.b16 %v4033
        %v4231 = vunpack.c.h.b16 %v4033
        %v4232 = vunpack.c.l.b16 %v4034
        %v4233 = vunpack.c.h.b16 %v4034
        %v4234 = vunpack.c.l.b16 %v4035
        %v4235 = vunpack.c.h.b16 %v4035
        %v4236 = vunpack.c.l.b16 %v4036
        %v4237 = vunpack.c.h.b16 %v4036
        %v4238 = vunpack.c.l.b16 %v4037
        %v4239 = vunpack.c.h.b16 %v4037
        %v4240 = vunpack.c.l.b16 %v4038
        %v4241 = vunpack.c.h.b16 %v4038
        %v4242 = vunpack.c.l.b16 %v4039
        %v4243 = vunpack.c.h.b16 %v4039
        %v4244 = vunpack.c.l.b16 %v4040
        %v4245 = vunpack.c.h.b16 %v4040
        %v4246 = vunpack.c.l.b16 %v4041
        %v4247 = vunpack.c.h.b16 %v4041
        %v4248 = vunpack.c.l.b16 %v4042
        %v4249 = vunpack.c.h.b16 %v4042
        %v4250 = vunpack.c.l.b16 %v4043
        %v4251 = vunpack.c.h.b16 %v4043
        %v4252 = vunpack.c.l.b16 %v4044
        %v4253 = vunpack.c.h.b16 %v4044
        %v4254 = vunpack.c.l.b16 %v4045
        %v4255 = vunpack.c.h.b16 %v4045
        %v4256 = vunpack.c.l.b16 %v4046
        %v4257 = vunpack.c.h.b16 %v4046
        %v4258 = vunpack.c.l.b16 %v4047
        %v4259 = vunpack.c.h.b16 %v4047
        %v4260 = vunpack.c.l.b16 %v4048
        %v4261 = vunpack.c.h.b16 %v4048
        %v4262 = vunpack.c.l.b16 %v4049
        %v4263 = vunpack.c.h.b16 %v4049
        %v4264 = vunpack.c.l.b16 %v4050
        %v4265 = vunpack.c.h.b16 %v4050
        %v4266 = vunpack.c.l.b16 %v4051
        %v4267 = vunpack.c.h.b16 %v4051
        %v4268 = vunpack.c.l.b16 %v4052
        %v4269 = vunpack.c.h.b16 %v4052
        %v4270 = vunpack.c.l.b16 %v4053
        %v4271 = vunpack.c.h.b16 %v4053
        %v4272 = vunpack.c.l.b16 %v4054
        %v4273 = vunpack.c.h.b16 %v4054
        %v4274 = vunpack.c.l.b16 %v4055
        %v4275 = vunpack.c.h.b16 %v4055
        %v4276 = vunpack.c.l.b16 %v4056
        %v4277 = vunpack.c.h.b16 %v4056
        %v4278 = vunpack.c.l.b16 %v4057
        %v4279 = vunpack.c.h.b16 %v4057
        %v4280 = vunpack.c.l.b16 %v4058
        %v4281 = vunpack.c.h.b16 %v4058
        %v4282 = vunpack.c.l.b16 %v4059
        %v4283 = vunpack.c.h.b16 %v4059
        %v4284 = vunpack.c.l.b16 %v4060
        %v4285 = vunpack.c.h.b16 %v4060
        %v4286 = vunpack.c.l.b16 %v4061
        %v4287 = vunpack.c.h.b16 %v4061
        %v4288 = vunpack.c.l.b16 %v4062
        %v4289 = vunpack.c.h.b16 %v4062
        %v4290 = vunpack.c.l.b16 %v4063
        %v4291 = vunpack.c.h.b16 %v4063
        %v4292 = vunpack.c.l.b16 %v4064
        %v4293 = vunpack.c.h.b16 %v4064
        %v4294 = vunpack.c.l.b16 %v4065
        %v4295 = vunpack.c.h.b16 %v4065
        %v4296 = vunpack.c.l.b16 %v4066
        %v4297 = vunpack.c.h.b16 %v4066
        %v4298 = vunpack.c.l.b16 %v4067
        %v4299 = vunpack.c.h.b16 %v4067
        %v4300 = vpack.c.b16 %v4174, %v4172
        %v4301 = vpack.c.b16 %v4175, %v4173
        %v4302 = vpack.c.b16 %v4178, %v4176
        %v4303 = vpack.c.b16 %v4179, %v4177
        %v4304 = vpack.c.b16 %v4182, %v4180
        %v4305 = vpack.c.b16 %v4183, %v4181
        %v4306 = vpack.c.b16 %v4186, %v4184
        %v4307 = vpack.c.b16 %v4187, %v4185
        %v4308 = vpack.c.b16 %v4190, %v4188
        %v4309 = vpack.c.b16 %v4191, %v4189
        %v4310 = vpack.c.b16 %v4194, %v4192
        %v4311 = vpack.c.b16 %v4195, %v4193
        %v4312 = vpack.c.b16 %v4198, %v4196
        %v4313 = vpack.c.b16 %v4199, %v4197
        %v4314 = vpack.c.b16 %v4202, %v4200
        %v4315 = vpack.c.b16 %v4203, %v4201
        %v4316 = vpack.c.b16 %v4206, %v4204
        %v4317 = vpack.c.b16 %v4207, %v4205
        %v4318 = vpack.c.b16 %v4210, %v4208
        %v4319 = vpack.c.b16 %v4211, %v4209
        %v4320 = vpack.c.b16 %v4214, %v4212
        %v4321 = vpack.c.b16 %v4215, %v4213
        %v4322 = vpack.c.b16 %v4218, %v4216
        %v4323 = vpack.c.b16 %v4219, %v4217
        %v4324 = vpack.c.b16 %v4222, %v4220
        %v4325 = vpack.c.b16 %v4223, %v4221
        %v4326 = vpack.c.b16 %v4226, %v4224
        %v4327 = vpack.c.b16 %v4227, %v4225
        %v4328 = vpack.c.b16 %v4230, %v4228
        %v4329 = vpack.c.b16 %v4231, %v4229
        %v4330 = vpack.c.b16 %v4234, %v4232
        %v4331 = vpack.c.b16 %v4235, %v4233
        %v4332 = vpack.c.b16 %v4238, %v4236
        %v4333 = vpack.c.b16 %v4239, %v4237
        %v4334 = vpack.c.b16 %v4242, %v4240
        %v4335 = vpack.c.b16 %v4243, %v4241
        %v4336 = vpack.c.b16 %v4246, %v4244
        %v4337 = vpack.c.b16 %v4247, %v4245
        %v4338 = vpack.c.b16 %v4250, %v4248
        %v4339 = vpack.c.b16 %v4251, %v4249
        %v4340 = vpack.c.b16 %v4254, %v4252
        %v4341 = vpack.c.b16 %v4255, %v4253
        %v4342 = vpack.c.b16 %v4258, %v4256
        %v4343 = vpack.c.b16 %v4259, %v4257
        %v4344 = vpack.c.b16 %v4262, %v4260
        %v4345 = vpack.c.b16 %v4263, %v4261
        %v4346 = vpack.c.b16 %v4266, %v4264
        %v4347 = vpack.c.b16 %v4267, %v4265
        %v4348 = vpack.c.b16 %v4270, %v4268
        %v4349 = vpack.c.b16 %v4271, %v4269
        %v4350 = vpack.c.b16 %v4274, %v4272
        %v4351 = vpack.c.b16 %v4275, %v4273
        %v4352 = vpack.c.b16 %v4278, %v4276
        %v4353 = vpack.c.b16 %v4279, %v4277
        %v4354 = vpack.c.b16 %v4282, %v4280
        %v4355 = vpack.c.b16 %v4283, %v4281
        %v4356 = vpack.c.b16 %v4286, %v4284
        %v4357 = vpack.c.b16 %v4287, %v4285
        %v4358 = vpack.c.b16 %v4290, %v4288
        %v4359 = vpack.c.b16 %v4291, %v4289
        %v4360 = vpack.c.b16 %v4294, %v4292
        %v4361 = vpack.c.b16 %v4295, %v4293
        %v4362 = vpack.c.b16 %v4298, %v4296
        %v4363 = vpack.c.b16 %v4299, %v4297
        %4428 = vmatpush.bf16.msra.mxu0 %v4314
        %4429 = vmatpush.bf16.msra.mxu0 %v4312
        %4430 = vmatpush.bf16.msra.mxu0 %v4310
        %4431 = vmatpush.bf16.msra.mxu0 %v4308
        %4432 = vmatpush.bf16.msra.mxu0 %v4306
        %4433 = vmatpush.bf16.msra.mxu0 %v4304
        %4434 = vmatpush.bf16.msra.mxu0 %v4302
        %4435 = vmatpush.bf16.msra.mxu0 %v4300
        %4436 = vmatmul.bf16.gmra.mxu0 %v4092
        %v4437 = vpop.f32.mrf.mxu0
        %v4438 = vadd.f32 0.0, %v4437
        %v4439 = vpop.f32.mrf.mxu0
        %v4440 = vadd.f32 0.0, %v4439
        %4441 = vmatmul.bf16.gmra.mxu0 %v4096
        %v4442 = vpop.f32.mrf.mxu0
        %v4443 = vadd.f32 0.0, %v4442
        %v4444 = vpop.f32.mrf.mxu0
        %v4445 = vadd.f32 0.0, %v4444
        %4446 = vdwg.mxu0
        %4447 = vmatpush.bf16.msra.mxu0 %v4330
        %4448 = vmatpush.bf16.msra.mxu0 %v4328
        %4449 = vmatpush.bf16.msra.mxu0 %v4326
        %4450 = vmatpush.bf16.msra.mxu0 %v4324
        %4451 = vmatpush.bf16.msra.mxu0 %v4322
        %4452 = vmatpush.bf16.msra.mxu0 %v4320
        %4453 = vmatpush.bf16.msra.mxu0 %v4318
        %4454 = vmatpush.bf16.msra.mxu0 %v4316
        %4455 = vmatmul.bf16.gmra.mxu0 %v4093
        %v4456 = vpop.f32.mrf.mxu0
        %v4457 = vadd.f32 %v4438, %v4456
        %v4458 = vpop.f32.mrf.mxu0
        %v4459 = vadd.f32 %v4440, %v4458
        %4460 = vmatmul.bf16.gmra.mxu0 %v4097
        %v4461 = vpop.f32.mrf.mxu0
        %v4462 = vadd.f32 %v4443, %v4461
        %v4463 = vpop.f32.mrf.mxu0
        %v4464 = vadd.f32 %v4445, %v4463
        %4465 = vdwg.mxu0
        %4466 = vmatpush.bf16.msra.mxu0 %v4346
        %4467 = vmatpush.bf16.msra.mxu0 %v4344
        %4468 = vmatpush.bf16.msra.mxu0 %v4342
        %4469 = vmatpush.bf16.msra.mxu0 %v4340
        %4470 = vmatpush.bf16.msra.mxu0 %v4338
        %4471 = vmatpush.bf16.msra.mxu0 %v4336
        %4472 = vmatpush.bf16.msra.mxu0 %v4334
        %4473 = vmatpush.bf16.msra.mxu0 %v4332
        %4474 = vmatmul.bf16.gmra.mxu0 %v4094
        %v4475 = vpop.f32.mrf.mxu0
        %v4476 = vadd.f32 %v4457, %v4475
        %v4477 = vpop.f32.mrf.mxu0
        %v4478 = vadd.f32 %v4459, %v4477
        %4479 = vmatmul.bf16.gmra.mxu0 %v4098
        %v4480 = vpop.f32.mrf.mxu0
        %v4481 = vadd.f32 %v4462, %v4480
        %v4482 = vpop.f32.mrf.mxu0
        %v4483 = vadd.f32 %v4464, %v4482
        %4484 = vdwg.mxu0
        %4485 = vmatpush.bf16.msra.mxu0 %v4362
        %4486 = vmatpush.bf16.msra.mxu0 %v4360
        %4487 = vmatpush.bf16.msra.mxu0 %v4358
        %4488 = vmatpush.bf16.msra.mxu0 %v4356
        %4489 = vmatpush.bf16.msra.mxu0 %v4354
        %4490 = vmatpush.bf16.msra.mxu0 %v4352
        %4491 = vmatpush.bf16.msra.mxu0 %v4350
        %4492 = vmatpush.bf16.msra.mxu0 %v4348
        %4493 = vmatmul.bf16.gmra.mxu0 %v4095
        %v4494 = vpop.f32.mrf.mxu0
        %v4495 = vadd.f32 %v4476, %v4494
        %v4496 = vpop.f32.mrf.mxu0
        %v4497 = vadd.f32 %v4478, %v4496
        %4498 = vmatmul.bf16.gmra.mxu0 %v4099
        %v4499 = vpop.f32.mrf.mxu0
        %v4500 = vadd.f32 %v4481, %v4499
        %v4501 = vpop.f32.mrf.mxu0
        %v4502 = vadd.f32 %v4483, %v4501
        %4503 = vdwg.mxu0
        %4504 = vmatpush.bf16.msra.mxu0 %v4315
        %4505 = vmatpush.bf16.msra.mxu0 %v4313
        %4506 = vmatpush.bf16.msra.mxu0 %v4311
        %4507 = vmatpush.bf16.msra.mxu0 %v4309
        %4508 = vmatpush.bf16.msra.mxu0 %v4307
        %4509 = vmatpush.bf16.msra.mxu0 %v4305
        %4510 = vmatpush.bf16.msra.mxu0 %v4303
        %4511 = vmatpush.bf16.msra.mxu0 %v4301
        %4512 = vmatmul.bf16.gmra.mxu0 %v4092
        %v4513 = vpop.f32.mrf.mxu0
        %v4514 = vadd.f32 0.0, %v4513
        %v4515 = vpop.f32.mrf.mxu0
        %v4516 = vadd.f32 0.0, %v4515
        %4517 = vmatmul.bf16.gmra.mxu0 %v4096
        %v4518 = vpop.f32.mrf.mxu0
        %v4519 = vadd.f32 0.0, %v4518
        %v4520 = vpop.f32.mrf.mxu0
        %v4521 = vadd.f32 0.0, %v4520
        %4522 = vdwg.mxu0
        %4523 = vmatpush.bf16.msra.mxu0 %v4331
        %4524 = vmatpush.bf16.msra.mxu0 %v4329
        %4525 = vmatpush.bf16.msra.mxu0 %v4327
        %4526 = vmatpush.bf16.msra.mxu0 %v4325
        %4527 = vmatpush.bf16.msra.mxu0 %v4323
        %4528 = vmatpush.bf16.msra.mxu0 %v4321
        %4529 = vmatpush.bf16.msra.mxu0 %v4319
        %4530 = vmatpush.bf16.msra.mxu0 %v4317
        %4531 = vmatmul.bf16.gmra.mxu0 %v4093
        %v4532 = vpop.f32.mrf.mxu0
        %v4533 = vadd.f32 %v4514, %v4532
        %v4534 = vpop.f32.mrf.mxu0
        %v4535 = vadd.f32 %v4516, %v4534
        %4536 = vmatmul.bf16.gmra.mxu0 %v4097
        %v4537 = vpop.f32.mrf.mxu0
        %v4538 = vadd.f32 %v4519, %v4537
        %v4539 = vpop.f32.mrf.mxu0
        %v4540 = vadd.f32 %v4521, %v4539
        %4541 = vdwg.mxu0
        %4542 = vmatpush.bf16.msra.mxu0 %v4347
        %4543 = vmatpush.bf16.msra.mxu0 %v4345
        %4544 = vmatpush.bf16.msra.mxu0 %v4343
        %4545 = vmatpush.bf16.msra.mxu0 %v4341
        %4546 = vmatpush.bf16.msra.mxu0 %v4339
        %4547 = vmatpush.bf16.msra.mxu0 %v4337
        %4548 = vmatpush.bf16.msra.mxu0 %v4335
        %4549 = vmatpush.bf16.msra.mxu0 %v4333
        %4550 = vmatmul.bf16.gmra.mxu0 %v4094
        %v4551 = vpop.f32.mrf.mxu0
        %v4552 = vadd.f32 %v4533, %v4551
        %v4553 = vpop.f32.mrf.mxu0
        %v4554 = vadd.f32 %v4535, %v4553
        %4555 = vmatmul.bf16.gmra.mxu0 %v4098
        %v4556 = vpop.f32.mrf.mxu0
        %v4557 = vadd.f32 %v4538, %v4556
        %v4558 = vpop.f32.mrf.mxu0
        %v4559 = vadd.f32 %v4540, %v4558
        %4560 = vdwg.mxu0
        %4561 = vmatpush.bf16.msra.mxu0 %v4363
        %4562 = vmatpush.bf16.msra.mxu0 %v4361
        %4563 = vmatpush.bf16.msra.mxu0 %v4359
        %4564 = vmatpush.bf16.msra.mxu0 %v4357
        %4565 = vmatpush.bf16.msra.mxu0 %v4355
        %4566 = vmatpush.bf16.msra.mxu0 %v4353
        %4567 = vmatpush.bf16.msra.mxu0 %v4351
        %4568 = vmatpush.bf16.msra.mxu0 %v4349
        %4569 = vmatmul.bf16.gmra.mxu0 %v4095
        %v4570 = vpop.f32.mrf.mxu0
        %v4571 = vadd.f32 %v4552, %v4570
        %v4572 = vpop.f32.mrf.mxu0
        %v4573 = vadd.f32 %v4554, %v4572
        %4574 = vmatmul.bf16.gmra.mxu0 %v4099
        %v4575 = vpop.f32.mrf.mxu0
        %v4576 = vadd.f32 %v4557, %v4575
        %v4577 = vpop.f32.mrf.mxu0
        %v4578 = vadd.f32 %v4559, %v4577
        %4579 = vdwg.mxu0
        %v4580 = vadd.f32 %v3986, %v4495
        %v4581 = vadd.f32 %v3987, %v4571
        %v4582 = vadd.f32 %v3988, %v4497
        %v4583 = vadd.f32 %v3989, %v4573
        %v4584 = vadd.f32 %v3990, %v4500
        %v4585 = vadd.f32 %v3991, %v4576
        %v4586 = vadd.f32 %v3992, %v4502
        %v4587 = vadd.f32 %v3993, %v4578
        %s4588 = scalar_lea.vmem %s366, 448 [#allocation2]
        %v4589 = vld [vmem:[%s4588] sm:$0xff]
        %v4590 = vld [vmem:[%s4588 + $0x8] sm:$0xff]
        %v4591 = vld [vmem:[%s4588 + $0x10] sm:$0xff]
        %v4592 = vld [vmem:[%s4588 + $0x18] sm:$0xff]
        %v4593 = vld [vmem:[%s4588 + $0x20] sm:$0xff]
        %v4594 = vld [vmem:[%s4588 + $0x28] sm:$0xff]
        %v4595 = vld [vmem:[%s4588 + $0x30] sm:$0xff]
        %v4596 = vld [vmem:[%s4588 + $0x38] sm:$0xff]
        %s4597 = scalar_lea.vmem %s418, 3584
        %v4598 = vld [vmem:[%s4597] sm:$0xff]
        %v4599 = vld [vmem:[%s4597 + $0x8] sm:$0xff]
        %v4600 = vld [vmem:[%s4597 + $0x10] sm:$0xff]
        %v4601 = vld [vmem:[%s4597 + $0x18] sm:$0xff]
        %v4602 = vld [vmem:[%s4597 + $0x20] sm:$0xff]
        %v4603 = vld [vmem:[%s4597 + $0x28] sm:$0xff]
        %v4604 = vld [vmem:[%s4597 + $0x30] sm:$0xff]
        %v4605 = vld [vmem:[%s4597 + $0x38] sm:$0xff]
        %v4606 = vld [vmem:[%s4597 + $0x40] sm:$0xff]
        %v4607 = vld [vmem:[%s4597 + $0x48] sm:$0xff]
        %v4608 = vld [vmem:[%s4597 + $0x50] sm:$0xff]
        %v4609 = vld [vmem:[%s4597 + $0x58] sm:$0xff]
        %v4610 = vld [vmem:[%s4597 + $0x60] sm:$0xff]
        %v4611 = vld [vmem:[%s4597 + $0x68] sm:$0xff]
        %v4612 = vld [vmem:[%s4597 + $0x70] sm:$0xff]
        %v4613 = vld [vmem:[%s4597 + $0x78] sm:$0xff]
        %v4614 = vld [vmem:[%s4597 + $0x80] sm:$0xff]
        %v4615 = vld [vmem:[%s4597 + $0x88] sm:$0xff]
        %v4616 = vld [vmem:[%s4597 + $0x90] sm:$0xff]
        %v4617 = vld [vmem:[%s4597 + $0x98] sm:$0xff]
        %v4618 = vld [vmem:[%s4597 + $0xa0] sm:$0xff]
        %v4619 = vld [vmem:[%s4597 + $0xa8] sm:$0xff]
        %v4620 = vld [vmem:[%s4597 + $0xb0] sm:$0xff]
        %v4621 = vld [vmem:[%s4597 + $0xb8] sm:$0xff]
        %v4622 = vld [vmem:[%s4597 + $0xc0] sm:$0xff]
        %v4623 = vld [vmem:[%s4597 + $0xc8] sm:$0xff]
        %v4624 = vld [vmem:[%s4597 + $0xd0] sm:$0xff]
        %v4625 = vld [vmem:[%s4597 + $0xd8] sm:$0xff]
        %v4626 = vld [vmem:[%s4597 + $0xe0] sm:$0xff]
        %v4627 = vld [vmem:[%s4597 + $0xe8] sm:$0xff]
        %v4628 = vld [vmem:[%s4597 + $0xf0] sm:$0xff]
        %v4629 = vld [vmem:[%s4597 + $0xf8] sm:$0xff]
        %v4630 = vld [vmem:[%s4597 + $0x100] sm:$0xff]
        %v4631 = vld [vmem:[%s4597 + $0x108] sm:$0xff]
        %v4632 = vld [vmem:[%s4597 + $0x110] sm:$0xff]
        %v4633 = vld [vmem:[%s4597 + $0x118] sm:$0xff]
        %v4634 = vld [vmem:[%s4597 + $0x120] sm:$0xff]
        %v4635 = vld [vmem:[%s4597 + $0x128] sm:$0xff]
        %v4636 = vld [vmem:[%s4597 + $0x130] sm:$0xff]
        %v4637 = vld [vmem:[%s4597 + $0x138] sm:$0xff]
        %v4638 = vld [vmem:[%s4597 + $0x140] sm:$0xff]
        %v4639 = vld [vmem:[%s4597 + $0x148] sm:$0xff]
        %v4640 = vld [vmem:[%s4597 + $0x150] sm:$0xff]
        %v4641 = vld [vmem:[%s4597 + $0x158] sm:$0xff]
        %v4642 = vld [vmem:[%s4597 + $0x160] sm:$0xff]
        %v4643 = vld [vmem:[%s4597 + $0x168] sm:$0xff]
        %v4644 = vld [vmem:[%s4597 + $0x170] sm:$0xff]
        %v4645 = vld [vmem:[%s4597 + $0x178] sm:$0xff]
        %v4646 = vld [vmem:[%s4597 + $0x180] sm:$0xff]
        %v4647 = vld [vmem:[%s4597 + $0x188] sm:$0xff]
        %v4648 = vld [vmem:[%s4597 + $0x190] sm:$0xff]
        %v4649 = vld [vmem:[%s4597 + $0x198] sm:$0xff]
        %v4650 = vld [vmem:[%s4597 + $0x1a0] sm:$0xff]
        %v4651 = vld [vmem:[%s4597 + $0x1a8] sm:$0xff]
        %v4652 = vld [vmem:[%s4597 + $0x1b0] sm:$0xff]
        %v4653 = vld [vmem:[%s4597 + $0x1b8] sm:$0xff]
        %v4654 = vld [vmem:[%s4597 + $0x1c0] sm:$0xff]
        %v4655 = vld [vmem:[%s4597 + $0x1c8] sm:$0xff]
        %v4656 = vld [vmem:[%s4597 + $0x1d0] sm:$0xff]
        %v4657 = vld [vmem:[%s4597 + $0x1d8] sm:$0xff]
        %v4658 = vld [vmem:[%s4597 + $0x1e0] sm:$0xff]
        %v4659 = vld [vmem:[%s4597 + $0x1e8] sm:$0xff]
        %v4660 = vld [vmem:[%s4597 + $0x1f0] sm:$0xff]
        %v4661 = vld [vmem:[%s4597 + $0x1f8] sm:$0xff]
        %v4670 = vunpack.c.l.b16 %v4589
        %v4671 = vunpack.c.h.b16 %v4589
        %v4672 = vunpack.c.l.b16 %v4590
        %v4673 = vunpack.c.h.b16 %v4590
        %v4674 = vunpack.c.l.b16 %v4591
        %v4675 = vunpack.c.h.b16 %v4591
        %v4676 = vunpack.c.l.b16 %v4592
        %v4677 = vunpack.c.h.b16 %v4592
        %v4678 = vunpack.c.l.b16 %v4593
        %v4679 = vunpack.c.h.b16 %v4593
        %v4680 = vunpack.c.l.b16 %v4594
        %v4681 = vunpack.c.h.b16 %v4594
        %v4682 = vunpack.c.l.b16 %v4595
        %v4683 = vunpack.c.h.b16 %v4595
        %v4684 = vunpack.c.l.b16 %v4596
        %v4685 = vunpack.c.h.b16 %v4596
        %v4686 = vpack.c.b16 %v4674, %v4670
        %v4687 = vpack.c.b16 %v4675, %v4671
        %v4688 = vpack.c.b16 %v4676, %v4672
        %v4689 = vpack.c.b16 %v4677, %v4673
        %v4690 = vpack.c.b16 %v4682, %v4678
        %v4691 = vpack.c.b16 %v4683, %v4679
        %v4692 = vpack.c.b16 %v4684, %v4680
        %v4693 = vpack.c.b16 %v4685, %v4681
        %v4766 = vunpack.c.l.b16 %v4598
        %v4767 = vunpack.c.h.b16 %v4598
        %v4768 = vunpack.c.l.b16 %v4599
        %v4769 = vunpack.c.h.b16 %v4599
        %v4770 = vunpack.c.l.b16 %v4600
        %v4771 = vunpack.c.h.b16 %v4600
        %v4772 = vunpack.c.l.b16 %v4601
        %v4773 = vunpack.c.h.b16 %v4601
        %v4774 = vunpack.c.l.b16 %v4602
        %v4775 = vunpack.c.h.b16 %v4602
        %v4776 = vunpack.c.l.b16 %v4603
        %v4777 = vunpack.c.h.b16 %v4603
        %v4778 = vunpack.c.l.b16 %v4604
        %v4779 = vunpack.c.h.b16 %v4604
        %v4780 = vunpack.c.l.b16 %v4605
        %v4781 = vunpack.c.h.b16 %v4605
        %v4782 = vunpack.c.l.b16 %v4606
        %v4783 = vunpack.c.h.b16 %v4606
        %v4784 = vunpack.c.l.b16 %v4607
        %v4785 = vunpack.c.h.b16 %v4607
        %v4786 = vunpack.c.l.b16 %v4608
        %v4787 = vunpack.c.h.b16 %v4608
        %v4788 = vunpack.c.l.b16 %v4609
        %v4789 = vunpack.c.h.b16 %v4609
        %v4790 = vunpack.c.l.b16 %v4610
        %v4791 = vunpack.c.h.b16 %v4610
        %v4792 = vunpack.c.l.b16 %v4611
        %v4793 = vunpack.c.h.b16 %v4611
        %v4794 = vunpack.c.l.b16 %v4612
        %v4795 = vunpack.c.h.b16 %v4612
        %v4796 = vunpack.c.l.b16 %v4613
        %v4797 = vunpack.c.h.b16 %v4613
        %v4798 = vunpack.c.l.b16 %v4614
        %v4799 = vunpack.c.h.b16 %v4614
        %v4800 = vunpack.c.l.b16 %v4615
        %v4801 = vunpack.c.h.b16 %v4615
        %v4802 = vunpack.c.l.b16 %v4616
        %v4803 = vunpack.c.h.b16 %v4616
        %v4804 = vunpack.c.l.b16 %v4617
        %v4805 = vunpack.c.h.b16 %v4617
        %v4806 = vunpack.c.l.b16 %v4618
        %v4807 = vunpack.c.h.b16 %v4618
        %v4808 = vunpack.c.l.b16 %v4619
        %v4809 = vunpack.c.h.b16 %v4619
        %v4810 = vunpack.c.l.b16 %v4620
        %v4811 = vunpack.c.h.b16 %v4620
        %v4812 = vunpack.c.l.b16 %v4621
        %v4813 = vunpack.c.h.b16 %v4621
        %v4814 = vunpack.c.l.b16 %v4622
        %v4815 = vunpack.c.h.b16 %v4622
        %v4816 = vunpack.c.l.b16 %v4623
        %v4817 = vunpack.c.h.b16 %v4623
        %v4818 = vunpack.c.l.b16 %v4624
        %v4819 = vunpack.c.h.b16 %v4624
        %v4820 = vunpack.c.l.b16 %v4625
        %v4821 = vunpack.c.h.b16 %v4625
        %v4822 = vunpack.c.l.b16 %v4626
        %v4823 = vunpack.c.h.b16 %v4626
        %v4824 = vunpack.c.l.b16 %v4627
        %v4825 = vunpack.c.h.b16 %v4627
        %v4826 = vunpack.c.l.b16 %v4628
        %v4827 = vunpack.c.h.b16 %v4628
        %v4828 = vunpack.c.l.b16 %v4629
        %v4829 = vunpack.c.h.b16 %v4629
        %v4830 = vunpack.c.l.b16 %v4630
        %v4831 = vunpack.c.h.b16 %v4630
        %v4832 = vunpack.c.l.b16 %v4631
        %v4833 = vunpack.c.h.b16 %v4631
        %v4834 = vunpack.c.l.b16 %v4632
        %v4835 = vunpack.c.h.b16 %v4632
        %v4836 = vunpack.c.l.b16 %v4633
        %v4837 = vunpack.c.h.b16 %v4633
        %v4838 = vunpack.c.l.b16 %v4634
        %v4839 = vunpack.c.h.b16 %v4634
        %v4840 = vunpack.c.l.b16 %v4635
        %v4841 = vunpack.c.h.b16 %v4635
        %v4842 = vunpack.c.l.b16 %v4636
        %v4843 = vunpack.c.h.b16 %v4636
        %v4844 = vunpack.c.l.b16 %v4637
        %v4845 = vunpack.c.h.b16 %v4637
        %v4846 = vunpack.c.l.b16 %v4638
        %v4847 = vunpack.c.h.b16 %v4638
        %v4848 = vunpack.c.l.b16 %v4639
        %v4849 = vunpack.c.h.b16 %v4639
        %v4850 = vunpack.c.l.b16 %v4640
        %v4851 = vunpack.c.h.b16 %v4640
        %v4852 = vunpack.c.l.b16 %v4641
        %v4853 = vunpack.c.h.b16 %v4641
        %v4854 = vunpack.c.l.b16 %v4642
        %v4855 = vunpack.c.h.b16 %v4642
        %v4856 = vunpack.c.l.b16 %v4643
        %v4857 = vunpack.c.h.b16 %v4643
        %v4858 = vunpack.c.l.b16 %v4644
        %v4859 = vunpack.c.h.b16 %v4644
        %v4860 = vunpack.c.l.b16 %v4645
        %v4861 = vunpack.c.h.b16 %v4645
        %v4862 = vunpack.c.l.b16 %v4646
        %v4863 = vunpack.c.h.b16 %v4646
        %v4864 = vunpack.c.l.b16 %v4647
        %v4865 = vunpack.c.h.b16 %v4647
        %v4866 = vunpack.c.l.b16 %v4648
        %v4867 = vunpack.c.h.b16 %v4648
        %v4868 = vunpack.c.l.b16 %v4649
        %v4869 = vunpack.c.h.b16 %v4649
        %v4870 = vunpack.c.l.b16 %v4650
        %v4871 = vunpack.c.h.b16 %v4650
        %v4872 = vunpack.c.l.b16 %v4651
        %v4873 = vunpack.c.h.b16 %v4651
        %v4874 = vunpack.c.l.b16 %v4652
        %v4875 = vunpack.c.h.b16 %v4652
        %v4876 = vunpack.c.l.b16 %v4653
        %v4877 = vunpack.c.h.b16 %v4653
        %v4878 = vunpack.c.l.b16 %v4654
        %v4879 = vunpack.c.h.b16 %v4654
        %v4880 = vunpack.c.l.b16 %v4655
        %v4881 = vunpack.c.h.b16 %v4655
        %v4882 = vunpack.c.l.b16 %v4656
        %v4883 = vunpack.c.h.b16 %v4656
        %v4884 = vunpack.c.l.b16 %v4657
        %v4885 = vunpack.c.h.b16 %v4657
        %v4886 = vunpack.c.l.b16 %v4658
        %v4887 = vunpack.c.h.b16 %v4658
        %v4888 = vunpack.c.l.b16 %v4659
        %v4889 = vunpack.c.h.b16 %v4659
        %v4890 = vunpack.c.l.b16 %v4660
        %v4891 = vunpack.c.h.b16 %v4660
        %v4892 = vunpack.c.l.b16 %v4661
        %v4893 = vunpack.c.h.b16 %v4661
        %v4894 = vpack.c.b16 %v4768, %v4766
        %v4895 = vpack.c.b16 %v4769, %v4767
        %v4896 = vpack.c.b16 %v4772, %v4770
        %v4897 = vpack.c.b16 %v4773, %v4771
        %v4898 = vpack.c.b16 %v4776, %v4774
        %v4899 = vpack.c.b16 %v4777, %v4775
        %v4900 = vpack.c.b16 %v4780, %v4778
        %v4901 = vpack.c.b16 %v4781, %v4779
        %v4902 = vpack.c.b16 %v4784, %v4782
        %v4903 = vpack.c.b16 %v4785, %v4783
        %v4904 = vpack.c.b16 %v4788, %v4786
        %v4905 = vpack.c.b16 %v4789, %v4787
        %v4906 = vpack.c.b16 %v4792, %v4790
        %v4907 = vpack.c.b16 %v4793, %v4791
        %v4908 = vpack.c.b16 %v4796, %v4794
        %v4909 = vpack.c.b16 %v4797, %v4795
        %v4910 = vpack.c.b16 %v4800, %v4798
        %v4911 = vpack.c.b16 %v4801, %v4799
        %v4912 = vpack.c.b16 %v4804, %v4802
        %v4913 = vpack.c.b16 %v4805, %v4803
        %v4914 = vpack.c.b16 %v4808, %v4806
        %v4915 = vpack.c.b16 %v4809, %v4807
        %v4916 = vpack.c.b16 %v4812, %v4810
        %v4917 = vpack.c.b16 %v4813, %v4811
        %v4918 = vpack.c.b16 %v4816, %v4814
        %v4919 = vpack.c.b16 %v4817, %v4815
        %v4920 = vpack.c.b16 %v4820, %v4818
        %v4921 = vpack.c.b16 %v4821, %v4819
        %v4922 = vpack.c.b16 %v4824, %v4822
        %v4923 = vpack.c.b16 %v4825, %v4823
        %v4924 = vpack.c.b16 %v4828, %v4826
        %v4925 = vpack.c.b16 %v4829, %v4827
        %v4926 = vpack.c.b16 %v4832, %v4830
        %v4927 = vpack.c.b16 %v4833, %v4831
        %v4928 = vpack.c.b16 %v4836, %v4834
        %v4929 = vpack.c.b16 %v4837, %v4835
        %v4930 = vpack.c.b16 %v4840, %v4838
        %v4931 = vpack.c.b16 %v4841, %v4839
        %v4932 = vpack.c.b16 %v4844, %v4842
        %v4933 = vpack.c.b16 %v4845, %v4843
        %v4934 = vpack.c.b16 %v4848, %v4846
        %v4935 = vpack.c.b16 %v4849, %v4847
        %v4936 = vpack.c.b16 %v4852, %v4850
        %v4937 = vpack.c.b16 %v4853, %v4851
        %v4938 = vpack.c.b16 %v4856, %v4854
        %v4939 = vpack.c.b16 %v4857, %v4855
        %v4940 = vpack.c.b16 %v4860, %v4858
        %v4941 = vpack.c.b16 %v4861, %v4859
        %v4942 = vpack.c.b16 %v4864, %v4862
        %v4943 = vpack.c.b16 %v4865, %v4863
        %v4944 = vpack.c.b16 %v4868, %v4866
        %v4945 = vpack.c.b16 %v4869, %v4867
        %v4946 = vpack.c.b16 %v4872, %v4870
        %v4947 = vpack.c.b16 %v4873, %v4871
        %v4948 = vpack.c.b16 %v4876, %v4874
        %v4949 = vpack.c.b16 %v4877, %v4875
        %v4950 = vpack.c.b16 %v4880, %v4878
        %v4951 = vpack.c.b16 %v4881, %v4879
        %v4952 = vpack.c.b16 %v4884, %v4882
        %v4953 = vpack.c.b16 %v4885, %v4883
        %v4954 = vpack.c.b16 %v4888, %v4886
        %v4955 = vpack.c.b16 %v4889, %v4887
        %v4956 = vpack.c.b16 %v4892, %v4890
        %v4957 = vpack.c.b16 %v4893, %v4891
        %5022 = vmatpush.bf16.msra.mxu0 %v4908
        %5023 = vmatpush.bf16.msra.mxu0 %v4906
        %5024 = vmatpush.bf16.msra.mxu0 %v4904
        %5025 = vmatpush.bf16.msra.mxu0 %v4902
        %5026 = vmatpush.bf16.msra.mxu0 %v4900
        %5027 = vmatpush.bf16.msra.mxu0 %v4898
        %5028 = vmatpush.bf16.msra.mxu0 %v4896
        %5029 = vmatpush.bf16.msra.mxu0 %v4894
        %5030 = vmatmul.bf16.gmra.mxu0 %v4686
        %v5031 = vpop.f32.mrf.mxu0
        %v5032 = vadd.f32 0.0, %v5031
        %v5033 = vpop.f32.mrf.mxu0
        %v5034 = vadd.f32 0.0, %v5033
        %5035 = vmatmul.bf16.gmra.mxu0 %v4690
        %v5036 = vpop.f32.mrf.mxu0
        %v5037 = vadd.f32 0.0, %v5036
        %v5038 = vpop.f32.mrf.mxu0
        %v5039 = vadd.f32 0.0, %v5038
        %5040 = vdwg.mxu0
        %5041 = vmatpush.bf16.msra.mxu0 %v4924
        %5042 = vmatpush.bf16.msra.mxu0 %v4922
        %5043 = vmatpush.bf16.msra.mxu0 %v4920
        %5044 = vmatpush.bf16.msra.mxu0 %v4918
        %5045 = vmatpush.bf16.msra.mxu0 %v4916
        %5046 = vmatpush.bf16.msra.mxu0 %v4914
        %5047 = vmatpush.bf16.msra.mxu0 %v4912
        %5048 = vmatpush.bf16.msra.mxu0 %v4910
        %5049 = vmatmul.bf16.gmra.mxu0 %v4687
        %v5050 = vpop.f32.mrf.mxu0
        %v5051 = vadd.f32 %v5032, %v5050
        %v5052 = vpop.f32.mrf.mxu0
        %v5053 = vadd.f32 %v5034, %v5052
        %5054 = vmatmul.bf16.gmra.mxu0 %v4691
        %v5055 = vpop.f32.mrf.mxu0
        %v5056 = vadd.f32 %v5037, %v5055
        %v5057 = vpop.f32.mrf.mxu0
        %v5058 = vadd.f32 %v5039, %v5057
        %5059 = vdwg.mxu0
        %5060 = vmatpush.bf16.msra.mxu0 %v4940
        %5061 = vmatpush.bf16.msra.mxu0 %v4938
        %5062 = vmatpush.bf16.msra.mxu0 %v4936
        %5063 = vmatpush.bf16.msra.mxu0 %v4934
        %5064 = vmatpush.bf16.msra.mxu0 %v4932
        %5065 = vmatpush.bf16.msra.mxu0 %v4930
        %5066 = vmatpush.bf16.msra.mxu0 %v4928
        %5067 = vmatpush.bf16.msra.mxu0 %v4926
        %5068 = vmatmul.bf16.gmra.mxu0 %v4688
        %v5069 = vpop.f32.mrf.mxu0
        %v5070 = vadd.f32 %v5051, %v5069
        %v5071 = vpop.f32.mrf.mxu0
        %v5072 = vadd.f32 %v5053, %v5071
        %5073 = vmatmul.bf16.gmra.mxu0 %v4692
        %v5074 = vpop.f32.mrf.mxu0
        %v5075 = vadd.f32 %v5056, %v5074
        %v5076 = vpop.f32.mrf.mxu0
        %v5077 = vadd.f32 %v5058, %v5076
        %5078 = vdwg.mxu0
        %5079 = vmatpush.bf16.msra.mxu0 %v4956
        %5080 = vmatpush.bf16.msra.mxu0 %v4954
        %5081 = vmatpush.bf16.msra.mxu0 %v4952
        %5082 = vmatpush.bf16.msra.mxu0 %v4950
        %5083 = vmatpush.bf16.msra.mxu0 %v4948
        %5084 = vmatpush.bf16.msra.mxu0 %v4946
        %5085 = vmatpush.bf16.msra.mxu0 %v4944
        %5086 = vmatpush.bf16.msra.mxu0 %v4942
        %5087 = vmatmul.bf16.gmra.mxu0 %v4689
        %v5088 = vpop.f32.mrf.mxu0
        %v5089 = vadd.f32 %v5070, %v5088
        %v5090 = vpop.f32.mrf.mxu0
        %v5091 = vadd.f32 %v5072, %v5090
        %5092 = vmatmul.bf16.gmra.mxu0 %v4693
        %v5093 = vpop.f32.mrf.mxu0
        %v5094 = vadd.f32 %v5075, %v5093
        %v5095 = vpop.f32.mrf.mxu0
        %v5096 = vadd.f32 %v5077, %v5095
        %5097 = vdwg.mxu0
        %5098 = vmatpush.bf16.msra.mxu0 %v4909
        %5099 = vmatpush.bf16.msra.mxu0 %v4907
        %5100 = vmatpush.bf16.msra.mxu0 %v4905
        %5101 = vmatpush.bf16.msra.mxu0 %v4903
        %5102 = vmatpush.bf16.msra.mxu0 %v4901
        %5103 = vmatpush.bf16.msra.mxu0 %v4899
        %5104 = vmatpush.bf16.msra.mxu0 %v4897
        %5105 = vmatpush.bf16.msra.mxu0 %v4895
        %5106 = vmatmul.bf16.gmra.mxu0 %v4686
        %v5107 = vpop.f32.mrf.mxu0
        %v5108 = vadd.f32 0.0, %v5107
        %v5109 = vpop.f32.mrf.mxu0
        %v5110 = vadd.f32 0.0, %v5109
        %5111 = vmatmul.bf16.gmra.mxu0 %v4690
        %v5112 = vpop.f32.mrf.mxu0
        %v5113 = vadd.f32 0.0, %v5112
        %v5114 = vpop.f32.mrf.mxu0
        %v5115 = vadd.f32 0.0, %v5114
        %5116 = vdwg.mxu0
        %5117 = vmatpush.bf16.msra.mxu0 %v4925
        %5118 = vmatpush.bf16.msra.mxu0 %v4923
        %5119 = vmatpush.bf16.msra.mxu0 %v4921
        %5120 = vmatpush.bf16.msra.mxu0 %v4919
        %5121 = vmatpush.bf16.msra.mxu0 %v4917
        %5122 = vmatpush.bf16.msra.mxu0 %v4915
        %5123 = vmatpush.bf16.msra.mxu0 %v4913
        %5124 = vmatpush.bf16.msra.mxu0 %v4911
        %5125 = vmatmul.bf16.gmra.mxu0 %v4687
        %v5126 = vpop.f32.mrf.mxu0
        %v5127 = vadd.f32 %v5108, %v5126
        %v5128 = vpop.f32.mrf.mxu0
        %v5129 = vadd.f32 %v5110, %v5128
        %5130 = vmatmul.bf16.gmra.mxu0 %v4691
        %v5131 = vpop.f32.mrf.mxu0
        %v5132 = vadd.f32 %v5113, %v5131
        %v5133 = vpop.f32.mrf.mxu0
        %v5134 = vadd.f32 %v5115, %v5133
        %5135 = vdwg.mxu0
        %5136 = vmatpush.bf16.msra.mxu0 %v4941
        %5137 = vmatpush.bf16.msra.mxu0 %v4939
        %5138 = vmatpush.bf16.msra.mxu0 %v4937
        %5139 = vmatpush.bf16.msra.mxu0 %v4935
        %5140 = vmatpush.bf16.msra.mxu0 %v4933
        %5141 = vmatpush.bf16.msra.mxu0 %v4931
        %5142 = vmatpush.bf16.msra.mxu0 %v4929
        %5143 = vmatpush.bf16.msra.mxu0 %v4927
        %5144 = vmatmul.bf16.gmra.mxu0 %v4688
        %v5145 = vpop.f32.mrf.mxu0
        %v5146 = vadd.f32 %v5127, %v5145
        %v5147 = vpop.f32.mrf.mxu0
        %v5148 = vadd.f32 %v5129, %v5147
        %5149 = vmatmul.bf16.gmra.mxu0 %v4692
        %v5150 = vpop.f32.mrf.mxu0
        %v5151 = vadd.f32 %v5132, %v5150
        %v5152 = vpop.f32.mrf.mxu0
        %v5153 = vadd.f32 %v5134, %v5152
        %5154 = vdwg.mxu0
        %5155 = vmatpush.bf16.msra.mxu0 %v4957
        %5156 = vmatpush.bf16.msra.mxu0 %v4955
        %5157 = vmatpush.bf16.msra.mxu0 %v4953
        %5158 = vmatpush.bf16.msra.mxu0 %v4951
        %5159 = vmatpush.bf16.msra.mxu0 %v4949
        %5160 = vmatpush.bf16.msra.mxu0 %v4947
        %5161 = vmatpush.bf16.msra.mxu0 %v4945
        %5162 = vmatpush.bf16.msra.mxu0 %v4943
        %5163 = vmatmul.bf16.gmra.mxu0 %v4689
        %v5164 = vpop.f32.mrf.mxu0
        %v5165 = vadd.f32 %v5146, %v5164
        %v5166 = vpop.f32.mrf.mxu0
        %v5167 = vadd.f32 %v5148, %v5166
        %5168 = vmatmul.bf16.gmra.mxu0 %v4693
        %v5169 = vpop.f32.mrf.mxu0
        %v5170 = vadd.f32 %v5151, %v5169
        %v5171 = vpop.f32.mrf.mxu0
        %v5172 = vadd.f32 %v5153, %v5171
        %5173 = vdwg.mxu0
        %v5174 = vadd.f32 %v4580, %v5089
        %v5175 = vadd.f32 %v4581, %v5165
        %v5176 = vadd.f32 %v4582, %v5091
        %v5177 = vadd.f32 %v4583, %v5167
        %v5178 = vadd.f32 %v4584, %v5094
        %v5179 = vadd.f32 %v4585, %v5170
        %v5180 = vadd.f32 %v4586, %v5096
        %v5181 = vadd.f32 %v4587, %v5172
        %s5182 = scalar_lea.vmem %s366, 512 [#allocation2]
        %v5183 = vld [vmem:[%s5182] sm:$0xff]
        %v5184 = vld [vmem:[%s5182 + $0x8] sm:$0xff]
        %v5185 = vld [vmem:[%s5182 + $0x10] sm:$0xff]
        %v5186 = vld [vmem:[%s5182 + $0x18] sm:$0xff]
        %v5187 = vld [vmem:[%s5182 + $0x20] sm:$0xff]
        %v5188 = vld [vmem:[%s5182 + $0x28] sm:$0xff]
        %v5189 = vld [vmem:[%s5182 + $0x30] sm:$0xff]
        %v5190 = vld [vmem:[%s5182 + $0x38] sm:$0xff]
        %s5191 = scalar_lea.vmem %s418, 4096
        %v5192 = vld [vmem:[%s5191] sm:$0xff]
        %v5193 = vld [vmem:[%s5191 + $0x8] sm:$0xff]
        %v5194 = vld [vmem:[%s5191 + $0x10] sm:$0xff]
        %v5195 = vld [vmem:[%s5191 + $0x18] sm:$0xff]
        %v5196 = vld [vmem:[%s5191 + $0x20] sm:$0xff]
        %v5197 = vld [vmem:[%s5191 + $0x28] sm:$0xff]
        %v5198 = vld [vmem:[%s5191 + $0x30] sm:$0xff]
        %v5199 = vld [vmem:[%s5191 + $0x38] sm:$0xff]
        %v5200 = vld [vmem:[%s5191 + $0x40] sm:$0xff]
        %v5201 = vld [vmem:[%s5191 + $0x48] sm:$0xff]
        %v5202 = vld [vmem:[%s5191 + $0x50] sm:$0xff]
        %v5203 = vld [vmem:[%s5191 + $0x58] sm:$0xff]
        %v5204 = vld [vmem:[%s5191 + $0x60] sm:$0xff]
        %v5205 = vld [vmem:[%s5191 + $0x68] sm:$0xff]
        %v5206 = vld [vmem:[%s5191 + $0x70] sm:$0xff]
        %v5207 = vld [vmem:[%s5191 + $0x78] sm:$0xff]
        %v5208 = vld [vmem:[%s5191 + $0x80] sm:$0xff]
        %v5209 = vld [vmem:[%s5191 + $0x88] sm:$0xff]
        %v5210 = vld [vmem:[%s5191 + $0x90] sm:$0xff]
        %v5211 = vld [vmem:[%s5191 + $0x98] sm:$0xff]
        %v5212 = vld [vmem:[%s5191 + $0xa0] sm:$0xff]
        %v5213 = vld [vmem:[%s5191 + $0xa8] sm:$0xff]
        %v5214 = vld [vmem:[%s5191 + $0xb0] sm:$0xff]
        %v5215 = vld [vmem:[%s5191 + $0xb8] sm:$0xff]
        %v5216 = vld [vmem:[%s5191 + $0xc0] sm:$0xff]
        %v5217 = vld [vmem:[%s5191 + $0xc8] sm:$0xff]
        %v5218 = vld [vmem:[%s5191 + $0xd0] sm:$0xff]
        %v5219 = vld [vmem:[%s5191 + $0xd8] sm:$0xff]
        %v5220 = vld [vmem:[%s5191 + $0xe0] sm:$0xff]
        %v5221 = vld [vmem:[%s5191 + $0xe8] sm:$0xff]
        %v5222 = vld [vmem:[%s5191 + $0xf0] sm:$0xff]
        %v5223 = vld [vmem:[%s5191 + $0xf8] sm:$0xff]
        %v5224 = vld [vmem:[%s5191 + $0x100] sm:$0xff]
        %v5225 = vld [vmem:[%s5191 + $0x108] sm:$0xff]
        %v5226 = vld [vmem:[%s5191 + $0x110] sm:$0xff]
        %v5227 = vld [vmem:[%s5191 + $0x118] sm:$0xff]
        %v5228 = vld [vmem:[%s5191 + $0x120] sm:$0xff]
        %v5229 = vld [vmem:[%s5191 + $0x128] sm:$0xff]
        %v5230 = vld [vmem:[%s5191 + $0x130] sm:$0xff]
        %v5231 = vld [vmem:[%s5191 + $0x138] sm:$0xff]
        %v5232 = vld [vmem:[%s5191 + $0x140] sm:$0xff]
        %v5233 = vld [vmem:[%s5191 + $0x148] sm:$0xff]
        %v5234 = vld [vmem:[%s5191 + $0x150] sm:$0xff]
        %v5235 = vld [vmem:[%s5191 + $0x158] sm:$0xff]
        %v5236 = vld [vmem:[%s5191 + $0x160] sm:$0xff]
        %v5237 = vld [vmem:[%s5191 + $0x168] sm:$0xff]
        %v5238 = vld [vmem:[%s5191 + $0x170] sm:$0xff]
        %v5239 = vld [vmem:[%s5191 + $0x178] sm:$0xff]
        %v5240 = vld [vmem:[%s5191 + $0x180] sm:$0xff]
        %v5241 = vld [vmem:[%s5191 + $0x188] sm:$0xff]
        %v5242 = vld [vmem:[%s5191 + $0x190] sm:$0xff]
        %v5243 = vld [vmem:[%s5191 + $0x198] sm:$0xff]
        %v5244 = vld [vmem:[%s5191 + $0x1a0] sm:$0xff]
        %v5245 = vld [vmem:[%s5191 + $0x1a8] sm:$0xff]
        %v5246 = vld [vmem:[%s5191 + $0x1b0] sm:$0xff]
        %v5247 = vld [vmem:[%s5191 + $0x1b8] sm:$0xff]
        %v5248 = vld [vmem:[%s5191 + $0x1c0] sm:$0xff]
        %v5249 = vld [vmem:[%s5191 + $0x1c8] sm:$0xff]
        %v5250 = vld [vmem:[%s5191 + $0x1d0] sm:$0xff]
        %v5251 = vld [vmem:[%s5191 + $0x1d8] sm:$0xff]
        %v5252 = vld [vmem:[%s5191 + $0x1e0] sm:$0xff]
        %v5253 = vld [vmem:[%s5191 + $0x1e8] sm:$0xff]
        %v5254 = vld [vmem:[%s5191 + $0x1f0] sm:$0xff]
        %v5255 = vld [vmem:[%s5191 + $0x1f8] sm:$0xff]
        %v5264 = vunpack.c.l.b16 %v5183
        %v5265 = vunpack.c.h.b16 %v5183
        %v5266 = vunpack.c.l.b16 %v5184
        %v5267 = vunpack.c.h.b16 %v5184
        %v5268 = vunpack.c.l.b16 %v5185
        %v5269 = vunpack.c.h.b16 %v5185
        %v5270 = vunpack.c.l.b16 %v5186
        %v5271 = vunpack.c.h.b16 %v5186
        %v5272 = vunpack.c.l.b16 %v5187
        %v5273 = vunpack.c.h.b16 %v5187
        %v5274 = vunpack.c.l.b16 %v5188
        %v5275 = vunpack.c.h.b16 %v5188
        %v5276 = vunpack.c.l.b16 %v5189
        %v5277 = vunpack.c.h.b16 %v5189
        %v5278 = vunpack.c.l.b16 %v5190
        %v5279 = vunpack.c.h.b16 %v5190
        %v5280 = vpack.c.b16 %v5268, %v5264
        %v5281 = vpack.c.b16 %v5269, %v5265
        %v5282 = vpack.c.b16 %v5270, %v5266
        %v5283 = vpack.c.b16 %v5271, %v5267
        %v5284 = vpack.c.b16 %v5276, %v5272
        %v5285 = vpack.c.b16 %v5277, %v5273
        %v5286 = vpack.c.b16 %v5278, %v5274
        %v5287 = vpack.c.b16 %v5279, %v5275
        %v5360 = vunpack.c.l.b16 %v5192
        %v5361 = vunpack.c.h.b16 %v5192
        %v5362 = vunpack.c.l.b16 %v5193
        %v5363 = vunpack.c.h.b16 %v5193
        %v5364 = vunpack.c.l.b16 %v5194
        %v5365 = vunpack.c.h.b16 %v5194
        %v5366 = vunpack.c.l.b16 %v5195
        %v5367 = vunpack.c.h.b16 %v5195
        %v5368 = vunpack.c.l.b16 %v5196
        %v5369 = vunpack.c.h.b16 %v5196
        %v5370 = vunpack.c.l.b16 %v5197
        %v5371 = vunpack.c.h.b16 %v5197
        %v5372 = vunpack.c.l.b16 %v5198
        %v5373 = vunpack.c.h.b16 %v5198
        %v5374 = vunpack.c.l.b16 %v5199
        %v5375 = vunpack.c.h.b16 %v5199
        %v5376 = vunpack.c.l.b16 %v5200
        %v5377 = vunpack.c.h.b16 %v5200
        %v5378 = vunpack.c.l.b16 %v5201
        %v5379 = vunpack.c.h.b16 %v5201
        %v5380 = vunpack.c.l.b16 %v5202
        %v5381 = vunpack.c.h.b16 %v5202
        %v5382 = vunpack.c.l.b16 %v5203
        %v5383 = vunpack.c.h.b16 %v5203
        %v5384 = vunpack.c.l.b16 %v5204
        %v5385 = vunpack.c.h.b16 %v5204
        %v5386 = vunpack.c.l.b16 %v5205
        %v5387 = vunpack.c.h.b16 %v5205
        %v5388 = vunpack.c.l.b16 %v5206
        %v5389 = vunpack.c.h.b16 %v5206
        %v5390 = vunpack.c.l.b16 %v5207
        %v5391 = vunpack.c.h.b16 %v5207
        %v5392 = vunpack.c.l.b16 %v5208
        %v5393 = vunpack.c.h.b16 %v5208
        %v5394 = vunpack.c.l.b16 %v5209
        %v5395 = vunpack.c.h.b16 %v5209
        %v5396 = vunpack.c.l.b16 %v5210
        %v5397 = vunpack.c.h.b16 %v5210
        %v5398 = vunpack.c.l.b16 %v5211
        %v5399 = vunpack.c.h.b16 %v5211
        %v5400 = vunpack.c.l.b16 %v5212
        %v5401 = vunpack.c.h.b16 %v5212
        %v5402 = vunpack.c.l.b16 %v5213
        %v5403 = vunpack.c.h.b16 %v5213
        %v5404 = vunpack.c.l.b16 %v5214
        %v5405 = vunpack.c.h.b16 %v5214
        %v5406 = vunpack.c.l.b16 %v5215
        %v5407 = vunpack.c.h.b16 %v5215
        %v5408 = vunpack.c.l.b16 %v5216
        %v5409 = vunpack.c.h.b16 %v5216
        %v5410 = vunpack.c.l.b16 %v5217
        %v5411 = vunpack.c.h.b16 %v5217
        %v5412 = vunpack.c.l.b16 %v5218
        %v5413 = vunpack.c.h.b16 %v5218
        %v5414 = vunpack.c.l.b16 %v5219
        %v5415 = vunpack.c.h.b16 %v5219
        %v5416 = vunpack.c.l.b16 %v5220
        %v5417 = vunpack.c.h.b16 %v5220
        %v5418 = vunpack.c.l.b16 %v5221
        %v5419 = vunpack.c.h.b16 %v5221
        %v5420 = vunpack.c.l.b16 %v5222
        %v5421 = vunpack.c.h.b16 %v5222
        %v5422 = vunpack.c.l.b16 %v5223
        %v5423 = vunpack.c.h.b16 %v5223
        %v5424 = vunpack.c.l.b16 %v5224
        %v5425 = vunpack.c.h.b16 %v5224
        %v5426 = vunpack.c.l.b16 %v5225
        %v5427 = vunpack.c.h.b16 %v5225
        %v5428 = vunpack.c.l.b16 %v5226
        %v5429 = vunpack.c.h.b16 %v5226
        %v5430 = vunpack.c.l.b16 %v5227
        %v5431 = vunpack.c.h.b16 %v5227
        %v5432 = vunpack.c.l.b16 %v5228
        %v5433 = vunpack.c.h.b16 %v5228
        %v5434 = vunpack.c.l.b16 %v5229
        %v5435 = vunpack.c.h.b16 %v5229
        %v5436 = vunpack.c.l.b16 %v5230
        %v5437 = vunpack.c.h.b16 %v5230
        %v5438 = vunpack.c.l.b16 %v5231
        %v5439 = vunpack.c.h.b16 %v5231
        %v5440 = vunpack.c.l.b16 %v5232
        %v5441 = vunpack.c.h.b16 %v5232
        %v5442 = vunpack.c.l.b16 %v5233
        %v5443 = vunpack.c.h.b16 %v5233
        %v5444 = vunpack.c.l.b16 %v5234
        %v5445 = vunpack.c.h.b16 %v5234
        %v5446 = vunpack.c.l.b16 %v5235
        %v5447 = vunpack.c.h.b16 %v5235
        %v5448 = vunpack.c.l.b16 %v5236
        %v5449 = vunpack.c.h.b16 %v5236
        %v5450 = vunpack.c.l.b16 %v5237
        %v5451 = vunpack.c.h.b16 %v5237
        %v5452 = vunpack.c.l.b16 %v5238
        %v5453 = vunpack.c.h.b16 %v5238
        %v5454 = vunpack.c.l.b16 %v5239
        %v5455 = vunpack.c.h.b16 %v5239
        %v5456 = vunpack.c.l.b16 %v5240
        %v5457 = vunpack.c.h.b16 %v5240
        %v5458 = vunpack.c.l.b16 %v5241
        %v5459 = vunpack.c.h.b16 %v5241
        %v5460 = vunpack.c.l.b16 %v5242
        %v5461 = vunpack.c.h.b16 %v5242
        %v5462 = vunpack.c.l.b16 %v5243
        %v5463 = vunpack.c.h.b16 %v5243
        %v5464 = vunpack.c.l.b16 %v5244
        %v5465 = vunpack.c.h.b16 %v5244
        %v5466 = vunpack.c.l.b16 %v5245
        %v5467 = vunpack.c.h.b16 %v5245
        %v5468 = vunpack.c.l.b16 %v5246
        %v5469 = vunpack.c.h.b16 %v5246
        %v5470 = vunpack.c.l.b16 %v5247
        %v5471 = vunpack.c.h.b16 %v5247
        %v5472 = vunpack.c.l.b16 %v5248
        %v5473 = vunpack.c.h.b16 %v5248
        %v5474 = vunpack.c.l.b16 %v5249
        %v5475 = vunpack.c.h.b16 %v5249
        %v5476 = vunpack.c.l.b16 %v5250
        %v5477 = vunpack.c.h.b16 %v5250
        %v5478 = vunpack.c.l.b16 %v5251
        %v5479 = vunpack.c.h.b16 %v5251
        %v5480 = vunpack.c.l.b16 %v5252
        %v5481 = vunpack.c.h.b16 %v5252
        %v5482 = vunpack.c.l.b16 %v5253
        %v5483 = vunpack.c.h.b16 %v5253
        %v5484 = vunpack.c.l.b16 %v5254
        %v5485 = vunpack.c.h.b16 %v5254
        %v5486 = vunpack.c.l.b16 %v5255
        %v5487 = vunpack.c.h.b16 %v5255
        %v5488 = vpack.c.b16 %v5362, %v5360
        %v5489 = vpack.c.b16 %v5363, %v5361
        %v5490 = vpack.c.b16 %v5366, %v5364
        %v5491 = vpack.c.b16 %v5367, %v5365
        %v5492 = vpack.c.b16 %v5370, %v5368
        %v5493 = vpack.c.b16 %v5371, %v5369
        %v5494 = vpack.c.b16 %v5374, %v5372
        %v5495 = vpack.c.b16 %v5375, %v5373
        %v5496 = vpack.c.b16 %v5378, %v5376
        %v5497 = vpack.c.b16 %v5379, %v5377
        %v5498 = vpack.c.b16 %v5382, %v5380
        %v5499 = vpack.c.b16 %v5383, %v5381
        %v5500 = vpack.c.b16 %v5386, %v5384
        %v5501 = vpack.c.b16 %v5387, %v5385
        %v5502 = vpack.c.b16 %v5390, %v5388
        %v5503 = vpack.c.b16 %v5391, %v5389
        %v5504 = vpack.c.b16 %v5394, %v5392
        %v5505 = vpack.c.b16 %v5395, %v5393
        %v5506 = vpack.c.b16 %v5398, %v5396
        %v5507 = vpack.c.b16 %v5399, %v5397
        %v5508 = vpack.c.b16 %v5402, %v5400
        %v5509 = vpack.c.b16 %v5403, %v5401
        %v5510 = vpack.c.b16 %v5406, %v5404
        %v5511 = vpack.c.b16 %v5407, %v5405
        %v5512 = vpack.c.b16 %v5410, %v5408
        %v5513 = vpack.c.b16 %v5411, %v5409
        %v5514 = vpack.c.b16 %v5414, %v5412
        %v5515 = vpack.c.b16 %v5415, %v5413
        %v5516 = vpack.c.b16 %v5418, %v5416
        %v5517 = vpack.c.b16 %v5419, %v5417
        %v5518 = vpack.c.b16 %v5422, %v5420
        %v5519 = vpack.c.b16 %v5423, %v5421
        %v5520 = vpack.c.b16 %v5426, %v5424
        %v5521 = vpack.c.b16 %v5427, %v5425
        %v5522 = vpack.c.b16 %v5430, %v5428
        %v5523 = vpack.c.b16 %v5431, %v5429
        %v5524 = vpack.c.b16 %v5434, %v5432
        %v5525 = vpack.c.b16 %v5435, %v5433
        %v5526 = vpack.c.b16 %v5438, %v5436
        %v5527 = vpack.c.b16 %v5439, %v5437
        %v5528 = vpack.c.b16 %v5442, %v5440
        %v5529 = vpack.c.b16 %v5443, %v5441
        %v5530 = vpack.c.b16 %v5446, %v5444
        %v5531 = vpack.c.b16 %v5447, %v5445
        %v5532 = vpack.c.b16 %v5450, %v5448
        %v5533 = vpack.c.b16 %v5451, %v5449
        %v5534 = vpack.c.b16 %v5454, %v5452
        %v5535 = vpack.c.b16 %v5455, %v5453
        %v5536 = vpack.c.b16 %v5458, %v5456
        %v5537 = vpack.c.b16 %v5459, %v5457
        %v5538 = vpack.c.b16 %v5462, %v5460
        %v5539 = vpack.c.b16 %v5463, %v5461
        %v5540 = vpack.c.b16 %v5466, %v5464
        %v5541 = vpack.c.b16 %v5467, %v5465
        %v5542 = vpack.c.b16 %v5470, %v5468
        %v5543 = vpack.c.b16 %v5471, %v5469
        %v5544 = vpack.c.b16 %v5474, %v5472
        %v5545 = vpack.c.b16 %v5475, %v5473
        %v5546 = vpack.c.b16 %v5478, %v5476
        %v5547 = vpack.c.b16 %v5479, %v5477
        %v5548 = vpack.c.b16 %v5482, %v5480
        %v5549 = vpack.c.b16 %v5483, %v5481
        %v5550 = vpack.c.b16 %v5486, %v5484
        %v5551 = vpack.c.b16 %v5487, %v5485
        %5616 = vmatpush.bf16.msra.mxu0 %v5502
        %5617 = vmatpush.bf16.msra.mxu0 %v5500
        %5618 = vmatpush.bf16.msra.mxu0 %v5498
        %5619 = vmatpush.bf16.msra.mxu0 %v5496
        %5620 = vmatpush.bf16.msra.mxu0 %v5494
        %5621 = vmatpush.bf16.msra.mxu0 %v5492
        %5622 = vmatpush.bf16.msra.mxu0 %v5490
        %5623 = vmatpush.bf16.msra.mxu0 %v5488
        %5624 = vmatmul.bf16.gmra.mxu0 %v5280
        %v5625 = vpop.f32.mrf.mxu0
        %v5626 = vadd.f32 0.0, %v5625
        %v5627 = vpop.f32.mrf.mxu0
        %v5628 = vadd.f32 0.0, %v5627
        %5629 = vmatmul.bf16.gmra.mxu0 %v5284
        %v5630 = vpop.f32.mrf.mxu0
        %v5631 = vadd.f32 0.0, %v5630
        %v5632 = vpop.f32.mrf.mxu0
        %v5633 = vadd.f32 0.0, %v5632
        %5634 = vdwg.mxu0
        %5635 = vmatpush.bf16.msra.mxu0 %v5518
        %5636 = vmatpush.bf16.msra.mxu0 %v5516
        %5637 = vmatpush.bf16.msra.mxu0 %v5514
        %5638 = vmatpush.bf16.msra.mxu0 %v5512
        %5639 = vmatpush.bf16.msra.mxu0 %v5510
        %5640 = vmatpush.bf16.msra.mxu0 %v5508
        %5641 = vmatpush.bf16.msra.mxu0 %v5506
        %5642 = vmatpush.bf16.msra.mxu0 %v5504
        %5643 = vmatmul.bf16.gmra.mxu0 %v5281
        %v5644 = vpop.f32.mrf.mxu0
        %v5645 = vadd.f32 %v5626, %v5644
        %v5646 = vpop.f32.mrf.mxu0
        %v5647 = vadd.f32 %v5628, %v5646
        %5648 = vmatmul.bf16.gmra.mxu0 %v5285
        %v5649 = vpop.f32.mrf.mxu0
        %v5650 = vadd.f32 %v5631, %v5649
        %v5651 = vpop.f32.mrf.mxu0
        %v5652 = vadd.f32 %v5633, %v5651
        %5653 = vdwg.mxu0
        %5654 = vmatpush.bf16.msra.mxu0 %v5534
        %5655 = vmatpush.bf16.msra.mxu0 %v5532
        %5656 = vmatpush.bf16.msra.mxu0 %v5530
        %5657 = vmatpush.bf16.msra.mxu0 %v5528
        %5658 = vmatpush.bf16.msra.mxu0 %v5526
        %5659 = vmatpush.bf16.msra.mxu0 %v5524
        %5660 = vmatpush.bf16.msra.mxu0 %v5522
        %5661 = vmatpush.bf16.msra.mxu0 %v5520
        %5662 = vmatmul.bf16.gmra.mxu0 %v5282
        %v5663 = vpop.f32.mrf.mxu0
        %v5664 = vadd.f32 %v5645, %v5663
        %v5665 = vpop.f32.mrf.mxu0
        %v5666 = vadd.f32 %v5647, %v5665
        %5667 = vmatmul.bf16.gmra.mxu0 %v5286
        %v5668 = vpop.f32.mrf.mxu0
        %v5669 = vadd.f32 %v5650, %v5668
        %v5670 = vpop.f32.mrf.mxu0
        %v5671 = vadd.f32 %v5652, %v5670
        %5672 = vdwg.mxu0
        %5673 = vmatpush.bf16.msra.mxu0 %v5550
        %5674 = vmatpush.bf16.msra.mxu0 %v5548
        %5675 = vmatpush.bf16.msra.mxu0 %v5546
        %5676 = vmatpush.bf16.msra.mxu0 %v5544
        %5677 = vmatpush.bf16.msra.mxu0 %v5542
        %5678 = vmatpush.bf16.msra.mxu0 %v5540
        %5679 = vmatpush.bf16.msra.mxu0 %v5538
        %5680 = vmatpush.bf16.msra.mxu0 %v5536
        %5681 = vmatmul.bf16.gmra.mxu0 %v5283
        %v5682 = vpop.f32.mrf.mxu0
        %v5683 = vadd.f32 %v5664, %v5682
        %v5684 = vpop.f32.mrf.mxu0
        %v5685 = vadd.f32 %v5666, %v5684
        %5686 = vmatmul.bf16.gmra.mxu0 %v5287
        %v5687 = vpop.f32.mrf.mxu0
        %v5688 = vadd.f32 %v5669, %v5687
        %v5689 = vpop.f32.mrf.mxu0
        %v5690 = vadd.f32 %v5671, %v5689
        %5691 = vdwg.mxu0
        %5692 = vmatpush.bf16.msra.mxu0 %v5503
        %5693 = vmatpush.bf16.msra.mxu0 %v5501
        %5694 = vmatpush.bf16.msra.mxu0 %v5499
        %5695 = vmatpush.bf16.msra.mxu0 %v5497
        %5696 = vmatpush.bf16.msra.mxu0 %v5495
        %5697 = vmatpush.bf16.msra.mxu0 %v5493
        %5698 = vmatpush.bf16.msra.mxu0 %v5491
        %5699 = vmatpush.bf16.msra.mxu0 %v5489
        %5700 = vmatmul.bf16.gmra.mxu0 %v5280
        %v5701 = vpop.f32.mrf.mxu0
        %v5702 = vadd.f32 0.0, %v5701
        %v5703 = vpop.f32.mrf.mxu0
        %v5704 = vadd.f32 0.0, %v5703
        %5705 = vmatmul.bf16.gmra.mxu0 %v5284
        %v5706 = vpop.f32.mrf.mxu0
        %v5707 = vadd.f32 0.0, %v5706
        %v5708 = vpop.f32.mrf.mxu0
        %v5709 = vadd.f32 0.0, %v5708
        %5710 = vdwg.mxu0
        %5711 = vmatpush.bf16.msra.mxu0 %v5519
        %5712 = vmatpush.bf16.msra.mxu0 %v5517
        %5713 = vmatpush.bf16.msra.mxu0 %v5515
        %5714 = vmatpush.bf16.msra.mxu0 %v5513
        %5715 = vmatpush.bf16.msra.mxu0 %v5511
        %5716 = vmatpush.bf16.msra.mxu0 %v5509
        %5717 = vmatpush.bf16.msra.mxu0 %v5507
        %5718 = vmatpush.bf16.msra.mxu0 %v5505
        %5719 = vmatmul.bf16.gmra.mxu0 %v5281
        %v5720 = vpop.f32.mrf.mxu0
        %v5721 = vadd.f32 %v5702, %v5720
        %v5722 = vpop.f32.mrf.mxu0
        %v5723 = vadd.f32 %v5704, %v5722
        %5724 = vmatmul.bf16.gmra.mxu0 %v5285
        %v5725 = vpop.f32.mrf.mxu0
        %v5726 = vadd.f32 %v5707, %v5725
        %v5727 = vpop.f32.mrf.mxu0
        %v5728 = vadd.f32 %v5709, %v5727
        %5729 = vdwg.mxu0
        %5730 = vmatpush.bf16.msra.mxu0 %v5535
        %5731 = vmatpush.bf16.msra.mxu0 %v5533
        %5732 = vmatpush.bf16.msra.mxu0 %v5531
        %5733 = vmatpush.bf16.msra.mxu0 %v5529
        %5734 = vmatpush.bf16.msra.mxu0 %v5527
        %5735 = vmatpush.bf16.msra.mxu0 %v5525
        %5736 = vmatpush.bf16.msra.mxu0 %v5523
        %5737 = vmatpush.bf16.msra.mxu0 %v5521
        %5738 = vmatmul.bf16.gmra.mxu0 %v5282
        %v5739 = vpop.f32.mrf.mxu0
        %v5740 = vadd.f32 %v5721, %v5739
        %v5741 = vpop.f32.mrf.mxu0
        %v5742 = vadd.f32 %v5723, %v5741
        %5743 = vmatmul.bf16.gmra.mxu0 %v5286
        %v5744 = vpop.f32.mrf.mxu0
        %v5745 = vadd.f32 %v5726, %v5744
        %v5746 = vpop.f32.mrf.mxu0
        %v5747 = vadd.f32 %v5728, %v5746
        %5748 = vdwg.mxu0
        %5749 = vmatpush.bf16.msra.mxu0 %v5551
        %5750 = vmatpush.bf16.msra.mxu0 %v5549
        %5751 = vmatpush.bf16.msra.mxu0 %v5547
        %5752 = vmatpush.bf16.msra.mxu0 %v5545
        %5753 = vmatpush.bf16.msra.mxu0 %v5543
        %5754 = vmatpush.bf16.msra.mxu0 %v5541
        %5755 = vmatpush.bf16.msra.mxu0 %v5539
        %5756 = vmatpush.bf16.msra.mxu0 %v5537
        %5757 = vmatmul.bf16.gmra.mxu0 %v5283
        %v5758 = vpop.f32.mrf.mxu0
        %v5759 = vadd.f32 %v5740, %v5758
        %v5760 = vpop.f32.mrf.mxu0
        %v5761 = vadd.f32 %v5742, %v5760
        %5762 = vmatmul.bf16.gmra.mxu0 %v5287
        %v5763 = vpop.f32.mrf.mxu0
        %v5764 = vadd.f32 %v5745, %v5763
        %v5765 = vpop.f32.mrf.mxu0
        %v5766 = vadd.f32 %v5747, %v5765
        %5767 = vdwg.mxu0
        %v5768 = vadd.f32 %v5174, %v5683
        %v5769 = vadd.f32 %v5175, %v5759
        %v5770 = vadd.f32 %v5176, %v5685
        %v5771 = vadd.f32 %v5177, %v5761
        %v5772 = vadd.f32 %v5178, %v5688
        %v5773 = vadd.f32 %v5179, %v5764
        %v5774 = vadd.f32 %v5180, %v5690
        %v5775 = vadd.f32 %v5181, %v5766
        %v5776 = vpack.c.bf16 %v5769, %v5768
        %v5777 = vpack.c.bf16 %v5771, %v5770
        %v5778 = vpack.c.bf16 %v5773, %v5772
        %v5779 = vpack.c.bf16 %v5775, %v5774
        %5780 = vst [vmem:[%s428] sm:$0xff] %v5776
        %5781 = vst [vmem:[%s428 + $0x8] sm:$0xff] %v5777
        %5782 = vst [vmem:[%s428 + $0x10] sm:$0xff] %v5778
        %5783 = vst [vmem:[%s428 + $0x18] sm:$0xff] %v5779
        %v5784 = vadd.f32 %v5768, %v5770
        %v5785 = vadd.f32 %v5784, %v5772
        %v5786 = vadd.f32 %v5785, %v5774
        %v5787 = vrot.slane %v5786, 4
        %v5788 = vadd.f32 %v5786, %v5787
        %v5789 = vrot.slane %v5788, 2
        %v5790 = vadd.f32 %v5788, %v5789
        %v5791 = vrot.slane %v5790, 1
        %v5792 = vadd.f32 %v5790, %v5791
        %v5793 = vadd.f32 %v5769, %v5771
        %v5794 = vadd.f32 %v5793, %v5773
        %v5795 = vadd.f32 %v5794, %v5775
        %v5796 = vrot.slane %v5795, 4
        %v5797 = vadd.f32 %v5795, %v5796
        %v5798 = vrot.slane %v5797, 2
        %v5799 = vadd.f32 %v5797, %v5798
        %v5800 = vrot.slane %v5799, 1
        %v5801 = vadd.f32 %v5799, %v5800
        %v5804 = vrot.slane %v5801, 7
        %vm5805 = vcmask 1040384
        %v5806 = vsel %vm5805, %v5792, %v5804
        %v5808 = vlaneseq
        %vm5809 = vcmp.ge.s32.totalorder %v5808, 0
        %vm5810 = vcmp.lt.s32.totalorder %v5808, 256
        %vm5811 = vmand %vm5809, %vm5810
        %5812 = vst.msk [vmem:[%s437] sm:$0x3] %vm5811, %v5806
        %v5813 = vmul.f32 %v5792, 0.03125
        %v5814 = vmul.f32 %v5801, 0.03125
        %v5815 = vsub.f32 %v5768, %v5813
        %v5816 = vsub.f32 %v5769, %v5814
        %v5817 = vsub.f32 %v5770, %v5813
        %v5818 = vsub.f32 %v5771, %v5814
        %v5819 = vsub.f32 %v5772, %v5813
        %v5820 = vsub.f32 %v5773, %v5814
        %v5821 = vsub.f32 %v5774, %v5813
        %v5822 = vsub.f32 %v5775, %v5814
        %v5823 = vmul.f32 %v5815, %v5815
        %v5824 = vmul.f32 %v5816, %v5816
        %v5825 = vmul.f32 %v5817, %v5817
        %v5826 = vmul.f32 %v5818, %v5818
        %v5827 = vmul.f32 %v5819, %v5819
        %v5828 = vmul.f32 %v5820, %v5820
        %v5829 = vmul.f32 %v5821, %v5821
        %v5830 = vmul.f32 %v5822, %v5822
        %v5831 = vadd.f32 %v5823, %v5825
        %v5832 = vadd.f32 %v5831, %v5827
        %v5833 = vadd.f32 %v5832, %v5829
        %v5834 = vrot.slane %v5833, 4
        %v5835 = vadd.f32 %v5833, %v5834
        %v5836 = vrot.slane %v5835, 2
        %v5837 = vadd.f32 %v5835, %v5836
        %v5838 = vrot.slane %v5837, 1
        %v5839 = vadd.f32 %v5837, %v5838
        %v5840 = vadd.f32 %v5824, %v5826
        %v5841 = vadd.f32 %v5840, %v5828
        %v5842 = vadd.f32 %v5841, %v5830
        %v5843 = vrot.slane %v5842, 4
        %v5844 = vadd.f32 %v5842, %v5843
        %v5845 = vrot.slane %v5844, 2
        %v5846 = vadd.f32 %v5844, %v5845
        %v5847 = vrot.slane %v5846, 1
        %v5848 = vadd.f32 %v5846, %v5847
        %v5851 = vrot.slane %v5848, 7
        %v5852 = vsel %vm5805, %v5839, %v5851
        %5854 = vst.msk [vmem:[%s446] sm:$0x3] %vm5811, %v5852
        %s5855 = smul.u32 2, %s20
        %p5856 = scmp.lt.s32.totalorder %s21, 3
        %s5857 = scalar_select %p5856, %s21, 3
        %p5858 = scmp.lt.s32.totalorder %s5855, 1
        %s5859 = scalar_select %p5858, %s5855, 1
        %s5860 = smul.addr %s5857, 8
        %s5861 = sadd.s32 %s5859, %s5860
        %s5862 = smul.addr %s5861, 4
        %s5863 = scalar_lea.vmem %s2, %s5862
        %s5864 = smul.u32 2, %s20
        %p5865 = scmp.lt.s32.totalorder %s21, 3
        %s5866 = scalar_select %p5865, %s21, 3
        %p5867 = scmp.lt.s32.totalorder %s5864, 1
        %s5868 = scalar_select %p5867, %s5864, 1
        %s5869 = smul.addr %s5866, 2
        %s5870 = sadd.s32 %s5868, %s5869
        %s5871 = scalar_lea.vmem %s3, %s5870
        %s5872 = smul.u32 2, %s20
        %p5873 = scmp.lt.s32.totalorder %s21, 3
        %s5874 = scalar_select %p5873, %s21, 3
        %p5875 = scmp.lt.s32.totalorder %s5872, 1
        %s5876 = scalar_select %p5875, %s5872, 1
        %s5877 = smul.addr %s5874, 2
        %s5878 = sadd.s32 %s5876, %s5877
        %s5879 = scalar_lea.vmem %s4, %s5878
        // Predicated region
        $region52: #{conv_layer.1} parent=46 // pred_check
          %p5880 = pneg %p100
        $region53: #{conv_layer.1} parent=46 // pred_check_branch
          %5882 = sbr.rel (%p5880) target = $region55
        $region54: #{conv_layer.1} parent=46 // pred_region
          %s5883 = smul.u32 2, %s20
        $region55: #{conv_layer.1} parent=46 // pred_fallthru
          _
        // Predicated region
        $region56: #{conv_layer.1} parent=46 // pred_check
          %p5884 = pneg %p128
        $region57: #{conv_layer.1} parent=46 // pred_check_branch
          %5886 = sbr.rel (%p5884) target = $region59
        $region58: #{conv_layer.1} parent=46 // pred_region
          %s5887 = smul.u32 2, %s20
        $region59: #{conv_layer.1} parent=46 // pred_fallthru
          _
        // Predicated region
        $region60: #{conv_layer.1} parent=46 // pred_check
          %p5888 = pneg %p156
        $region61: #{conv_layer.1} parent=46 // pred_check_branch
          %5890 = sbr.rel (%p5888) target = $region63
        $region62: #{conv_layer.1} parent=46 // pred_region
          %s5891 = smul.u32 2, %s20
        $region63: #{conv_layer.1} parent=46 // pred_fallthru
          _
      $region47: #{conv_layer.1} parent=5 // pred_fallthru
        _
      %p5892 = scmp.le.s32.totalorder 2, %s11
      // Predicated region
      $region64: #{conv_layer.1} parent=5 // pred_check
        %p5893 = pneg %p5892
      $region65: #{conv_layer.1} parent=5 // pred_check_branch
        %5895 = sbr.rel (%p5893) target = $region67
      $region66: #{conv_layer.1} parent=5 // pred_region
        %s5896 = ssub.s32 %s11, 2
        // Predicated region
        $region68: #{conv_layer.1} parent=66 // pred_check
          %p5897 = pneg %p106
        $region69: #{conv_layer.1} parent=66 // pred_check_branch
          %5899 = sbr.rel (%p5897) target = $region71
        $region70: #{conv_layer.1} parent=66 // pred_region
          %s5900 = smul.u32 2, %s22
          %p5901 = scmp.lt.s32.totalorder %s23, 3
          %s5902 = scalar_select %p5901, %s23, 3
          %p5903 = scmp.lt.s32.totalorder %s5900, 1
          %s5904 = scalar_select %p5903, %s5900, 1
          %s5905 = smul.addr %s5902, 8
          %s5906 = sadd.s32 %s5904, %s5905
          %s5907 = smul.addr %s5906, 4
          %s5908 = scalar_lea.vmem %s2, %s5907
        $region71: #{conv_layer.1} parent=66 // pred_fallthru
          _
        // Predicated region
        $region72: #{conv_layer.1} parent=66 // pred_check
          %p5909 = pneg %p134
        $region73: #{conv_layer.1} parent=66 // pred_check_branch
          %5911 = sbr.rel (%p5909) target = $region75
        $region74: #{conv_layer.1} parent=66 // pred_region
          %s5912 = smul.u32 2, %s22
          %p5913 = scmp.lt.s32.totalorder %s23, 3
          %s5914 = scalar_select %p5913, %s23, 3
          %p5915 = scmp.lt.s32.totalorder %s5912, 1
          %s5916 = scalar_select %p5915, %s5912, 1
          %s5917 = smul.addr %s5914, 2
          %s5918 = sadd.s32 %s5916, %s5917
          %s5919 = scalar_lea.vmem %s3, %s5918
        $region75: #{conv_layer.1} parent=66 // pred_fallthru
          _
        // Predicated region
        $region76: #{conv_layer.1} parent=66 // pred_check
          %p5920 = pneg %p162
        $region77: #{conv_layer.1} parent=66 // pred_check_branch
          %5922 = sbr.rel (%p5920) target = $region79
        $region78: #{conv_layer.1} parent=66 // pred_region
          %s5923 = smul.u32 2, %s22
          %p5924 = scmp.lt.s32.totalorder %s23, 3
          %s5925 = scalar_select %p5924, %s23, 3
          %p5926 = scmp.lt.s32.totalorder %s5923, 1
          %s5927 = scalar_select %p5926, %s5923, 1
          %s5928 = smul.addr %s5925, 2
          %s5929 = sadd.s32 %s5927, %s5928
          %s5930 = scalar_lea.vmem %s4, %s5929
        $region79: #{conv_layer.1} parent=66 // pred_fallthru
          _
      $region67: #{conv_layer.1} parent=5 // pred_fallthru
        _
    $region6: #{conv_layer.1} parent=1 // loop_footer
      %s15 = sadd.s32 1, %s11
    $region7: #{conv_layer.1} parent=1 // loop_footer_branch
      %10 = sbr.rel target = $region3
    $region8: #{conv_layer.1} parent=1 // loop_exit
      _

</llo_original>
